<compile_context>
chip_gen: v5e
topology: v5e:2x2
jax: 0.10.0
libtpu: 0.0.40
codegen_flags: <defaults>
</compile_context>

<pallas_src>
import functools
import math

import jax
import jax.numpy as jnp
from jax.experimental import pallas as pl
from jax.experimental.pallas import tpu as pltpu


# ----------------------------------------------------------------------------
# helpers
# ----------------------------------------------------------------------------
def _round_up(x, m):
    return ((x + m - 1) // m) * m


_TM_CAP = 256
_TN_CAP = 512
_TK_CAP = 512


def _tile_plan(K, N, tk_cap=_TK_CAP, tn_cap=_TN_CAP):
    """Deterministic tile plan shared by prepare_linear() and linear()."""
    tk = min(tk_cap, _round_up(K, 128))
    tn = min(tn_cap, _round_up(N, 128))
    return tk, _round_up(K, tk), tn, _round_up(N, tn)


def prepare_linear(w, b=None, dtype=jnp.bfloat16):
    """One-time weight prep (pad to tile multiples + bf16 cast), done at
    parameter setup rather than inside every forward call."""
    K, N = w.shape
    tk, Kp, tn, Np = _tile_plan(K, N)
    wp = w
    if (Kp, Np) != (K, N):
        wp = jnp.pad(w, ((0, Kp - K), (0, Np - N)))
    wp = wp.astype(dtype)
    bp = None
    if b is not None:
        bp = b.reshape(1, N).astype(jnp.float32)
        if Np != N:
            bp = jnp.pad(bp, ((0, 0), (0, Np - N)))
    return {"w": wp, "b": bp}


# ----------------------------------------------------------------------------
# Kernel 1: tiled matmul  y = x @ W (+ bias) (+ exact GELU) (+ residual)
#   bf16 operands, f32 MXU accumulation.
# ----------------------------------------------------------------------------
def _matmul_kernel(*refs, nk, has_bias, has_res, activation, acc_in_out):
    idx = 0
    a_ref = refs[idx]; idx += 1
    w_ref = refs[idx]; idx += 1
    b_ref = None
    r_ref = None
    if has_bias:
        b_ref = refs[idx]; idx += 1
    if has_res:
        r_ref = refs[idx]; idx += 1
    o_ref = refs[idx]; idx += 1
    acc_ref = refs[idx] if idx < len(refs) else None

    trivial = (b_ref is None) and (r_ref is None) and (activation is None)

    def epilogue(acc):
        if b_ref is not None:
            acc = acc + b_ref[...].astype(jnp.float32)
        if activation == "gelu":
            # exact (erf) GELU, matching torch.nn.GELU() default
            acc = 0.5 * acc * (1.0 + jax.lax.erf(acc * 0.7071067811865475))
        if r_ref is not None:
            acc = acc + r_ref[...].astype(jnp.float32)
        return acc

    prod = jnp.dot(a_ref[...], w_ref[...], preferred_element_type=jnp.float32)

    if nk == 1:
        o_ref[...] = epilogue(prod).astype(o_ref.dtype)
        return

    k = pl.program_id(2)

    if acc_in_out:
        # f32 output: accumulate straight into the resident output block.
        @pl.when(k == 0)
        def _():
            o_ref[...] = prod

        @pl.when(k > 0)
        def _():
            o_ref[...] += prod

        if not trivial:
            @pl.when(k == nk - 1)
            def _():
                o_ref[...] = epilogue(o_ref[...])
    else:
        @pl.when(k == 0)
        def _():
            acc_ref[...] = prod

        @pl.when(k > 0)
        def _():
            acc_ref[...] += prod

        @pl.when(k == nk - 1)
        def _():
            o_ref[...] = epilogue(acc_ref[...]).astype(o_ref.dtype)


def linear(x, prep, *, n_out, activation=None, residual=None,
           out_dtype=jnp.bfloat16):
    """x: (..., K); prep: pre-padded bf16 weight (+bias); -> (..., n_out)."""
    orig = x.shape
    K = orig[-1]
    N = n_out
    M = math.prod(orig[:-1])
    wp, bp = prep["w"], prep["b"]

    tk, Kp, tn, Np = _tile_plan(K, N)
    assert wp.shape == (Kp, Np), (wp.shape, (Kp, Np))

    tm = min(_TM_CAP, _round_up(M, 8))
    Mp = _round_up(M, tm)

    x2 = x.reshape(M, K)
    if x2.dtype != jnp.bfloat16:
        x2 = x2.astype(jnp.bfloat16)
    if (Mp, Kp) != (M, K):
        x2 = jnp.pad(x2, ((0, Mp - M), (0, Kp - K)))

    inputs = [x2, wp]
    in_specs = [
        pl.BlockSpec((tm, tk), lambda i, j, k: (i, k)),
        pl.BlockSpec((tk, tn), lambda i, j, k: (k, j)),
    ]
    has_bias = bp is not None
    if has_bias:
        inputs.append(bp)
        in_specs.append(pl.BlockSpec((1, tn), lambda i, j, k: (0, j)))
    has_res = residual is not None
    if has_res:
        r2 = residual.reshape(M, N).astype(jnp.float32)
        if (Mp, Np) != (M, N):
            r2 = jnp.pad(r2, ((0, Mp - M), (0, Np - N)))
        inputs.append(r2)
        in_specs.append(pl.BlockSpec((tm, tn), lambda i, j, k: (i, j)))

    nk = Kp // tk
    acc_in_out = out_dtype == jnp.float32
    scratch = []
    if nk > 1 and not acc_in_out:
        scratch = [pltpu.VMEM((tm, tn), jnp.float32)]

    out = pl.pallas_call(
        functools.partial(_matmul_kernel, nk=nk, has_bias=has_bias,
                          has_res=has_res, activation=activation,
                          acc_in_out=acc_in_out),
        out_shape=jax.ShapeDtypeStruct((Mp, Np), out_dtype),
        grid_spec=pltpu.PrefetchScalarGridSpec(
            num_scalar_prefetch=0,
            grid=(Mp // tm, Np // tn, nk),
            in_specs=in_specs,
            out_specs=pl.BlockSpec((tm, tn), lambda i, j, k: (i, j)),
            scratch_shapes=scratch,
        ),
        compiler_params=pltpu.CompilerParams(
            dimension_semantics=("parallel", "parallel", "arbitrary")),
    )(*inputs)

    if (Mp, Np) != (M, N):
        out = out[:M, :N]
    return out.reshape(*orig[:-1], N)


# ----------------------------------------------------------------------------
# Kernel 2: LayerNorm over the last axis (eps = 1e-5, torch default),
#   f32 statistics, bf16 output by default (activation traffic halved).
# ----------------------------------------------------------------------------
def _layernorm_kernel(x_ref, g_ref, b_ref, o_ref, *, eps):
    x = x_ref[...].astype(jnp.float32)
    mu = jnp.mean(x, axis=-1, keepdims=True)
    var = jnp.mean(jnp.square(x - mu), axis=-1, keepdims=True)
    xn = (x - mu) * jax.lax.rsqrt(var + eps)
    y = xn * g_ref[...].astype(jnp.float32) + b_ref[...].astype(jnp.float32)
    o_ref[...] = y.astype(o_ref.dtype)


def layernorm(x, gamma, beta, *, eps=1e-5, out_dtype=jnp.bfloat16, tm_cap=512):
    orig = x.shape
    D = orig[-1]
    M = math.prod(orig[:-1])
    x2 = x.reshape(M, D)
    tm = min(tm_cap, _round_up(M, 8))
    Mp = _round_up(M, tm)
    if Mp != M:
        x2 = jnp.pad(x2, ((0, Mp - M), (0, 0)))
    out = pl.pallas_call(
        functools.partial(_layernorm_kernel, eps=eps),
        out_shape=jax.ShapeDtypeStruct((Mp, D), out_dtype),
        grid_spec=pltpu.PrefetchScalarGridSpec(
            num_scalar_prefetch=0,
            grid=(Mp // tm,),
            in_specs=[
                pl.BlockSpec((tm, D), lambda i: (i, 0)),
                pl.BlockSpec((1, D), lambda i: (0, 0)),
                pl.BlockSpec((1, D), lambda i: (0, 0)),
            ],
            out_specs=pl.BlockSpec((tm, D), lambda i: (i, 0)),
        ),
        compiler_params=pltpu.CompilerParams(dimension_semantics=("parallel",)),
    )(x2, gamma.reshape(1, D), beta.reshape(1, D))
    if Mp != M:
        out = out[:M]
    return out.reshape(*orig[:-1], D)


# ----------------------------------------------------------------------------
# Kernel 3: fused lin1-expansion + ln_vision + media_pos add.
#   Rank-1 algebra of lin1:
#     h[b,l,:] = W1[l] * (x @ W2)[b,:] + (b1[l]*colsum(W2) + b2)
#   The (L, H) bias term is precomputed at setup (weight-only), so the huge
#   (B, L, V) intermediate never exists and W2 is read only by the matmul.
# ----------------------------------------------------------------------------
def _expand_ln_kernel(xw_ref, w1_ref, bias_ref, g_ref, b_ref, pos_ref, o_ref,
                      *, eps):
    xw = xw_ref[0].astype(jnp.float32)                  # (1, H)
    w1 = w1_ref[...].astype(jnp.float32)                # (L, 1)
    h = w1 * xw + bias_ref[...].astype(jnp.float32)     # (L, H)
    mu = jnp.mean(h, axis=-1, keepdims=True)
    var = jnp.mean(jnp.square(h - mu), axis=-1, keepdims=True)
    hn = (h - mu) * jax.lax.rsqrt(var + eps)
    y = hn * g_ref[...].astype(jnp.float32) + b_ref[...].astype(jnp.float32)
    y = y + pos_ref[...].astype(jnp.float32)            # fused media-pos add
    o_ref[0] = y.astype(o_ref.dtype)


def fused_expand_ln(xw, w1, expand_bias, gamma, beta, media_pos,
                    *, eps=1e-5, out_dtype=jnp.bfloat16):
    """xw: (B, H) = x @ W2; returns ln_vision(expand(xw)) + media_pos, (B,L,H)."""
    B, H = xw.shape
    L = w1.shape[0]
    return pl.pallas_call(
        functools.partial(_expand_ln_kernel, eps=eps),
        out_shape=jax.ShapeDtypeStruct((B, L, H), out_dtype),
        grid_spec=pltpu.PrefetchScalarGridSpec(
            num_scalar_prefetch=0,
            grid=(B,),
            in_specs=[
                pl.BlockSpec((1, 1, H), lambda i: (i, 0, 0)),
                pl.BlockSpec((L, 1), lambda i: (0, 0)),
                pl.BlockSpec((L, H), lambda i: (0, 0)),
                pl.BlockSpec((1, H), lambda i: (0, 0)),
                pl.BlockSpec((1, H), lambda i: (0, 0)),
                pl.BlockSpec((1, H), lambda i: (0, 0)),
            ],
            out_specs=pl.BlockSpec((1, L, H), lambda i: (i, 0, 0)),
        ),
        compiler_params=pltpu.CompilerParams(dimension_semantics=("parallel",)),
    )(xw.reshape(B, 1, H), w1, expand_bias, gamma.reshape(1, H),
      beta.reshape(1, H), media_pos.reshape(1, H))


# ----------------------------------------------------------------------------
# Kernel 4: PerceiverAttention core, ONE (batch, head) per grid step.
#   bf16 MXU inputs, f32 accumulation + softmax statistics.
# ----------------------------------------------------------------------------
def _attn_kernel(q_ref, k_ref, v_ref, o_ref, *, scale):
    q = q_ref[0, 0].astype(jnp.bfloat16)                # (nq, d)
    k = k_ref[0, 0].astype(jnp.bfloat16)                # (nkv, d)
    v = v_ref[0, 0].astype(jnp.bfloat16)
    # last-dim contraction (no explicit transpose); scale folded post-matmul
    sim = jax.lax.dot_general(q, k, (((1,), (1,)), ((), ())),
                              preferred_element_type=jnp.float32) * scale
    sim = sim - jnp.max(sim, axis=-1, keepdims=True)
    p = jnp.exp(sim)
    attn = p * pl.reciprocal(jnp.sum(p, axis=-1, keepdims=True), approx=True)
    out = jnp.dot(attn.astype(jnp.bfloat16), v,
                  preferred_element_type=jnp.float32)
    o_ref[0, 0] = out.astype(o_ref.dtype)


def attention(q, k, v, scale, *, out_dtype=jnp.bfloat16):
    """q: (B, heads, nq, d), k/v: (B, heads, nkv, d) -> (B, heads, nq, d)."""
    B, heads, nq, d = q.shape
    nkv = k.shape[2]
    return pl.pallas_call(
        functools.partial(_attn_kernel, scale=scale),
        out_shape=jax.ShapeDtypeStruct((B, heads, nq, d), out_dtype),
        grid_spec=pltpu.PrefetchScalarGridSpec(
            num_scalar_prefetch=0,
            grid=(B, heads),
            in_specs=[
                pl.BlockSpec((1, 1, nq, d), lambda b, h: (b, h, 0, 0)),
                pl.BlockSpec((1, 1, nkv, d), lambda b, h: (b, h, 0, 0)),
                pl.BlockSpec((1, 1, nkv, d), lambda b, h: (b, h, 0, 0)),
            ],
            out_specs=pl.BlockSpec((1, 1, nq, d), lambda b, h: (b, h, 0, 0)),
        ),
        compiler_params=pltpu.CompilerParams(
            dimension_semantics=("parallel", "parallel")),
    )(q, k, v)


# ----------------------------------------------------------------------------
# Parameter init (deterministic, synthetic -- NOT a checkpoint load)
# ----------------------------------------------------------------------------
def init_brainx_params(key, cfg):
    H, O, L = cfg["hidden_dim"], cfg["out_dim"], cfg["num_latents"]
    heads, dh, depth, ffm = cfg["heads"], cfg["dim_head"], cfg["depth"], cfg["ff_mult"]
    inner = heads * dh
    keys = iter(jax.random.split(key, 1024))

    def nrm(shape, std=0.02):
        return std * jax.random.normal(next(keys), shape, dtype=jnp.float32)

    lin1, lin2 = {}, {}
    for sub, V in cfg["num_voxels"].items():
        lin1[f"fmri{sub}"] = {"w": nrm((L, 1)), "b": nrm((L,))}
        lin2[f"fmri{sub}"] = {"w": nrm((V, H)), "b": nrm((H,))}

    layers = []
    for _ in range(depth):
        layers.append(dict(
            nm_g=jnp.ones((H,), jnp.float32), nm_b=jnp.zeros((H,), jnp.float32),
            nl_g=jnp.ones((H,), jnp.float32), nl_b=jnp.zeros((H,), jnp.float32),
            wq=nrm((H, inner)), wkv=nrm((H, 2 * inner)), wo=nrm((inner, H)),
            ffln_g=jnp.ones((H,), jnp.float32), ffln_b=jnp.zeros((H,), jnp.float32),
            ffw1=nrm((H, ffm * H)), ffw2=nrm((ffm * H, H)),
        ))

    perceiver = dict(
        ln_vision_g=jnp.ones((H,), jnp.float32),
        ln_vision_b=jnp.zeros((H,), jnp.float32),
        llm_w=nrm((H, O)), llm_b=nrm((O,)),
        resampler=dict(
            latents=jax.random.normal(next(keys), (L, H), jnp.float32),
            media_pos=jax.random.normal(next(keys), (1, 1, H), jnp.float32),
            layers=layers,
            norm_g=jnp.ones((H,), jnp.float32),
            norm_b=jnp.zeros((H,), jnp.float32),
        ),
    )
    return {"lin1": lin1, "lin2": lin2, "perceiver": perceiver}


# ----------------------------------------------------------------------------
# One-time device preparation of parameters (weight-only work done ONCE):
#   * matmul weights padded + cast to bf16,
#   * lin2 column sums and the (L, H) expansion bias precomputed in f32.
# ----------------------------------------------------------------------------
def prepare_brainx_params(params, cfg):
    fused = {}
    for name, p2 in params["lin2"].items():
        p1 = params["lin1"][name]
        w2, b2 = p2["w"], p2["b"]
        csum = jnp.sum(w2, axis=0)                       # exact f32, once
        fused[name] = dict(
            w2=prepare_linear(w2),                       # bf16, tile-padded
            w1=p1["w"].astype(jnp.float32),              # (L, 1)
            expand_bias=p1["b"][:, None] * csum[None, :] + b2[None, :],
        )

    pp = params["perceiver"]
    rp = pp["resampler"]
    layers = []
    for layer in rp["layers"]:
        layers.append(dict(
            nm_g=layer["nm_g"], nm_b=layer["nm_b"],
            nl_g=layer["nl_g"], nl_b=layer["nl_b"],
            wq=prepare_linear(layer["wq"]),
            wkv=prepare_linear(layer["wkv"]),
            wo=prepare_linear(layer["wo"]),
            ffln_g=layer["ffln_g"], ffln_b=layer["ffln_b"],
            ffw1=prepare_linear(layer["ffw1"]),
            ffw2=prepare_linear(layer["ffw2"]),
        ))
    perceiver = dict(
        ln_vision_g=pp["ln_vision_g"], ln_vision_b=pp["ln_vision_b"],
        llm=prepare_linear(pp["llm_w"], pp["llm_b"]),
        resampler=dict(
            latents=rp["latents"], media_pos=rp["media_pos"],
            layers=layers, norm_g=rp["norm_g"], norm_b=rp["norm_b"]),
    )
    return {"fused": fused, "perceiver": perceiver}


# ----------------------------------------------------------------------------
# Forward pass (Pallas kernels + thin JAX glue)
# ----------------------------------------------------------------------------
def perceiver_resampler(rp, x, *, heads, dim_head, hidden_dim, ff_mult):
    """x: (B, L_media, H) bf16 (media_pos already added) -> (B, 1, n_lat, H)."""
    B = x.shape[0]
    H = hidden_dim
    inner = heads * dim_head
    scale = dim_head ** -0.5

    lat = jnp.broadcast_to(rp["latents"][None], (B,) + rp["latents"].shape)
    lat = lat.astype(jnp.float32)                       # f32 residual stream

    for layer in rp["layers"]:
        # --- PerceiverAttention ---
        xn = layernorm(x, layer["nm_g"], layer["nm_b"])                 # bf16
        ln_ = layernorm(lat, layer["nl_g"], layer["nl_b"])              # bf16
        q = linear(ln_, layer["wq"], n_out=inner)                       # bf16
        kv_in = jnp.concatenate([xn, ln_], axis=1)                      # (B, nkv, H)
        kv = linear(kv_in, layer["wkv"], n_out=2 * inner)               # bf16
        k, v = jnp.split(kv, 2, axis=-1)

        nq, nkv = q.shape[1], k.shape[1]

        def to_heads(z, n):
            return z.reshape(B, n, heads, dim_head).transpose(0, 2, 1, 3)

        oh = attention(to_heads(q, nq), to_heads(k, nkv), to_heads(v, nkv),
                       scale)                                            # bf16
        o = oh.transpose(0, 2, 1, 3).reshape(B, nq, inner)
        # out-projection with fused residual add (f32 output)
        lat = linear(o, layer["wo"], n_out=H, residual=lat,
                     out_dtype=jnp.float32)

        # --- FeedForward (LN -> Linear -> GELU -> Linear), no biases ---
        f = layernorm(lat, layer["ffln_g"], layer["ffln_b"])             # bf16
        f = linear(f, layer["ffw1"], n_out=ff_mult * H, activation="gelu")
        lat = linear(f, layer["ffw2"], n_out=H, residual=lat,
                     out_dtype=jnp.float32)

    lat = layernorm(lat, rp["norm_g"], rp["norm_b"])                     # bf16
    return lat[:, None]                                 # (B, 1, n_lat, H)


def brainx_forward(prep, x, *, modal, cfg):
    """x: (B, num_voxels[modal]) f32 -> (B, 1, num_latents, out_dim) f32."""
    fp = prep["fused"][modal]
    pp = prep["perceiver"]
    rp = pp["resampler"]
    H = cfg["hidden_dim"]

    # lin1 + lin2 + ln_vision + media_pos fused; the only V-sized matmul:
    xw = linear(x, fp["w2"], n_out=H, out_dtype=jnp.float32)         # (B, H)
    hv = fused_expand_ln(xw, fp["w1"], fp["expand_bias"],
                         pp["ln_vision_g"], pp["ln_vision_b"],
                         rp["media_pos"].reshape(1, H))              # (B, L, H) bf16

    lat = perceiver_resampler(rp, hv, heads=cfg["heads"],
                              dim_head=cfg["dim_head"], hidden_dim=H,
                              ff_mult=cfg["ff_mult"])
    return linear(lat, pp["llm"], n_out=cfg["out_dim"],
                  out_dtype=jnp.float32)


# ----------------------------------------------------------------------------
# Pure-JAX f32 reference in torch operation order (for correctness only)
# ----------------------------------------------------------------------------
def _ln_ref(x, g, b, eps=1e-5):
    mu = x.mean(-1, keepdims=True)
    var = ((x - mu) ** 2).mean(-1, keepdims=True)
    return (x - mu) / jnp.sqrt(var + eps) * g + b


def brainx_reference(params, x, *, modal, cfg):
    heads, dh = cfg["heads"], cfg["dim_head"]
    B = x.shape[0]
    p1, p2, pp = params["lin1"][modal], params["lin2"][modal], params["perceiver"]
    t = x[:, None, :] * p1["w"][:, 0][None, :, None] + p1["b"][None, :, None]
    h = t @ p2["w"] + p2["b"]
    hv = _ln_ref(h, pp["ln_vision_g"], pp["ln_vision_b"])
    r = pp["resampler"]
    xm = hv + r["media_pos"][0]
    lat = jnp.broadcast_to(r["latents"][None], (B,) + r["latents"].shape)
    scale = dh ** -0.5
    for layer in r["layers"]:
        xn = _ln_ref(xm, layer["nm_g"], layer["nm_b"])
        ln_ = _ln_ref(lat, layer["nl_g"], layer["nl_b"])
        q = ln_ @ layer["wq"]
        kv = jnp.concatenate([xn, ln_], axis=1) @ layer["wkv"]
        k, v = jnp.split(kv, 2, axis=-1)

        def th(z):
            return z.reshape(B, z.shape[1], heads, dh).transpose(0, 2, 1, 3)

        sim = jnp.einsum("bhid,bhjd->bhij", th(q) * scale, th(k))
        sim = sim - sim.max(-1, keepdims=True)
        attn = jax.nn.softmax(sim, axis=-1)
        o = jnp.einsum("bhij,bhjd->bhid", attn, th(v))
        o = o.transpose(0, 2, 1, 3).reshape(B, o.shape[2], heads * dh)
        lat = lat + o @ layer["wo"]
        f = _ln_ref(lat, layer["ffln_g"], layer["ffln_b"])
        f = jax.nn.gelu(f @ layer["ffw1"], approximate=False) @ layer["ffw2"]
        lat = lat + f
    lat = _ln_ref(lat, r["norm_g"], r["norm_b"])[:, None]
    return lat @ pp["llm_w"] + pp["llm_b"]


# ----------------------------------------------------------------------------
# main
# ----------------------------------------------------------------------------
if __name__ == "__main__":
    # Small demo config (module defaults in comments): structure matches BrainX
    # with use_token=False, use_norm=False, act_first=False.
    cfg = dict(
        num_voxels={1: 256, 2: 384, 5: 256, 7: 128},  # real: {1:15724, 2:14278, 5:13039, 7:12682}
        hidden_dim=128,    # default 1024
        out_dim=128,       # default 1024
        num_latents=32,    # default 256
        heads=4,           # Perceiver default 16
        dim_head=16,       # Perceiver default 96
        depth=2,           # Perceiver default 6
        ff_mult=4,
    )
    modal = "fmri1"

    key = jax.random.PRNGKey(0)
    pkey, xkey = jax.random.split(key)
    params = init_brainx_params(pkey, cfg)
    prep = prepare_brainx_params(params, cfg)        # one-time weight prep

    B = 2
    x = jax.random.normal(xkey, (B, cfg["num_voxels"][1]), dtype=jnp.float32)

    fwd = jax.jit(functools.partial(brainx_forward, modal=modal, cfg=cfg))
    out = jax.block_until_ready(fwd(prep, x))

    assert out.shape == (B, 1, cfg["num_latents"], cfg["out_dim"]), out.shape
    assert bool(jnp.all(jnp.isfinite(out)))

    # Kernel path uses bf16 weights/activations (f32 MXU accumulation and f32
    # LN/softmax statistics), so compare against the pure-f32 torch-order
    # reference with bf16-level tolerance.
    ref = brainx_reference(params, x, modal=modal, cfg=cfg)
    assert bool(jnp.allclose(out, ref, atol=2.5e-2, rtol=2.5e-2)), (
        float(jnp.max(jnp.abs(out - ref))))

    # Standalone check of the multi-K-step matmul paths (nk > 1), which the
    # small demo shapes above do not reach.
    k1, k2, k3 = jax.random.split(jax.random.PRNGKey(1), 3)
    wt = 0.02 * jax.random.normal(k1, (1280, 128), jnp.float32)
    xt = jax.random.normal(k2, (16, 1280), jnp.float32)
    rt = jax.random.normal(k3, (16, 128), jnp.float32)
    pt = prepare_linear(wt)
    yt_ref = xt @ wt
    yt_bf16 = linear(xt, pt, n_out=128)                           # scratch acc, bf16 out
    yt_f32 = linear(xt, pt, n_out=128, residual=rt,
                    out_dtype=jnp.float32)                        # in-place f32 acc + residual
    assert bool(jnp.allclose(yt_bf16.astype(jnp.float32), yt_ref,
                             atol=3e-2, rtol=3e-2))
    assert bool(jnp.allclose(yt_f32, yt_ref + rt, atol=3e-2, rtol=3e-2))

    print("KERNEL_OK")
</pallas_src>

<mosaic_0001>
module attributes {stable_mosaic.version = 11 : i64} {
  func.func @_matmul_kernel(%arg0: i32, %arg1: i32, %arg2: i32, %arg3: memref<8x256xbf16, #tpu.memory_space<vmem>>, %arg4: memref<256x128xbf16, #tpu.memory_space<vmem>>, %arg5: memref<8x128xf32, #tpu.memory_space<vmem>>) attributes {dimension_semantics = [#tpu.dimension_semantics<parallel>, #tpu.dimension_semantics<parallel>, #tpu.dimension_semantics<arbitrary>], iteration_bounds = array<i64: 1, 1, 1>, scalar_prefetch = 0 : i64, scratch_operands = 0 : i64, tpu.core_type = #tpu.core_type<tc>, window_params = [{transform_indices = @transform_0, window_bounds = array<i64: 8, 256>}, {transform_indices = @transform_1, window_bounds = array<i64: 256, 128>}, {transform_indices = @transform_2, window_bounds = array<i64: 8, 128>}]} {
    %c0 = arith.constant 0 : index
    %c0_0 = arith.constant 0 : index
    %0 = vector.load %arg3[%c0, %c0_0] : memref<8x256xbf16, #tpu.memory_space<vmem>>, vector<8x256xbf16>
    %c0_1 = arith.constant 0 : index
    %c0_2 = arith.constant 0 : index
    %1 = vector.load %arg4[%c0_1, %c0_2] : memref<256x128xbf16, #tpu.memory_space<vmem>>, vector<256x128xbf16>
    %cst = arith.constant dense<0.000000e+00> : vector<8x128xf32>
    %2 = tpu.matmul %0, %1, %cst {dimension_numbers = #tpu.dot_dimension_numbers<[1], [0], [0], [1], [0, 0, 1, 1], [], []>} : vector<8x256xbf16>, vector<256x128xbf16>, vector<8x128xf32> -> vector<8x128xf32>
    %c0_3 = arith.constant 0 : index
    %c0_4 = arith.constant 0 : index
    %3 = vector.load %arg5[%c0_3, %c0_4] : memref<8x128xf32, #tpu.memory_space<vmem>>, vector<8x128xf32>
    tpu.vector_store %arg5[%c0_3, %c0_4], %2 {strides = array<i32>} : memref<8x128xf32, #tpu.memory_space<vmem>>, vector<8x128xf32>,
    return
  }
  func.func @transform_0(%arg0: i32, %arg1: i32, %arg2: i32) -> (i32, i32) {
    %c0_i32 = arith.constant 0 : i32
    return %arg0, %arg2 : i32, i32
  }
  func.func @transform_1(%arg0: i32, %arg1: i32, %arg2: i32) -> (i32, i32) {
    %c0_i32 = arith.constant 0 : i32
    return %arg2, %arg1 : i32, i32
  }
  func.func @transform_2(%arg0: i32, %arg1: i32, %arg2: i32) -> (i32, i32) {
    %c0_i32 = arith.constant 0 : i32
    return %arg0, %arg1 : i32, i32
  }
}

module attributes {stable_mosaic.version = 11 : i64} {
  func.func @_layernorm_kernel(%arg0: i32, %arg1: memref<64x128xf32, #tpu.memory_space<vmem>>, %arg2: memref<1x128xf32, #tpu.memory_space<vmem>>, %arg3: memref<1x128xf32, #tpu.memory_space<vmem>>, %arg4: memref<64x128xbf16, #tpu.memory_space<vmem>>) attributes {dimension_semantics = [#tpu.dimension_semantics<parallel>], iteration_bounds = array<i64: 1>, scalar_prefetch = 0 : i64, scratch_operands = 0 : i64, tpu.core_type = #tpu.core_type<tc>, window_params = [{transform_indices = @transform_0, window_bounds = array<i64: 64, 128>}, {pipeline_mode = #tpu.pipeline_mode<synchronous>, transform_indices = @transform_1, window_bounds = array<i64: 1, 128>}, {pipeline_mode = #tpu.pipeline_mode<synchronous>, transform_indices = @transform_2, window_bounds = array<i64: 1, 128>}, {transform_indices = @transform_3, window_bounds = array<i64: 64, 128>}]} {
    %c0 = arith.constant 0 : index
    %c0_0 = arith.constant 0 : index
    %0 = vector.load %arg1[%c0, %c0_0] : memref<64x128xf32, #tpu.memory_space<vmem>>, vector<64x128xf32>
    %cst = arith.constant dense<0.000000e+00> : vector<64xf32>
    %1 = vector.multi_reduction <add>, %0, %cst [1] : vector<64x128xf32> to vector<64xf32>
    %2 = vector.shape_cast %1 : vector<64xf32> to vector<64x1xf32>
    %cst_1 = arith.constant 1.280000e+02 : f32
    %3 = vector.broadcast %cst_1 : f32 to vector<64x1xf32>
    %4 = arith.divf %2, %3 : vector<64x1xf32>
    %5 = vector.broadcast %4 : vector<64x1xf32> to vector<64x128xf32>
    %6 = arith.subf %0, %5 : vector<64x128xf32>
    %7 = arith.mulf %6, %6 : vector<64x128xf32>
    %cst_2 = arith.constant dense<0.000000e+00> : vector<64xf32>
    %8 = vector.multi_reduction <add>, %7, %cst_2 [1] : vector<64x128xf32> to vector<64xf32>
    %9 = vector.shape_cast %8 : vector<64xf32> to vector<64x1xf32>
    %cst_3 = arith.constant 1.280000e+02 : f32
    %10 = vector.broadcast %cst_3 : f32 to vector<64x1xf32>
    %11 = arith.divf %9, %10 : vector<64x1xf32>
    %12 = vector.broadcast %4 : vector<64x1xf32> to vector<64x128xf32>
    %13 = arith.subf %0, %12 : vector<64x128xf32>
    %cst_4 = arith.constant 9.99999974E-6 : f32
    %14 = vector.broadcast %cst_4 : f32 to vector<64x1xf32>
    %15 = arith.addf %11, %14 : vector<64x1xf32>
    %16 = math.rsqrt %15 : vector<64x1xf32>
    %17 = vector.broadcast %16 : vector<64x1xf32> to vector<64x128xf32>
    %18 = arith.mulf %13, %17 : vector<64x128xf32>
    %c0_5 = arith.constant 0 : index
    %c0_6 = arith.constant 0 : index
    %19 = vector.load %arg2[%c0_5, %c0_6] : memref<1x128xf32, #tpu.memory_space<vmem>>, vector<1x128xf32>
    %20 = vector.broadcast %19 : vector<1x128xf32> to vector<64x128xf32>
    %21 = arith.mulf %18, %20 : vector<64x128xf32>
    %c0_7 = arith.constant 0 : index
    %c0_8 = arith.constant 0 : index
    %22 = vector.load %arg3[%c0_7, %c0_8] : memref<1x128xf32, #tpu.memory_space<vmem>>, vector<1x128xf32>
    %23 = vector.broadcast %22 : vector<1x128xf32> to vector<64x128xf32>
    %24 = arith.addf %21, %23 : vector<64x128xf32>
    %25 = arith.truncf %24 : vector<64x128xf32> to vector<64x128xbf16>
    %c0_9 = arith.constant 0 : index
    %c0_10 = arith.constant 0 : index
    %26 = vector.load %arg4[%c0_9, %c0_10] : memref<64x128xbf16, #tpu.memory_space<vmem>>, vector<64x128xbf16>
    tpu.vector_store %arg4[%c0_9, %c0_10], %25 {strides = array<i32>} : memref<64x128xbf16, #tpu.memory_space<vmem>>, vector<64x128xbf16>,
    return
  }
  func.func @transform_0(%arg0: i32) -> (i32, i32) {
    %c0_i32 = arith.constant 0 : i32
    %c0_i32_0 = arith.constant 0 : i32
    return %arg0, %c0_i32 : i32, i32
  }
  func.func @transform_1(%arg0: i32) -> (i32, i32) {
    %c0_i32 = arith.constant 0 : i32
    %c0_i32_0 = arith.constant 0 : i32
    %c0_i32_1 = arith.constant 0 : i32
    return %c0_i32, %c0_i32_0 : i32, i32
  }
  func.func @transform_2(%arg0: i32) -> (i32, i32) {
    %c0_i32 = arith.constant 0 : i32
    %c0_i32_0 = arith.constant 0 : i32
    %c0_i32_1 = arith.constant 0 : i32
    return %c0_i32, %c0_i32_0 : i32, i32
  }
  func.func @transform_3(%arg0: i32) -> (i32, i32) {
    %c0_i32 = arith.constant 0 : i32
    %c0_i32_0 = arith.constant 0 : i32
    return %arg0, %c0_i32 : i32, i32
  }
}

module attributes {stable_mosaic.version = 11 : i64} {
  func.func @_expand_ln_kernel(%arg0: i32, %arg1: memref<1x1x128xf32, #tpu.memory_space<vmem>>, %arg2: memref<32x1xf32, #tpu.memory_space<vmem>>, %arg3: memref<32x128xf32, #tpu.memory_space<vmem>>, %arg4: memref<1x128xf32, #tpu.memory_space<vmem>>, %arg5: memref<1x128xf32, #tpu.memory_space<vmem>>, %arg6: memref<1x128xf32, #tpu.memory_space<vmem>>, %arg7: memref<1x32x128xbf16, #tpu.memory_space<vmem>>) attributes {dimension_semantics = [#tpu.dimension_semantics<parallel>], iteration_bounds = array<i64: 2>, scalar_prefetch = 0 : i64, scratch_operands = 0 : i64, tpu.core_type = #tpu.core_type<tc>, window_params = [{transform_indices = @transform_0, window_bounds = array<i64: 1, 1, 128>}, {pipeline_mode = #tpu.pipeline_mode<synchronous>, transform_indices = @transform_1, window_bounds = array<i64: 32, 1>}, {pipeline_mode = #tpu.pipeline_mode<synchronous>, transform_indices = @transform_2, window_bounds = array<i64: 32, 128>}, {pipeline_mode = #tpu.pipeline_mode<synchronous>, transform_indices = @transform_3, window_bounds = array<i64: 1, 128>}, {pipeline_mode = #tpu.pipeline_mode<synchronous>, transform_indices = @transform_4, window_bounds = array<i64: 1, 128>}, {pipeline_mode = #tpu.pipeline_mode<synchronous>, transform_indices = @transform_5, window_bounds = array<i64: 1, 128>}, {transform_indices = @transform_6, window_bounds = array<i64: 1, 32, 128>}]} {
    %c0 = arith.constant 0 : index
    %c0_0 = arith.constant 0 : index
    %c0_1 = arith.constant 0 : index
    %0 = vector.load %arg1[%c0, %c0_0, %c0_1] : memref<1x1x128xf32, #tpu.memory_space<vmem>>, vector<1x1x128xf32>
    %1 = vector.shape_cast %0 : vector<1x1x128xf32> to vector<1x128xf32>
    %c0_2 = arith.constant 0 : index
    %c0_3 = arith.constant 0 : index
    %2 = vector.load %arg2[%c0_2, %c0_3] : memref<32x1xf32, #tpu.memory_space<vmem>>, vector<32x1xf32>
    %3 = vector.broadcast %2 : vector<32x1xf32> to vector<32x128xf32>
    %4 = vector.broadcast %1 : vector<1x128xf32> to vector<32x128xf32>
    %5 = arith.mulf %3, %4 : vector<32x128xf32>
    %c0_4 = arith.constant 0 : index
    %c0_5 = arith.constant 0 : index
    %6 = vector.load %arg3[%c0_4, %c0_5] : memref<32x128xf32, #tpu.memory_space<vmem>>, vector<32x128xf32>
    %7 = arith.addf %5, %6 : vector<32x128xf32>
    %cst = arith.constant dense<0.000000e+00> : vector<32xf32>
    %8 = vector.multi_reduction <add>, %7, %cst [1] : vector<32x128xf32> to vector<32xf32>
    %9 = vector.shape_cast %8 : vector<32xf32> to vector<32x1xf32>
    %cst_6 = arith.constant 1.280000e+02 : f32
    %10 = vector.broadcast %cst_6 : f32 to vector<32x1xf32>
    %11 = arith.divf %9, %10 : vector<32x1xf32>
    %12 = vector.broadcast %11 : vector<32x1xf32> to vector<32x128xf32>
    %13 = arith.subf %7, %12 : vector<32x128xf32>
    %14 = arith.mulf %13, %13 : vector<32x128xf32>
    %cst_7 = arith.constant dense<0.000000e+00> : vector<32xf32>
    %15 = vector.multi_reduction <add>, %14, %cst_7 [1] : vector<32x128xf32> to vector<32xf32>
    %16 = vector.shape_cast %15 : vector<32xf32> to vector<32x1xf32>
    %cst_8 = arith.constant 1.280000e+02 : f32
    %17 = vector.broadcast %cst_8 : f32 to vector<32x1xf32>
    %18 = arith.divf %16, %17 : vector<32x1xf32>
    %19 = vector.broadcast %11 : vector<32x1xf32> to vector<32x128xf32>
    %20 = arith.subf %7, %19 : vector<32x128xf32>
    %cst_9 = arith.constant 9.99999974E-6 : f32
    %21 = vector.broadcast %cst_9 : f32 to vector<32x1xf32>
    %22 = arith.addf %18, %21 : vector<32x1xf32>
    %23 = math.rsqrt %22 : vector<32x1xf32>
    %24 = vector.broadcast %23 : vector<32x1xf32> to vector<32x128xf32>
    %25 = arith.mulf %20, %24 : vector<32x128xf32>
    %c0_10 = arith.constant 0 : index
    %c0_11 = arith.constant 0 : index
    %26 = vector.load %arg4[%c0_10, %c0_11] : memref<1x128xf32, #tpu.memory_space<vmem>>, vector<1x128xf32>
    %27 = vector.broadcast %26 : vector<1x128xf32> to vector<32x128xf32>
    %28 = arith.mulf %25, %27 : vector<32x128xf32>
    %c0_12 = arith.constant 0 : index
    %c0_13 = arith.constant 0 : index
    %29 = vector.load %arg5[%c0_12, %c0_13] : memref<1x128xf32, #tpu.memory_space<vmem>>, vector<1x128xf32>
    %30 = vector.broadcast %29 : vector<1x128xf32> to vector<32x128xf32>
    %31 = arith.addf %28, %30 : vector<32x128xf32>
    %c0_14 = arith.constant 0 : index
    %c0_15 = arith.constant 0 : index
    %32 = vector.load %arg6[%c0_14, %c0_15] : memref<1x128xf32, #tpu.memory_space<vmem>>, vector<1x128xf32>
    %33 = vector.broadcast %32 : vector<1x128xf32> to vector<32x128xf32>
    %34 = arith.addf %31, %33 : vector<32x128xf32>
    %35 = arith.truncf %34 : vector<32x128xf32> to vector<32x128xbf16>
    %c0_16 = arith.constant 0 : index
    %c0_17 = arith.constant 0 : index
    %c0_18 = arith.constant 0 : index
    %36 = vector.load %arg7[%c0_16, %c0_17, %c0_18] : memref<1x32x128xbf16, #tpu.memory_space<vmem>>, vector<1x32x128xbf16>
    %37 = vector.shape_cast %36 : vector<1x32x128xbf16> to vector<32x128xbf16>
    %38 = vector.shape_cast %35 : vector<32x128xbf16> to vector<1x32x128xbf16>
    tpu.vector_store %arg7[%c0_16, %c0_17, %c0_18], %38 {strides = array<i32>} : memref<1x32x128xbf16, #tpu.memory_space<vmem>>, vector<1x32x128xbf16>,
    return
  }
  func.func @transform_0(%arg0: i32) -> (i32, i32, i32) {
    %c0_i32 = arith.constant 0 : i32
    %c0_i32_0 = arith.constant 0 : i32
    %c0_i32_1 = arith.constant 0 : i32
    return %arg0, %c0_i32, %c0_i32_0 : i32, i32, i32
  }
  func.func @transform_1(%arg0: i32) -> (i32, i32) {
    %c0_i32 = arith.constant 0 : i32
    %c0_i32_0 = arith.constant 0 : i32
    %c0_i32_1 = arith.constant 0 : i32
    return %c0_i32, %c0_i32_0 : i32, i32
  }
  func.func @transform_2(%arg0: i32) -> (i32, i32) {
    %c0_i32 = arith.constant 0 : i32
    %c0_i32_0 = arith.constant 0 : i32
    %c0_i32_1 = arith.constant 0 : i32
    return %c0_i32, %c0_i32_0 : i32, i32
  }
  func.func @transform_3(%arg0: i32) -> (i32, i32) {
    %c0_i32 = arith.constant 0 : i32
    %c0_i32_0 = arith.constant 0 : i32
    %c0_i32_1 = arith.constant 0 : i32
    return %c0_i32, %c0_i32_0 : i32, i32
  }
  func.func @transform_4(%arg0: i32) -> (i32, i32) {
    %c0_i32 = arith.constant 0 : i32
    %c0_i32_0 = arith.constant 0 : i32
    %c0_i32_1 = arith.constant 0 : i32
    return %c0_i32, %c0_i32_0 : i32, i32
  }
  func.func @transform_5(%arg0: i32) -> (i32, i32) {
    %c0_i32 = arith.constant 0 : i32
    %c0_i32_0 = arith.constant 0 : i32
    %c0_i32_1 = arith.constant 0 : i32
    return %c0_i32, %c0_i32_0 : i32, i32
  }
  func.func @transform_6(%arg0: i32) -> (i32, i32, i32) {
    %c0_i32 = arith.constant 0 : i32
    %c0_i32_0 = arith.constant 0 : i32
    %c0_i32_1 = arith.constant 0 : i32
    return %arg0, %c0_i32, %c0_i32_0 : i32, i32, i32
  }
}

module attributes {stable_mosaic.version = 11 : i64} {
  func.func @_layernorm_kernel(%arg0: i32, %arg1: memref<64x128xbf16, #tpu.memory_space<vmem>>, %arg2: memref<1x128xf32, #tpu.memory_space<vmem>>, %arg3: memref<1x128xf32, #tpu.memory_space<vmem>>, %arg4: memref<64x128xbf16, #tpu.memory_space<vmem>>) attributes {dimension_semantics = [#tpu.dimension_semantics<parallel>], iteration_bounds = array<i64: 1>, scalar_prefetch = 0 : i64, scratch_operands = 0 : i64, tpu.core_type = #tpu.core_type<tc>, window_params = [{transform_indices = @transform_0, window_bounds = array<i64: 64, 128>}, {pipeline_mode = #tpu.pipeline_mode<synchronous>, transform_indices = @transform_1, window_bounds = array<i64: 1, 128>}, {pipeline_mode = #tpu.pipeline_mode<synchronous>, transform_indices = @transform_2, window_bounds = array<i64: 1, 128>}, {transform_indices = @transform_3, window_bounds = array<i64: 64, 128>}]} {
    %c0 = arith.constant 0 : index
    %c0_0 = arith.constant 0 : index
    %0 = vector.load %arg1[%c0, %c0_0] : memref<64x128xbf16, #tpu.memory_space<vmem>>, vector<64x128xbf16>
    %1 = arith.extf %0 : vector<64x128xbf16> to vector<64x128xf32>
    %cst = arith.constant dense<0.000000e+00> : vector<64xf32>
    %2 = vector.multi_reduction <add>, %1, %cst [1] : vector<64x128xf32> to vector<64xf32>
    %3 = vector.shape_cast %2 : vector<64xf32> to vector<64x1xf32>
    %cst_1 = arith.constant 1.280000e+02 : f32
    %4 = vector.broadcast %cst_1 : f32 to vector<64x1xf32>
    %5 = arith.divf %3, %4 : vector<64x1xf32>
    %6 = vector.broadcast %5 : vector<64x1xf32> to vector<64x128xf32>
    %7 = arith.subf %1, %6 : vector<64x128xf32>
    %8 = arith.mulf %7, %7 : vector<64x128xf32>
    %cst_2 = arith.constant dense<0.000000e+00> : vector<64xf32>
    %9 = vector.multi_reduction <add>, %8, %cst_2 [1] : vector<64x128xf32> to vector<64xf32>
    %10 = vector.shape_cast %9 : vector<64xf32> to vector<64x1xf32>
    %cst_3 = arith.constant 1.280000e+02 : f32
    %11 = vector.broadcast %cst_3 : f32 to vector<64x1xf32>
    %12 = arith.divf %10, %11 : vector<64x1xf32>
    %13 = vector.broadcast %5 : vector<64x1xf32> to vector<64x128xf32>
    %14 = arith.subf %1, %13 : vector<64x128xf32>
    %cst_4 = arith.constant 9.99999974E-6 : f32
    %15 = vector.broadcast %cst_4 : f32 to vector<64x1xf32>
    %16 = arith.addf %12, %15 : vector<64x1xf32>
    %17 = math.rsqrt %16 : vector<64x1xf32>
    %18 = vector.broadcast %17 : vector<64x1xf32> to vector<64x128xf32>
    %19 = arith.mulf %14, %18 : vector<64x128xf32>
    %c0_5 = arith.constant 0 : index
    %c0_6 = arith.constant 0 : index
    %20 = vector.load %arg2[%c0_5, %c0_6] : memref<1x128xf32, #tpu.memory_space<vmem>>, vector<1x128xf32>
    %21 = vector.broadcast %20 : vector<1x128xf32> to vector<64x128xf32>
    %22 = arith.mulf %19, %21 : vector<64x128xf32>
    %c0_7 = arith.constant 0 : index
    %c0_8 = arith.constant 0 : index
    %23 = vector.load %arg3[%c0_7, %c0_8] : memref<1x128xf32, #tpu.memory_space<vmem>>, vector<1x128xf32>
    %24 = vector.broadcast %23 : vector<1x128xf32> to vector<64x128xf32>
    %25 = arith.addf %22, %24 : vector<64x128xf32>
    %26 = arith.truncf %25 : vector<64x128xf32> to vector<64x128xbf16>
    %c0_9 = arith.constant 0 : index
    %c0_10 = arith.constant 0 : index
    %27 = vector.load %arg4[%c0_9, %c0_10] : memref<64x128xbf16, #tpu.memory_space<vmem>>, vector<64x128xbf16>
    tpu.vector_store %arg4[%c0_9, %c0_10], %26 {strides = array<i32>} : memref<64x128xbf16, #tpu.memory_space<vmem>>, vector<64x128xbf16>,
    return
  }
  func.func @transform_0(%arg0: i32) -> (i32, i32) {
    %c0_i32 = arith.constant 0 : i32
    %c0_i32_0 = arith.constant 0 : i32
    return %arg0, %c0_i32 : i32, i32
  }
  func.func @transform_1(%arg0: i32) -> (i32, i32) {
    %c0_i32 = arith.constant 0 : i32
    %c0_i32_0 = arith.constant 0 : i32
    %c0_i32_1 = arith.constant 0 : i32
    return %c0_i32, %c0_i32_0 : i32, i32
  }
  func.func @transform_2(%arg0: i32) -> (i32, i32) {
    %c0_i32 = arith.constant 0 : i32
    %c0_i32_0 = arith.constant 0 : i32
    %c0_i32_1 = arith.constant 0 : i32
    return %c0_i32, %c0_i32_0 : i32, i32
  }
  func.func @transform_3(%arg0: i32) -> (i32, i32) {
    %c0_i32 = arith.constant 0 : i32
    %c0_i32_0 = arith.constant 0 : i32
    return %arg0, %c0_i32 : i32, i32
  }
}

module attributes {stable_mosaic.version = 11 : i64} {
  func.func @_matmul_kernel(%arg0: i32, %arg1: i32, %arg2: i32, %arg3: memref<128x128xbf16, #tpu.memory_space<vmem>>, %arg4: memref<128x128xbf16, #tpu.memory_space<vmem>>, %arg5: memref<128x128xbf16, #tpu.memory_space<vmem>>) attributes {dimension_semantics = [#tpu.dimension_semantics<parallel>, #tpu.dimension_semantics<parallel>, #tpu.dimension_semantics<arbitrary>], iteration_bounds = array<i64: 1, 1, 1>, scalar_prefetch = 0 : i64, scratch_operands = 0 : i64, tpu.core_type = #tpu.core_type<tc>, window_params = [{transform_indices = @transform_0, window_bounds = array<i64: 128, 128>}, {transform_indices = @transform_1, window_bounds = array<i64: 128, 128>}, {transform_indices = @transform_2, window_bounds = array<i64: 128, 128>}]} {
    %c0 = arith.constant 0 : index
    %c0_0 = arith.constant 0 : index
    %0 = vector.load %arg3[%c0, %c0_0] : memref<128x128xbf16, #tpu.memory_space<vmem>>, vector<128x128xbf16>
    %c0_1 = arith.constant 0 : index
    %c0_2 = arith.constant 0 : index
    %1 = vector.load %arg4[%c0_1, %c0_2] : memref<128x128xbf16, #tpu.memory_space<vmem>>, vector<128x128xbf16>
    %cst = arith.constant dense<0.000000e+00> : vector<128x128xf32>
    %2 = tpu.matmul %0, %1, %cst {dimension_numbers = #tpu.dot_dimension_numbers<[1], [0], [0], [1], [0, 0, 1, 1], [], []>} : vector<128x128xbf16>, vector<128x128xbf16>, vector<128x128xf32> -> vector<128x128xf32>
    %3 = arith.truncf %2 : vector<128x128xf32> to vector<128x128xbf16>
    %c0_3 = arith.constant 0 : index
    %c0_4 = arith.constant 0 : index
    %4 = vector.load %arg5[%c0_3, %c0_4] : memref<128x128xbf16, #tpu.memory_space<vmem>>, vector<128x128xbf16>
    tpu.vector_store %arg5[%c0_3, %c0_4], %3 {strides = array<i32>} : memref<128x128xbf16, #tpu.memory_space<vmem>>, vector<128x128xbf16>,
    return
  }
  func.func @transform_0(%arg0: i32, %arg1: i32, %arg2: i32) -> (i32, i32) {
    %c0_i32 = arith.constant 0 : i32
    return %arg0, %arg2 : i32, i32
  }
  func.func @transform_1(%arg0: i32, %arg1: i32, %arg2: i32) -> (i32, i32) {
    %c0_i32 = arith.constant 0 : i32
    return %arg2, %arg1 : i32, i32
  }
  func.func @transform_2(%arg0: i32, %arg1: i32, %arg2: i32) -> (i32, i32) {
    %c0_i32 = arith.constant 0 : i32
    return %arg0, %arg1 : i32, i32
  }
}

module attributes {stable_mosaic.version = 11 : i64} {
  func.func @_matmul_kernel(%arg0: i32, %arg1: i32, %arg2: i32, %arg3: memref<64x128xbf16, #tpu.memory_space<vmem>>, %arg4: memref<128x128xbf16, #tpu.memory_space<vmem>>, %arg5: memref<64x128xbf16, #tpu.memory_space<vmem>>) attributes {dimension_semantics = [#tpu.dimension_semantics<parallel>, #tpu.dimension_semantics<parallel>, #tpu.dimension_semantics<arbitrary>], iteration_bounds = array<i64: 1, 1, 1>, scalar_prefetch = 0 : i64, scratch_operands = 0 : i64, tpu.core_type = #tpu.core_type<tc>, window_params = [{transform_indices = @transform_0, window_bounds = array<i64: 64, 128>}, {transform_indices = @transform_1, window_bounds = array<i64: 128, 128>}, {transform_indices = @transform_2, window_bounds = array<i64: 64, 128>}]} {
    %c0 = arith.constant 0 : index
    %c0_0 = arith.constant 0 : index
    %0 = vector.load %arg3[%c0, %c0_0] : memref<64x128xbf16, #tpu.memory_space<vmem>>, vector<64x128xbf16>
    %c0_1 = arith.constant 0 : index
    %c0_2 = arith.constant 0 : index
    %1 = vector.load %arg4[%c0_1, %c0_2] : memref<128x128xbf16, #tpu.memory_space<vmem>>, vector<128x128xbf16>
    %cst = arith.constant dense<0.000000e+00> : vector<64x128xf32>
    %2 = tpu.matmul %0, %1, %cst {dimension_numbers = #tpu.dot_dimension_numbers<[1], [0], [0], [1], [0, 0, 1, 1], [], []>} : vector<64x128xbf16>, vector<128x128xbf16>, vector<64x128xf32> -> vector<64x128xf32>
    %3 = arith.truncf %2 : vector<64x128xf32> to vector<64x128xbf16>
    %c0_3 = arith.constant 0 : index
    %c0_4 = arith.constant 0 : index
    %4 = vector.load %arg5[%c0_3, %c0_4] : memref<64x128xbf16, #tpu.memory_space<vmem>>, vector<64x128xbf16>
    tpu.vector_store %arg5[%c0_3, %c0_4], %3 {strides = array<i32>} : memref<64x128xbf16, #tpu.memory_space<vmem>>, vector<64x128xbf16>,
    return
  }
  func.func @transform_0(%arg0: i32, %arg1: i32, %arg2: i32) -> (i32, i32) {
    %c0_i32 = arith.constant 0 : i32
    return %arg0, %arg2 : i32, i32
  }
  func.func @transform_1(%arg0: i32, %arg1: i32, %arg2: i32) -> (i32, i32) {
    %c0_i32 = arith.constant 0 : i32
    return %arg2, %arg1 : i32, i32
  }
  func.func @transform_2(%arg0: i32, %arg1: i32, %arg2: i32) -> (i32, i32) {
    %c0_i32 = arith.constant 0 : i32
    return %arg0, %arg1 : i32, i32
  }
}

module attributes {stable_mosaic.version = 11 : i64} {
  func.func @_attn_kernel(%arg0: i32, %arg1: i32, %arg2: memref<1x1x32x16xbf16, #tpu.memory_space<vmem>>, %arg3: memref<1x1x64x16xbf16, #tpu.memory_space<vmem>>, %arg4: memref<1x1x64x16xbf16, #tpu.memory_space<vmem>>, %arg5: memref<1x1x32x16xbf16, #tpu.memory_space<vmem>>) attributes {dimension_semantics = [#tpu.dimension_semantics<parallel>, #tpu.dimension_semantics<parallel>], iteration_bounds = array<i64: 2, 4>, scalar_prefetch = 0 : i64, scratch_operands = 0 : i64, tpu.core_type = #tpu.core_type<tc>, window_params = [{transform_indices = @transform_0, window_bounds = array<i64: 1, 1, 32, 16>}, {transform_indices = @transform_1, window_bounds = array<i64: 1, 1, 64, 16>}, {transform_indices = @transform_2, window_bounds = array<i64: 1, 1, 64, 16>}, {transform_indices = @transform_3, window_bounds = array<i64: 1, 1, 32, 16>}]} {
    %c0 = arith.constant 0 : index
    %c0_0 = arith.constant 0 : index
    %c0_1 = arith.constant 0 : index
    %c0_2 = arith.constant 0 : index
    %0 = vector.load %arg2[%c0, %c0_0, %c0_1, %c0_2] : memref<1x1x32x16xbf16, #tpu.memory_space<vmem>>, vector<1x1x32x16xbf16>
    %1 = vector.shape_cast %0 : vector<1x1x32x16xbf16> to vector<32x16xbf16>
    %c0_3 = arith.constant 0 : index
    %c0_4 = arith.constant 0 : index
    %c0_5 = arith.constant 0 : index
    %c0_6 = arith.constant 0 : index
    %2 = vector.load %arg3[%c0_3, %c0_4, %c0_5, %c0_6] : memref<1x1x64x16xbf16, #tpu.memory_space<vmem>>, vector<1x1x64x16xbf16>
    %3 = vector.shape_cast %2 : vector<1x1x64x16xbf16> to vector<64x16xbf16>
    %c0_7 = arith.constant 0 : index
    %c0_8 = arith.constant 0 : index
    %c0_9 = arith.constant 0 : index
    %c0_10 = arith.constant 0 : index
    %4 = vector.load %arg4[%c0_7, %c0_8, %c0_9, %c0_10] : memref<1x1x64x16xbf16, #tpu.memory_space<vmem>>, vector<1x1x64x16xbf16>
    %5 = vector.shape_cast %4 : vector<1x1x64x16xbf16> to vector<64x16xbf16>
    %cst = arith.constant dense<0.000000e+00> : vector<32x64xf32>
    %6 = tpu.matmul %1, %3, %cst {dimension_numbers = #tpu.dot_dimension_numbers<[1], [1], [0], [0], [0, 0, 1, 0], [], []>} : vector<32x16xbf16>, vector<64x16xbf16>, vector<32x64xf32> -> vector<32x64xf32>
    %cst_11 = arith.constant 2.500000e-01 : f32
    %7 = vector.broadcast %cst_11 : f32 to vector<32x64xf32>
    %8 = arith.mulf %6, %7 : vector<32x64xf32>
    %cst_12 = arith.constant dense<0xFF800000> : vector<32xf32>
    %9 = vector.multi_reduction <maximumf>, %8, %cst_12 [1] : vector<32x64xf32> to vector<32xf32>
    %10 = vector.shape_cast %9 : vector<32xf32> to vector<32x1xf32>
    %11 = vector.broadcast %10 : vector<32x1xf32> to vector<32x64xf32>
    %12 = arith.subf %8, %11 : vector<32x64xf32>
    %13 = math.exp %12 : vector<32x64xf32>
    %cst_13 = arith.constant dense<0.000000e+00> : vector<32xf32>
    %14 = vector.multi_reduction <add>, %13, %cst_13 [1] : vector<32x64xf32> to vector<32xf32>
    %15 = vector.shape_cast %14 : vector<32xf32> to vector<32x1xf32>
    %16 = tpu.reciprocal %15 {approx = true} : vector<32x1xf32> -> vector<32x1xf32>
    %17 = vector.broadcast %16 : vector<32x1xf32> to vector<32x64xf32>
    %18 = arith.mulf %13, %17 : vector<32x64xf32>
    %19 = arith.truncf %18 : vector<32x64xf32> to vector<32x64xbf16>
    %cst_14 = arith.constant dense<0.000000e+00> : vector<32x16xf32>
    %20 = tpu.matmul %19, %5, %cst_14 {dimension_numbers = #tpu.dot_dimension_numbers<[1], [0], [0], [1], [0, 0, 1, 1], [], []>} : vector<32x64xbf16>, vector<64x16xbf16>, vector<32x16xf32> -> vector<32x16xf32>
    %21 = arith.truncf %20 : vector<32x16xf32> to vector<32x16xbf16>
    %c0_15 = arith.constant 0 : index
    %c0_16 = arith.constant 0 : index
    %c0_17 = arith.constant 0 : index
    %c0_18 = arith.constant 0 : index
    %22 = vector.load %arg5[%c0_15, %c0_16, %c0_17, %c0_18] : memref<1x1x32x16xbf16, #tpu.memory_space<vmem>>, vector<1x1x32x16xbf16>
    %23 = vector.shape_cast %22 : vector<1x1x32x16xbf16> to vector<32x16xbf16>
    %24 = vector.shape_cast %21 : vector<32x16xbf16> to vector<1x1x32x16xbf16>
    tpu.vector_store %arg5[%c0_15, %c0_16, %c0_17, %c0_18], %24 {strides = array<i32>} : memref<1x1x32x16xbf16, #tpu.memory_space<vmem>>, vector<1x1x32x16xbf16>,
    return
  }
  func.func @transform_0(%arg0: i32, %arg1: i32) -> (i32, i32, i32, i32) {
    %c0_i32 = arith.constant 0 : i32
    %c0_i32_0 = arith.constant 0 : i32
    %c0_i32_1 = arith.constant 0 : i32
    return %arg0, %arg1, %c0_i32, %c0_i32_0 : i32, i32, i32, i32
  }
  func.func @transform_1(%arg0: i32, %arg1: i32) -> (i32, i32, i32, i32) {
    %c0_i32 = arith.constant 0 : i32
    %c0_i32_0 = arith.constant 0 : i32
    %c0_i32_1 = arith.constant 0 : i32
    return %arg0, %arg1, %c0_i32, %c0_i32_0 : i32, i32, i32, i32
  }
  func.func @transform_2(%arg0: i32, %arg1: i32) -> (i32, i32, i32, i32) {
    %c0_i32 = arith.constant 0 : i32
    %c0_i32_0 = arith.constant 0 : i32
    %c0_i32_1 = arith.constant 0 : i32
    return %arg0, %arg1, %c0_i32, %c0_i32_0 : i32, i32, i32, i32
  }
  func.func @transform_3(%arg0: i32, %arg1: i32) -> (i32, i32, i32, i32) {
    %c0_i32 = arith.constant 0 : i32
    %c0_i32_0 = arith.constant 0 : i32
    %c0_i32_1 = arith.constant 0 : i32
    return %arg0, %arg1, %c0_i32, %c0_i32_0 : i32, i32, i32, i32
  }
}

module attributes {stable_mosaic.version = 11 : i64} {
  func.func @_matmul_kernel(%arg0: i32, %arg1: i32, %arg2: i32, %arg3: memref<64x128xbf16, #tpu.memory_space<vmem>>, %arg4: memref<128x128xbf16, #tpu.memory_space<vmem>>, %arg5: memref<64x128xf32, #tpu.memory_space<vmem>>, %arg6: memref<64x128xf32, #tpu.memory_space<vmem>>) attributes {dimension_semantics = [#tpu.dimension_semantics<parallel>, #tpu.dimension_semantics<parallel>, #tpu.dimension_semantics<arbitrary>], iteration_bounds = array<i64: 1, 1, 1>, scalar_prefetch = 0 : i64, scratch_operands = 0 : i64, tpu.core_type = #tpu.core_type<tc>, window_params = [{transform_indices = @transform_0, window_bounds = array<i64: 64, 128>}, {transform_indices = @transform_1, window_bounds = array<i64: 128, 128>}, {transform_indices = @transform_2, window_bounds = array<i64: 64, 128>}, {transform_indices = @transform_3, window_bounds = array<i64: 64, 128>}]} {
    %c0 = arith.constant 0 : index
    %c0_0 = arith.constant 0 : index
    %0 = vector.load %arg3[%c0, %c0_0] : memref<64x128xbf16, #tpu.memory_space<vmem>>, vector<64x128xbf16>
    %c0_1 = arith.constant 0 : index
    %c0_2 = arith.constant 0 : index
    %1 = vector.load %arg4[%c0_1, %c0_2] : memref<128x128xbf16, #tpu.memory_space<vmem>>, vector<128x128xbf16>
    %cst = arith.constant dense<0.000000e+00> : vector<64x128xf32>
    %2 = tpu.matmul %0, %1, %cst {dimension_numbers = #tpu.dot_dimension_numbers<[1], [0], [0], [1], [0, 0, 1, 1], [], []>} : vector<64x128xbf16>, vector<128x128xbf16>, vector<64x128xf32> -> vector<64x128xf32>
    %c0_3 = arith.constant 0 : index
    %c0_4 = arith.constant 0 : index
    %3 = vector.load %arg5[%c0_3, %c0_4] : memref<64x128xf32, #tpu.memory_space<vmem>>, vector<64x128xf32>
    %4 = arith.addf %2, %3 : vector<64x128xf32>
    %c0_5 = arith.constant 0 : index
    %c0_6 = arith.constant 0 : index
    %5 = vector.load %arg6[%c0_5, %c0_6] : memref<64x128xf32, #tpu.memory_space<vmem>>, vector<64x128xf32>
    tpu.vector_store %arg6[%c0_5, %c0_6], %4 {strides = array<i32>} : memref<64x128xf32, #tpu.memory_space<vmem>>, vector<64x128xf32>,
    return
  }
  func.func @transform_0(%arg0: i32, %arg1: i32, %arg2: i32) -> (i32, i32) {
    %c0_i32 = arith.constant 0 : i32
    return %arg0, %arg2 : i32, i32
  }
  func.func @transform_1(%arg0: i32, %arg1: i32, %arg2: i32) -> (i32, i32) {
    %c0_i32 = arith.constant 0 : i32
    return %arg2, %arg1 : i32, i32
  }
  func.func @transform_2(%arg0: i32, %arg1: i32, %arg2: i32) -> (i32, i32) {
    %c0_i32 = arith.constant 0 : i32
    return %arg0, %arg1 : i32, i32
  }
  func.func @transform_3(%arg0: i32, %arg1: i32, %arg2: i32) -> (i32, i32) {
    %c0_i32 = arith.constant 0 : i32
    return %arg0, %arg1 : i32, i32
  }
}

module attributes {stable_mosaic.version = 11 : i64} {
  func.func @_matmul_kernel(%arg0: i32, %arg1: i32, %arg2: i32, %arg3: memref<64x128xbf16, #tpu.memory_space<vmem>>, %arg4: memref<128x512xbf16, #tpu.memory_space<vmem>>, %arg5: memref<64x512xbf16, #tpu.memory_space<vmem>>) attributes {dimension_semantics = [#tpu.dimension_semantics<parallel>, #tpu.dimension_semantics<parallel>, #tpu.dimension_semantics<arbitrary>], iteration_bounds = array<i64: 1, 1, 1>, scalar_prefetch = 0 : i64, scratch_operands = 0 : i64, tpu.core_type = #tpu.core_type<tc>, window_params = [{transform_indices = @transform_0, window_bounds = array<i64: 64, 128>}, {transform_indices = @transform_1, window_bounds = array<i64: 128, 512>}, {transform_indices = @transform_2, window_bounds = array<i64: 64, 512>}]} {
    %c0 = arith.constant 0 : index
    %c0_0 = arith.constant 0 : index
    %0 = vector.load %arg3[%c0, %c0_0] : memref<64x128xbf16, #tpu.memory_space<vmem>>, vector<64x128xbf16>
    %c0_1 = arith.constant 0 : index
    %c0_2 = arith.constant 0 : index
    %1 = vector.load %arg4[%c0_1, %c0_2] : memref<128x512xbf16, #tpu.memory_space<vmem>>, vector<128x512xbf16>
    %cst = arith.constant dense<0.000000e+00> : vector<64x512xf32>
    %2 = tpu.matmul %0, %1, %cst {dimension_numbers = #tpu.dot_dimension_numbers<[1], [0], [0], [1], [0, 0, 1, 1], [], []>} : vector<64x128xbf16>, vector<128x512xbf16>, vector<64x512xf32> -> vector<64x512xf32>
    %cst_3 = arith.constant 5.000000e-01 : f32
    %3 = vector.broadcast %cst_3 : f32 to vector<64x512xf32>
    %4 = arith.mulf %3, %2 : vector<64x512xf32>
    %cst_4 = arith.constant 0.707106769 : f32
    %5 = vector.broadcast %cst_4 : f32 to vector<64x512xf32>
    %6 = arith.mulf %2, %5 : vector<64x512xf32>
    %7 = math.erf %6 : vector<64x512xf32>
    %cst_5 = arith.constant 1.000000e+00 : f32
    %8 = vector.broadcast %cst_5 : f32 to vector<64x512xf32>
    %9 = arith.addf %8, %7 : vector<64x512xf32>
    %10 = arith.mulf %4, %9 : vector<64x512xf32>
    %11 = arith.truncf %10 : vector<64x512xf32> to vector<64x512xbf16>
    %c0_6 = arith.constant 0 : index
    %c0_7 = arith.constant 0 : index
    %12 = vector.load %arg5[%c0_6, %c0_7] : memref<64x512xbf16, #tpu.memory_space<vmem>>, vector<64x512xbf16>
    tpu.vector_store %arg5[%c0_6, %c0_7], %11 {strides = array<i32>} : memref<64x512xbf16, #tpu.memory_space<vmem>>, vector<64x512xbf16>,
    return
  }
  func.func @transform_0(%arg0: i32, %arg1: i32, %arg2: i32) -> (i32, i32) {
    %c0_i32 = arith.constant 0 : i32
    return %arg0, %arg2 : i32, i32
  }
  func.func @transform_1(%arg0: i32, %arg1: i32, %arg2: i32) -> (i32, i32) {
    %c0_i32 = arith.constant 0 : i32
    return %arg2, %arg1 : i32, i32
  }
  func.func @transform_2(%arg0: i32, %arg1: i32, %arg2: i32) -> (i32, i32) {
    %c0_i32 = arith.constant 0 : i32
    return %arg0, %arg1 : i32, i32
  }
}

module attributes {stable_mosaic.version = 11 : i64} {
  func.func @_matmul_kernel(%arg0: i32, %arg1: i32, %arg2: i32, %arg3: memref<64x512xbf16, #tpu.memory_space<vmem>>, %arg4: memref<512x128xbf16, #tpu.memory_space<vmem>>, %arg5: memref<64x128xf32, #tpu.memory_space<vmem>>, %arg6: memref<64x128xf32, #tpu.memory_space<vmem>>) attributes {dimension_semantics = [#tpu.dimension_semantics<parallel>, #tpu.dimension_semantics<parallel>, #tpu.dimension_semantics<arbitrary>], iteration_bounds = array<i64: 1, 1, 1>, scalar_prefetch = 0 : i64, scratch_operands = 0 : i64, tpu.core_type = #tpu.core_type<tc>, window_params = [{transform_indices = @transform_0, window_bounds = array<i64: 64, 512>}, {transform_indices = @transform_1, window_bounds = array<i64: 512, 128>}, {transform_indices = @transform_2, window_bounds = array<i64: 64, 128>}, {transform_indices = @transform_3, window_bounds = array<i64: 64, 128>}]} {
    %c0 = arith.constant 0 : index
    %c0_0 = arith.constant 0 : index
    %0 = vector.load %arg3[%c0, %c0_0] : memref<64x512xbf16, #tpu.memory_space<vmem>>, vector<64x512xbf16>
    %c0_1 = arith.constant 0 : index
    %c0_2 = arith.constant 0 : index
    %1 = vector.load %arg4[%c0_1, %c0_2] : memref<512x128xbf16, #tpu.memory_space<vmem>>, vector<512x128xbf16>
    %cst = arith.constant dense<0.000000e+00> : vector<64x128xf32>
    %2 = tpu.matmul %0, %1, %cst {dimension_numbers = #tpu.dot_dimension_numbers<[1], [0], [0], [1], [0, 0, 1, 1], [], []>} : vector<64x512xbf16>, vector<512x128xbf16>, vector<64x128xf32> -> vector<64x128xf32>
    %c0_3 = arith.constant 0 : index
    %c0_4 = arith.constant 0 : index
    %3 = vector.load %arg5[%c0_3, %c0_4] : memref<64x128xf32, #tpu.memory_space<vmem>>, vector<64x128xf32>
    %4 = arith.addf %2, %3 : vector<64x128xf32>
    %c0_5 = arith.constant 0 : index
    %c0_6 = arith.constant 0 : index
    %5 = vector.load %arg6[%c0_5, %c0_6] : memref<64x128xf32, #tpu.memory_space<vmem>>, vector<64x128xf32>
    tpu.vector_store %arg6[%c0_5, %c0_6], %4 {strides = array<i32>} : memref<64x128xf32, #tpu.memory_space<vmem>>, vector<64x128xf32>,
    return
  }
  func.func @transform_0(%arg0: i32, %arg1: i32, %arg2: i32) -> (i32, i32) {
    %c0_i32 = arith.constant 0 : i32
    return %arg0, %arg2 : i32, i32
  }
  func.func @transform_1(%arg0: i32, %arg1: i32, %arg2: i32) -> (i32, i32) {
    %c0_i32 = arith.constant 0 : i32
    return %arg2, %arg1 : i32, i32
  }
  func.func @transform_2(%arg0: i32, %arg1: i32, %arg2: i32) -> (i32, i32) {
    %c0_i32 = arith.constant 0 : i32
    return %arg0, %arg1 : i32, i32
  }
  func.func @transform_3(%arg0: i32, %arg1: i32, %arg2: i32) -> (i32, i32) {
    %c0_i32 = arith.constant 0 : i32
    return %arg0, %arg1 : i32, i32
  }
}

module attributes {stable_mosaic.version = 11 : i64} {
  func.func @_matmul_kernel(%arg0: i32, %arg1: i32, %arg2: i32, %arg3: memref<64x128xbf16, #tpu.memory_space<vmem>>, %arg4: memref<128x128xbf16, #tpu.memory_space<vmem>>, %arg5: memref<1x128xf32, #tpu.memory_space<vmem>>, %arg6: memref<64x128xf32, #tpu.memory_space<vmem>>) attributes {dimension_semantics = [#tpu.dimension_semantics<parallel>, #tpu.dimension_semantics<parallel>, #tpu.dimension_semantics<arbitrary>], iteration_bounds = array<i64: 1, 1, 1>, scalar_prefetch = 0 : i64, scratch_operands = 0 : i64, tpu.core_type = #tpu.core_type<tc>, window_params = [{transform_indices = @transform_0, window_bounds = array<i64: 64, 128>}, {transform_indices = @transform_1, window_bounds = array<i64: 128, 128>}, {transform_indices = @transform_2, window_bounds = array<i64: 1, 128>}, {transform_indices = @transform_3, window_bounds = array<i64: 64, 128>}]} {
    %c0 = arith.constant 0 : index
    %c0_0 = arith.constant 0 : index
    %0 = vector.load %arg3[%c0, %c0_0] : memref<64x128xbf16, #tpu.memory_space<vmem>>, vector<64x128xbf16>
    %c0_1 = arith.constant 0 : index
    %c0_2 = arith.constant 0 : index
    %1 = vector.load %arg4[%c0_1, %c0_2] : memref<128x128xbf16, #tpu.memory_space<vmem>>, vector<128x128xbf16>
    %cst = arith.constant dense<0.000000e+00> : vector<64x128xf32>
    %2 = tpu.matmul %0, %1, %cst {dimension_numbers = #tpu.dot_dimension_numbers<[1], [0], [0], [1], [0, 0, 1, 1], [], []>} : vector<64x128xbf16>, vector<128x128xbf16>, vector<64x128xf32> -> vector<64x128xf32>
    %c0_3 = arith.constant 0 : index
    %c0_4 = arith.constant 0 : index
    %3 = vector.load %arg5[%c0_3, %c0_4] : memref<1x128xf32, #tpu.memory_space<vmem>>, vector<1x128xf32>
    %4 = vector.broadcast %3 : vector<1x128xf32> to vector<64x128xf32>
    %5 = arith.addf %2, %4 : vector<64x128xf32>
    %c0_5 = arith.constant 0 : index
    %c0_6 = arith.constant 0 : index
    %6 = vector.load %arg6[%c0_5, %c0_6] : memref<64x128xf32, #tpu.memory_space<vmem>>, vector<64x128xf32>
    tpu.vector_store %arg6[%c0_5, %c0_6], %5 {strides = array<i32>} : memref<64x128xf32, #tpu.memory_space<vmem>>, vector<64x128xf32>,
    return
  }
  func.func @transform_0(%arg0: i32, %arg1: i32, %arg2: i32) -> (i32, i32) {
    %c0_i32 = arith.constant 0 : i32
    return %arg0, %arg2 : i32, i32
  }
  func.func @transform_1(%arg0: i32, %arg1: i32, %arg2: i32) -> (i32, i32) {
    %c0_i32 = arith.constant 0 : i32
    return %arg2, %arg1 : i32, i32
  }
  func.func @transform_2(%arg0: i32, %arg1: i32, %arg2: i32) -> (i32, i32) {
    %c0_i32 = arith.constant 0 : i32
    %c0_i32_0 = arith.constant 0 : i32
    return %c0_i32, %arg1 : i32, i32
  }
  func.func @transform_3(%arg0: i32, %arg1: i32, %arg2: i32) -> (i32, i32) {
    %c0_i32 = arith.constant 0 : i32
    return %arg0, %arg1 : i32, i32
  }
}

</mosaic_0001>

<llo_original>
// kernel: brainx_forward.22
$region0: #{brainx_forward.22}
  #allocation0 [shape = 'u32[]', space=smem, size = 0x4, offset = 0x4, fixed_abs, tag = 'smem constant byte address 0x4 - core index']
  #allocation1 [shape = 'u32[72,128]{1,0:T(1,128)}', space=vmem, size = 0x9000, scoped, tag = 'internal scratch']
  %s0 = inlined_call_operand.vmem [shape: bf16[8,256], index: 0, kind: input, shape index: {}]
  %s1 = inlined_call_operand.hbm [shape: bf16[256,128], index: 1, kind: input, shape index: {}]
  %s2 = inlined_call_operand.vmem [shape: f32[8,128], index: 2, kind: output, shape index: {}]
  %s3 = sld [smem:[#allocation0]]
  $region22: #{brainx_forward.22} parent=0
    _
  %s5 = ssub.s32 1, %s3
  %s6 = scalar_select 0, %s5, %s3
  $region1: #{brainx_forward.22} parent=0
    #allocation2 [shape = 'u8[65536]{0}', space=vmem, size = 0x10000, scoped, tag = 'input window, operand 1, single buffered']
    #allocation3 [shape = 's32[1]{0}', space=sflag, size = 0x4, scoped, tag = 'scoped memory for brainx_forward.22']
    %7 = vsyncpa [#allocation3], 0
    // Predicated region
    $region2: #{brainx_forward.22} parent=1 // pred_check
      _
    $region3: #{brainx_forward.22} parent=1 // pred_check_branch
      %9 = sbr.rel (0) target = $region5
    $region4: #{brainx_forward.22} parent=1 // pred_region
      _
    $region5: #{brainx_forward.22} parent=1 // pred_fallthru
      _
    // Predicated region
    $region6: #{brainx_forward.22} parent=1 // pred_check
      _
    $region7: #{brainx_forward.22} parent=1 // pred_check_branch
      %11 = sbr.rel (0) target = $region9
    $region8: #{brainx_forward.22} parent=1 // pred_region
      %13 = vsyncadd [#allocation3], 0
      %s14 = sshll.u32 %s1, 4
      %s15 = int_to_ptr.hbm [resolvable:$true] %s14
      %s16 = sshll.u32 [#allocation2], 4
      %s17 = int_to_ptr.vmem [resolvable:$true] %s16
      %22 = dma.hbm_to_vmem [thread:$0]  %s15, 2048, %s17, [#allocation3], 64, 64, 4
    $region9: #{brainx_forward.22} parent=1 // pred_fallthru
      _
    // Predicated region
    $region10: #{brainx_forward.22} parent=1 // pred_check
      _
    $region11: #{brainx_forward.22} parent=1 // pred_check_branch
      %24 = sbr.rel (0) target = $region13
    $region12: #{brainx_forward.22} parent=1 // pred_region
      %26 = dma.done [#allocation3], 2048
    $region13: #{brainx_forward.22} parent=1 // pred_fallthru
      _
    %v27 = vld [vmem:[%s0] sm:$0xff]
    %v28 = vld [vmem:[#allocation2] sm:$0xf]
    %v29 = vld [vmem:[#allocation2 + $0x4] sm:$0xf]
    %v30 = vld [vmem:[#allocation2 + $0x8] sm:$0xf]
    %v31 = vld [vmem:[#allocation2 + $0xc] sm:$0xf]
    %v32 = vld [vmem:[#allocation2 + $0x10] sm:$0xf]
    %v33 = vld [vmem:[#allocation2 + $0x14] sm:$0xf]
    %v34 = vld [vmem:[#allocation2 + $0x18] sm:$0xf]
    %v35 = vld [vmem:[#allocation2 + $0x1c] sm:$0xf]
    %v36 = vld [vmem:[#allocation2 + $0x20] sm:$0xf]
    %v37 = vld [vmem:[#allocation2 + $0x24] sm:$0xf]
    %v38 = vld [vmem:[#allocation2 + $0x28] sm:$0xf]
    %v39 = vld [vmem:[#allocation2 + $0x2c] sm:$0xf]
    %v40 = vld [vmem:[#allocation2 + $0x30] sm:$0xf]
    %v41 = vld [vmem:[#allocation2 + $0x34] sm:$0xf]
    %v42 = vld [vmem:[#allocation2 + $0x38] sm:$0xf]
    %v43 = vld [vmem:[#allocation2 + $0x3c] sm:$0xf]
    %v44 = vld [vmem:[#allocation2 + $0x40] sm:$0xf]
    %v45 = vld [vmem:[#allocation2 + $0x44] sm:$0xf]
    %v46 = vld [vmem:[#allocation2 + $0x48] sm:$0xf]
    %v47 = vld [vmem:[#allocation2 + $0x4c] sm:$0xf]
    %v48 = vld [vmem:[#allocation2 + $0x50] sm:$0xf]
    %v49 = vld [vmem:[#allocation2 + $0x54] sm:$0xf]
    %v50 = vld [vmem:[#allocation2 + $0x58] sm:$0xf]
    %v51 = vld [vmem:[#allocation2 + $0x5c] sm:$0xf]
    %v52 = vld [vmem:[#allocation2 + $0x60] sm:$0xf]
    %v53 = vld [vmem:[#allocation2 + $0x64] sm:$0xf]
    %v54 = vld [vmem:[#allocation2 + $0x68] sm:$0xf]
    %v55 = vld [vmem:[#allocation2 + $0x6c] sm:$0xf]
    %v56 = vld [vmem:[#allocation2 + $0x70] sm:$0xf]
    %v57 = vld [vmem:[#allocation2 + $0x74] sm:$0xf]
    %v58 = vld [vmem:[#allocation2 + $0x78] sm:$0xf]
    %v59 = vld [vmem:[#allocation2 + $0x7c] sm:$0xf]
    %v61 = vunpack.c.l.b16 %v27
    %v62 = vunpack.c.h.b16 %v27
    %v63 = vpack.c.b16 %v61, %v61
    %v64 = vpack.c.b16 %v62, %v62
    %v99 = vunpack.c.l.b16 %v28
    %v100 = vunpack.c.l.b16 %v29
    %v101 = vunpack.c.l.b16 %v30
    %v102 = vunpack.c.l.b16 %v31
    %v103 = vunpack.c.l.b16 %v32
    %v104 = vunpack.c.l.b16 %v33
    %v105 = vunpack.c.l.b16 %v34
    %v106 = vunpack.c.l.b16 %v35
    %v107 = vunpack.c.l.b16 %v36
    %v108 = vunpack.c.l.b16 %v37
    %v109 = vunpack.c.l.b16 %v38
    %v110 = vunpack.c.l.b16 %v39
    %v111 = vunpack.c.l.b16 %v40
    %v112 = vunpack.c.l.b16 %v41
    %v113 = vunpack.c.l.b16 %v42
    %v114 = vunpack.c.l.b16 %v43
    %v115 = vunpack.c.l.b16 %v44
    %v116 = vunpack.c.l.b16 %v45
    %v117 = vunpack.c.l.b16 %v46
    %v118 = vunpack.c.l.b16 %v47
    %v119 = vunpack.c.l.b16 %v48
    %v120 = vunpack.c.l.b16 %v49
    %v121 = vunpack.c.l.b16 %v50
    %v122 = vunpack.c.l.b16 %v51
    %v123 = vunpack.c.l.b16 %v52
    %v124 = vunpack.c.l.b16 %v53
    %v125 = vunpack.c.l.b16 %v54
    %v126 = vunpack.c.l.b16 %v55
    %v127 = vunpack.c.l.b16 %v56
    %v128 = vunpack.c.l.b16 %v57
    %v129 = vunpack.c.l.b16 %v58
    %v130 = vunpack.c.l.b16 %v59
    %v131 = vpack.c.b16 %v100, %v99
    %v132 = vpack.c.b16 %v102, %v101
    %v133 = vpack.c.b16 %v104, %v103
    %v134 = vpack.c.b16 %v106, %v105
    %v135 = vpack.c.b16 %v108, %v107
    %v136 = vpack.c.b16 %v110, %v109
    %v137 = vpack.c.b16 %v112, %v111
    %v138 = vpack.c.b16 %v114, %v113
    %v139 = vpack.c.b16 %v116, %v115
    %v140 = vpack.c.b16 %v118, %v117
    %v141 = vpack.c.b16 %v120, %v119
    %v142 = vpack.c.b16 %v122, %v121
    %v143 = vpack.c.b16 %v124, %v123
    %v144 = vpack.c.b16 %v126, %v125
    %v145 = vpack.c.b16 %v128, %v127
    %v146 = vpack.c.b16 %v130, %v129
    %163 = vmatpush.bf16.msra.mxu0 %v138
    %164 = vmatpush.bf16.msra.mxu0 %v137
    %165 = vmatpush.bf16.msra.mxu0 %v136
    %166 = vmatpush.bf16.msra.mxu0 %v135
    %167 = vmatpush.bf16.msra.mxu0 %v134
    %168 = vmatpush.bf16.msra.mxu0 %v133
    %169 = vmatpush.bf16.msra.mxu0 %v132
    %170 = vmatpush.bf16.msra.mxu0 %v131
    %171 = vmatmul.bf16.gmra.mxu0 %v63
    %v172 = vpop.f32.mrf.mxu0
    %v173 = vadd.f32 0.0, %v172
    %v174 = vpop.f32.mrf.mxu0
    %175 = vdwg.mxu0
    %176 = vmatpush.bf16.msra.mxu0 %v146
    %177 = vmatpush.bf16.msra.mxu0 %v145
    %178 = vmatpush.bf16.msra.mxu0 %v144
    %179 = vmatpush.bf16.msra.mxu0 %v143
    %180 = vmatpush.bf16.msra.mxu0 %v142
    %181 = vmatpush.bf16.msra.mxu0 %v141
    %182 = vmatpush.bf16.msra.mxu0 %v140
    %183 = vmatpush.bf16.msra.mxu0 %v139
    %184 = vmatmul.bf16.gmra.mxu0 %v64
    %v185 = vpop.f32.mrf.mxu0
    %v186 = vadd.f32 %v173, %v185
    %v187 = vpop.f32.mrf.mxu0
    %188 = vdwg.mxu0
    %189 = vst [vmem:[%s2] sm:$0xff] %v186
    // Predicated region
    $region14: #{brainx_forward.22} parent=1 // pred_check
      _
    $region15: #{brainx_forward.22} parent=1 // pred_check_branch
      %191 = sbr.rel (0) target = $region17
    $region16: #{brainx_forward.22} parent=1 // pred_region
      _
    $region17: #{brainx_forward.22} parent=1 // pred_fallthru
      _
    // Predicated region
    $region18: #{brainx_forward.22} parent=1 // pred_check
      _
    $region19: #{brainx_forward.22} parent=1 // pred_check_branch
      %193 = sbr.rel (0) target = $region21
    $region20: #{brainx_forward.22} parent=1 // pred_region
      _
    $region21: #{brainx_forward.22} parent=1 // pred_fallthru
      _
    %194 = vsyncpa [#allocation3], 1

// kernel: brainx_forward.25
$region0: #{brainx_forward.25}
  #allocation0 [shape = 'u32[]', space=smem, size = 0x4, offset = 0x4, fixed_abs, tag = 'smem constant byte address 0x4 - core index']
  #allocation1 [shape = 'u32[72,128]{1,0:T(1,128)}', space=vmem, size = 0x9000, scoped, tag = 'internal scratch']
  %s0 = inlined_call_operand.vmem [shape: f32[64,128], index: 0, kind: input, shape index: {}]
  %s1 = inlined_call_operand.vmem [shape: f32[1,128], index: 1, kind: input, shape index: {}]
  %s2 = inlined_call_operand.vmem [shape: f32[1,128], index: 2, kind: input, shape index: {}]
  %s3 = inlined_call_operand.vmem [shape: bf16[64,128], index: 3, kind: output, shape index: {}]
  %s4 = sld [smem:[#allocation0]]
  $region22: #{brainx_forward.25} parent=0
    _
  %s6 = ssub.s32 1, %s4
  %s7 = scalar_select 0, %s6, %s4
  // Predicated region
  $region2: #{brainx_forward.25} parent=0 // pred_check
    _
  $region3: #{brainx_forward.25} parent=0 // pred_check_branch
    %9 = sbr.rel (0) target = $region5
  $region4: #{brainx_forward.25} parent=0 // pred_region
    _
  $region5: #{brainx_forward.25} parent=0 // pred_fallthru
    _
  // Predicated region
  $region6: #{brainx_forward.25} parent=0 // pred_check
    _
  $region7: #{brainx_forward.25} parent=0 // pred_check_branch
    %11 = sbr.rel (0) target = $region9
  $region8: #{brainx_forward.25} parent=0 // pred_region
    _
  $region9: #{brainx_forward.25} parent=0 // pred_fallthru
    _
  // Predicated region
  $region10: #{brainx_forward.25} parent=0 // pred_check
    _
  $region11: #{brainx_forward.25} parent=0 // pred_check_branch
    %13 = sbr.rel (0) target = $region13
  $region12: #{brainx_forward.25} parent=0 // pred_region
    _
  $region13: #{brainx_forward.25} parent=0 // pred_fallthru
    _
  %v14 = vld [vmem:[%s0] sm:$0xff]
  %v15 = vld [vmem:[%s0 + $0x8] sm:$0xff]
  %v16 = vld [vmem:[%s0 + $0x10] sm:$0xff]
  %v17 = vld [vmem:[%s0 + $0x18] sm:$0xff]
  %v18 = vld [vmem:[%s0 + $0x20] sm:$0xff]
  %v19 = vld [vmem:[%s0 + $0x28] sm:$0xff]
  %v20 = vld [vmem:[%s0 + $0x30] sm:$0xff]
  %v21 = vld [vmem:[%s0 + $0x38] sm:$0xff]
  %22 = vadd.xlane.f32.xlu0 %v14
  %v23 = vpop.xlane.xlu0 %22
  %24 = vadd.xlane.f32.xlu0 %v15
  %v25 = vpop.xlane.xlu0 %24
  %26 = vadd.xlane.f32.xlu0 %v16
  %v27 = vpop.xlane.xlu0 %26
  %28 = vadd.xlane.f32.xlu0 %v17
  %v29 = vpop.xlane.xlu0 %28
  %30 = vadd.xlane.f32.xlu0 %v18
  %v31 = vpop.xlane.xlu0 %30
  %32 = vadd.xlane.f32.xlu0 %v19
  %v33 = vpop.xlane.xlu0 %32
  %34 = vadd.xlane.f32.xlu0 %v20
  %v35 = vpop.xlane.xlu0 %34
  %36 = vadd.xlane.f32.xlu0 %v21
  %v37 = vpop.xlane.xlu0 %36
  %v38 = vrcp.pop 128.0
  %v39 = vmul.f32 128.0, %v38
  %v40 = vsub.f32 1.0, %v39
  %v41 = vmul.f32 %v38, %v40
  %v42 = vadd.f32 %v38, %v41
  %vm43 = vweird.f32 %v38
  %v44 = vsel %vm43, %v38, %v42
  %v45 = vmul.f32 %v23, %v44
  %v46 = vmul.f32 %v25, %v44
  %v47 = vmul.f32 %v27, %v44
  %v48 = vmul.f32 %v29, %v44
  %v49 = vmul.f32 %v31, %v44
  %v50 = vmul.f32 %v33, %v44
  %v51 = vmul.f32 %v35, %v44
  %v52 = vmul.f32 %v37, %v44
  %v53 = vsub.f32 %v14, %v45
  %v54 = vsub.f32 %v15, %v46
  %v55 = vsub.f32 %v16, %v47
  %v56 = vsub.f32 %v17, %v48
  %v57 = vsub.f32 %v18, %v49
  %v58 = vsub.f32 %v19, %v50
  %v59 = vsub.f32 %v20, %v51
  %v60 = vsub.f32 %v21, %v52
  %v61 = vmul.f32 %v53, %v53
  %v62 = vmul.f32 %v54, %v54
  %v63 = vmul.f32 %v55, %v55
  %v64 = vmul.f32 %v56, %v56
  %v65 = vmul.f32 %v57, %v57
  %v66 = vmul.f32 %v58, %v58
  %v67 = vmul.f32 %v59, %v59
  %v68 = vmul.f32 %v60, %v60
  %69 = vadd.xlane.f32.xlu0 %v61
  %v70 = vpop.xlane.xlu0 %69
  %71 = vadd.xlane.f32.xlu0 %v62
  %v72 = vpop.xlane.xlu0 %71
  %73 = vadd.xlane.f32.xlu0 %v63
  %v74 = vpop.xlane.xlu0 %73
  %75 = vadd.xlane.f32.xlu0 %v64
  %v76 = vpop.xlane.xlu0 %75
  %77 = vadd.xlane.f32.xlu0 %v65
  %v78 = vpop.xlane.xlu0 %77
  %79 = vadd.xlane.f32.xlu0 %v66
  %v80 = vpop.xlane.xlu0 %79
  %81 = vadd.xlane.f32.xlu0 %v67
  %v82 = vpop.xlane.xlu0 %81
  %83 = vadd.xlane.f32.xlu0 %v68
  %v84 = vpop.xlane.xlu0 %83
  %v85 = vmul.f32 %v70, %v44
  %v86 = vmul.f32 %v72, %v44
  %v87 = vmul.f32 %v74, %v44
  %v88 = vmul.f32 %v76, %v44
  %v89 = vmul.f32 %v78, %v44
  %v90 = vmul.f32 %v80, %v44
  %v91 = vmul.f32 %v82, %v44
  %v92 = vmul.f32 %v84, %v44
  %v93 = vadd.f32 %v85, 1e-05
  %v94 = vadd.f32 %v86, 1e-05
  %v95 = vadd.f32 %v87, 1e-05
  %v96 = vadd.f32 %v88, 1e-05
  %v97 = vadd.f32 %v89, 1e-05
  %v98 = vadd.f32 %v90, 1e-05
  %v99 = vadd.f32 %v91, 1e-05
  %v100 = vadd.f32 %v92, 1e-05
  %v101 = vrsqrt.pop %v93
  %v102 = vmul.f32 %v101, %v93
  %v103 = vmul.f32 %v102, %v101
  %v104 = vmul.f32 0.5, %v103
  %v105 = vsub.f32 1.5, %v104
  %v106 = vmul.f32 %v101, %v105
  %vm107 = vweird.f32 %v93
  %vm108 = vweird.f32 %v101
  %vm109 = vmor %vm107, %vm108
  %v110 = vsel %vm109, %v101, %v106
  %v111 = vrsqrt.pop %v94
  %v112 = vmul.f32 %v111, %v94
  %v113 = vmul.f32 %v112, %v111
  %v114 = vmul.f32 0.5, %v113
  %v115 = vsub.f32 1.5, %v114
  %v116 = vmul.f32 %v111, %v115
  %vm117 = vweird.f32 %v94
  %vm118 = vweird.f32 %v111
  %vm119 = vmor %vm117, %vm118
  %v120 = vsel %vm119, %v111, %v116
  %v121 = vrsqrt.pop %v95
  %v122 = vmul.f32 %v121, %v95
  %v123 = vmul.f32 %v122, %v121
  %v124 = vmul.f32 0.5, %v123
  %v125 = vsub.f32 1.5, %v124
  %v126 = vmul.f32 %v121, %v125
  %vm127 = vweird.f32 %v95
  %vm128 = vweird.f32 %v121
  %vm129 = vmor %vm127, %vm128
  %v130 = vsel %vm129, %v121, %v126
  %v131 = vrsqrt.pop %v96
  %v132 = vmul.f32 %v131, %v96
  %v133 = vmul.f32 %v132, %v131
  %v134 = vmul.f32 0.5, %v133
  %v135 = vsub.f32 1.5, %v134
  %v136 = vmul.f32 %v131, %v135
  %vm137 = vweird.f32 %v96
  %vm138 = vweird.f32 %v131
  %vm139 = vmor %vm137, %vm138
  %v140 = vsel %vm139, %v131, %v136
  %v141 = vrsqrt.pop %v97
  %v142 = vmul.f32 %v141, %v97
  %v143 = vmul.f32 %v142, %v141
  %v144 = vmul.f32 0.5, %v143
  %v145 = vsub.f32 1.5, %v144
  %v146 = vmul.f32 %v141, %v145
  %vm147 = vweird.f32 %v97
  %vm148 = vweird.f32 %v141
  %vm149 = vmor %vm147, %vm148
  %v150 = vsel %vm149, %v141, %v146
  %v151 = vrsqrt.pop %v98
  %v152 = vmul.f32 %v151, %v98
  %v153 = vmul.f32 %v152, %v151
  %v154 = vmul.f32 0.5, %v153
  %v155 = vsub.f32 1.5, %v154
  %v156 = vmul.f32 %v151, %v155
  %vm157 = vweird.f32 %v98
  %vm158 = vweird.f32 %v151
  %vm159 = vmor %vm157, %vm158
  %v160 = vsel %vm159, %v151, %v156
  %v161 = vrsqrt.pop %v99
  %v162 = vmul.f32 %v161, %v99
  %v163 = vmul.f32 %v162, %v161
  %v164 = vmul.f32 0.5, %v163
  %v165 = vsub.f32 1.5, %v164
  %v166 = vmul.f32 %v161, %v165
  %vm167 = vweird.f32 %v99
  %vm168 = vweird.f32 %v161
  %vm169 = vmor %vm167, %vm168
  %v170 = vsel %vm169, %v161, %v166
  %v171 = vrsqrt.pop %v100
  %v172 = vmul.f32 %v171, %v100
  %v173 = vmul.f32 %v172, %v171
  %v174 = vmul.f32 0.5, %v173
  %v175 = vsub.f32 1.5, %v174
  %v176 = vmul.f32 %v171, %v175
  %vm177 = vweird.f32 %v100
  %vm178 = vweird.f32 %v171
  %vm179 = vmor %vm177, %vm178
  %v180 = vsel %vm179, %v171, %v176
  %v181 = vmul.f32 %v53, %v110
  %v182 = vmul.f32 %v54, %v120
  %v183 = vmul.f32 %v55, %v130
  %v184 = vmul.f32 %v56, %v140
  %v185 = vmul.f32 %v57, %v150
  %v186 = vmul.f32 %v58, %v160
  %v187 = vmul.f32 %v59, %v170
  %v188 = vmul.f32 %v60, %v180
  %v189 = vld [vmem:[%s1] sm:$0x1]
  %v191 = vperm.slane %v189, 0
  %v193 = vmul.f32 %v181, %v191
  %v194 = vmul.f32 %v182, %v191
  %v195 = vmul.f32 %v183, %v191
  %v196 = vmul.f32 %v184, %v191
  %v197 = vmul.f32 %v185, %v191
  %v198 = vmul.f32 %v186, %v191
  %v199 = vmul.f32 %v187, %v191
  %v200 = vmul.f32 %v188, %v191
  %v201 = vld [vmem:[%s2] sm:$0x1]
  %v203 = vperm.slane %v201, 0
  %v205 = vadd.f32 %v193, %v203
  %v206 = vadd.f32 %v194, %v203
  %v207 = vadd.f32 %v195, %v203
  %v208 = vadd.f32 %v196, %v203
  %v209 = vadd.f32 %v197, %v203
  %v210 = vadd.f32 %v198, %v203
  %v211 = vadd.f32 %v199, %v203
  %v212 = vadd.f32 %v200, %v203
  %v213 = vpack.c.bf16 %v205, %v205
  %v214 = vpack.c.bf16 %v206, %v206
  %v215 = vpack.c.bf16 %v207, %v207
  %v216 = vpack.c.bf16 %v208, %v208
  %v217 = vpack.c.bf16 %v209, %v209
  %v218 = vpack.c.bf16 %v210, %v210
  %v219 = vpack.c.bf16 %v211, %v211
  %v220 = vpack.c.bf16 %v212, %v212
  %221 = vst [vmem:[%s3] sm:$0xf] %v213
  %222 = vst [vmem:[%s3 + $0x4] sm:$0xf] %v214
  %223 = vst [vmem:[%s3 + $0x8] sm:$0xf] %v215
  %224 = vst [vmem:[%s3 + $0xc] sm:$0xf] %v216
  %225 = vst [vmem:[%s3 + $0x10] sm:$0xf] %v217
  %226 = vst [vmem:[%s3 + $0x14] sm:$0xf] %v218
  %227 = vst [vmem:[%s3 + $0x18] sm:$0xf] %v219
  %228 = vst [vmem:[%s3 + $0x1c] sm:$0xf] %v220
  // Predicated region
  $region14: #{brainx_forward.25} parent=0 // pred_check
    _
  $region15: #{brainx_forward.25} parent=0 // pred_check_branch
    %230 = sbr.rel (0) target = $region17
  $region16: #{brainx_forward.25} parent=0 // pred_region
    _
  $region17: #{brainx_forward.25} parent=0 // pred_fallthru
    _
  // Predicated region
  $region18: #{brainx_forward.25} parent=0 // pred_check
    _
  $region19: #{brainx_forward.25} parent=0 // pred_check_branch
    %232 = sbr.rel (0) target = $region21
  $region20: #{brainx_forward.25} parent=0 // pred_region
    _
  $region21: #{brainx_forward.25} parent=0 // pred_fallthru
    _

// kernel: brainx_forward.23
$region0: #{brainx_forward.23}
  #allocation0 [shape = 'u32[]', space=smem, size = 0x4, offset = 0x4, fixed_abs, tag = 'smem constant byte address 0x4 - core index']
  #allocation1 [shape = 'u32[72,128]{1,0:T(1,128)}', space=vmem, size = 0x9000, scoped, tag = 'internal scratch']
  %s0 = inlined_call_operand.vmem [shape: f32[2,1,128], index: 0, kind: input, shape index: {}]
  %s1 = inlined_call_operand.vmem [shape: f32[32,1], index: 1, kind: input, shape index: {}]
  %s2 = inlined_call_operand.hbm [shape: f32[32,128], index: 2, kind: input, shape index: {}]
  %s3 = inlined_call_operand.vmem [shape: f32[1,128], index: 3, kind: input, shape index: {}]
  %s4 = inlined_call_operand.vmem [shape: f32[1,128], index: 4, kind: input, shape index: {}]
  %s5 = inlined_call_operand.vmem [shape: f32[1,128], index: 5, kind: input, shape index: {}]
  %s6 = inlined_call_operand.vmem [shape: bf16[2,32,128], index: 6, kind: output, shape index: {}]
  %s7 = sld [smem:[#allocation0]]
  $region61: #{brainx_forward.23} parent=0
    _
  %s9 = ssub.s32 1, %s7
  %s10 = scalar_select 0, %s9, %s7
  $region1: #{brainx_forward.23} parent=0
    #allocation2 [shape = 'u8[16384]{0}', space=vmem, size = 0x4000, scoped, tag = 'input window, operand 2, single buffered']
    #allocation3 [shape = 's32[2]{0}', space=sflag, size = 0x8, scoped, tag = 'scoped memory for brainx_forward.23']
    %11 = vsyncpa [#allocation3], 0
    loop: start=0, step=1, limit=4
    $region2: #{brainx_forward.23} parent=1 // loop_pre_header
      _
    $region3: #{brainx_forward.23} parent=1 // loop_header
      %s13 = sphi 0, %s17
      %p14 = scmp.ge.s32.totalorder %s13, 4
      %s23 = sphi 0, %s25
      %s26 = sphi 0, %s23
      %s27 = sphi 0, %s26
      %s43 = sphi 0, %s27
      %s47 = sphi 0, %s47
      %s49 = sphi 0, %s47
      %s50 = sphi 0, %s49
      %s64 = sphi 0, %s50
      %s68 = sphi 0, %s68
      %s70 = sphi 0, %s68
      %s71 = sphi 0, %s70
      %s85 = sphi 0, %s71
      %s89 = sphi 0, %s89
      %s91 = sphi 0, %s89
      %s92 = sphi 0, %s91
      %s106 = sphi 0, %s92
      %s110 = sphi 0, %s110
      %s112 = sphi 0, %s110
      %s113 = sphi 0, %s112
      %s127 = sphi 0, %s113
      %s131 = sphi 0, %s131
      %s133 = sphi 0, %s131
      %s134 = sphi 0, %s133
      %s148 = sphi 0, %s134
      %s154 = sphi 0, %s156
      %s157 = sphi 0, %s154
      %s158 = sphi 0, %s157
      %s174 = sphi 0, %s158
    $region4: #{brainx_forward.23} parent=1 // loop_header_branch
      %16 = sbr.rel (%p14) target = $region8
    $region5: #{brainx_forward.23} parent=1 // loop_body
      %s18 = ssub.s32 %s13, 1
      %s19 = ssub.s32 %s13, 2
      %s20 = sadd.s32 %s13, 1
      %s21 = ssub.s32 %s13, %s20
      %p22 = scmp.eq.s32.totalorder %s21, 0
      %s24 = sadd.s32 %s23, 1
      %s25 = scalar_select %p22, %s23, %s24
      %p28 = pneg %p22
      %p29 = scmp.eq.s32.totalorder %s13, 1
      %p30 = por %p28, %p29
      %p31 = scmp.ne.s32.totalorder %s23, %s26
      %p32 = scmp.eq.s32.totalorder %s13, 0
      %p33 = por %p31, %p32
      %p34 = scmp.ne.s32.totalorder %s23, %s26
      %p35 = scmp.eq.s32.totalorder %s18, 1
      %p36 = por %p34, %p35
      %p37 = scmp.ne.s32.totalorder %s26, %s27
      %p38 = scmp.eq.s32.totalorder %s18, 0
      %p39 = por %p37, %p38
      %p40 = scmp.ne.s32.totalorder %s26, %s27
      %p41 = scmp.eq.s32.totalorder %s19, 1
      %p42 = por %p40, %p41
      %p44 = scmp.ne.s32.totalorder %s27, %s43
      %p45 = scmp.eq.s32.totalorder %s19, 0
      %p46 = por %p44, %p45
      %s48 = sadd.s32 %s47, 1
      %p51 = scmp.eq.s32.totalorder %s13, 1
      %p52 = scmp.ne.s32.totalorder %s47, %s49
      %p53 = scmp.eq.s32.totalorder %s13, 0
      %p54 = por %p52, %p53
      %p55 = scmp.ne.s32.totalorder %s47, %s49
      %p56 = scmp.eq.s32.totalorder %s18, 1
      %p57 = por %p55, %p56
      %p58 = scmp.ne.s32.totalorder %s49, %s50
      %p59 = scmp.eq.s32.totalorder %s18, 0
      %p60 = por %p58, %p59
      %p61 = scmp.ne.s32.totalorder %s49, %s50
      %p62 = scmp.eq.s32.totalorder %s19, 1
      %p63 = por %p61, %p62
      %p65 = scmp.ne.s32.totalorder %s50, %s64
      %p66 = scmp.eq.s32.totalorder %s19, 0
      %p67 = por %p65, %p66
      %s69 = sadd.s32 %s68, 1
      %p72 = scmp.eq.s32.totalorder %s13, 1
      %p73 = scmp.ne.s32.totalorder %s68, %s70
      %p74 = scmp.eq.s32.totalorder %s13, 0
      %p75 = por %p73, %p74
      %p76 = scmp.ne.s32.totalorder %s68, %s70
      %p77 = scmp.eq.s32.totalorder %s18, 1
      %p78 = por %p76, %p77
      %p79 = scmp.ne.s32.totalorder %s70, %s71
      %p80 = scmp.eq.s32.totalorder %s18, 0
      %p81 = por %p79, %p80
      %p82 = scmp.ne.s32.totalorder %s70, %s71
      %p83 = scmp.eq.s32.totalorder %s19, 1
      %p84 = por %p82, %p83
      %p86 = scmp.ne.s32.totalorder %s71, %s85
      %p87 = scmp.eq.s32.totalorder %s19, 0
      %p88 = por %p86, %p87
      %s90 = sadd.s32 %s89, 1
      %p93 = scmp.eq.s32.totalorder %s13, 1
      %p94 = scmp.ne.s32.totalorder %s89, %s91
      %p95 = scmp.eq.s32.totalorder %s13, 0
      %p96 = por %p94, %p95
      %p97 = scmp.ne.s32.totalorder %s89, %s91
      %p98 = scmp.eq.s32.totalorder %s18, 1
      %p99 = por %p97, %p98
      %p100 = scmp.ne.s32.totalorder %s91, %s92
      %p101 = scmp.eq.s32.totalorder %s18, 0
      %p102 = por %p100, %p101
      %p103 = scmp.ne.s32.totalorder %s91, %s92
      %p104 = scmp.eq.s32.totalorder %s19, 1
      %p105 = por %p103, %p104
      %p107 = scmp.ne.s32.totalorder %s92, %s106
      %p108 = scmp.eq.s32.totalorder %s19, 0
      %p109 = por %p107, %p108
      %s111 = sadd.s32 %s110, 1
      %p114 = scmp.eq.s32.totalorder %s13, 1
      %p115 = scmp.ne.s32.totalorder %s110, %s112
      %p116 = scmp.eq.s32.totalorder %s13, 0
      %p117 = por %p115, %p116
      %p118 = scmp.ne.s32.totalorder %s110, %s112
      %p119 = scmp.eq.s32.totalorder %s18, 1
      %p120 = por %p118, %p119
      %p121 = scmp.ne.s32.totalorder %s112, %s113
      %p122 = scmp.eq.s32.totalorder %s18, 0
      %p123 = por %p121, %p122
      %p124 = scmp.ne.s32.totalorder %s112, %s113
      %p125 = scmp.eq.s32.totalorder %s19, 1
      %p126 = por %p124, %p125
      %p128 = scmp.ne.s32.totalorder %s113, %s127
      %p129 = scmp.eq.s32.totalorder %s19, 0
      %p130 = por %p128, %p129
      %s132 = sadd.s32 %s131, 1
      %p135 = scmp.eq.s32.totalorder %s13, 1
      %p136 = scmp.ne.s32.totalorder %s131, %s133
      %p137 = scmp.eq.s32.totalorder %s13, 0
      %p138 = por %p136, %p137
      %p139 = scmp.ne.s32.totalorder %s131, %s133
      %p140 = scmp.eq.s32.totalorder %s18, 1
      %p141 = por %p139, %p140
      %p142 = scmp.ne.s32.totalorder %s133, %s134
      %p143 = scmp.eq.s32.totalorder %s18, 0
      %p144 = por %p142, %p143
      %p145 = scmp.ne.s32.totalorder %s133, %s134
      %p146 = scmp.eq.s32.totalorder %s19, 1
      %p147 = por %p145, %p146
      %p149 = scmp.ne.s32.totalorder %s134, %s148
      %p150 = scmp.eq.s32.totalorder %s19, 0
      %p151 = por %p149, %p150
      %s152 = ssub.s32 %s13, %s20
      %p153 = scmp.eq.s32.totalorder %s152, 0
      %s155 = sadd.s32 %s154, 1
      %s156 = scalar_select %p153, %s154, %s155
      %p159 = pneg %p153
      %p160 = scmp.eq.s32.totalorder %s13, 1
      %p161 = por %p159, %p160
      %p162 = scmp.ne.s32.totalorder %s154, %s157
      %p163 = scmp.eq.s32.totalorder %s13, 0
      %p164 = por %p162, %p163
      %p165 = scmp.ne.s32.totalorder %s154, %s157
      %p166 = scmp.eq.s32.totalorder %s18, 1
      %p167 = por %p165, %p166
      %p168 = scmp.ne.s32.totalorder %s157, %s158
      %p169 = scmp.eq.s32.totalorder %s18, 0
      %p170 = por %p168, %p169
      %p171 = scmp.ne.s32.totalorder %s157, %s158
      %p172 = scmp.eq.s32.totalorder %s19, 1
      %p173 = por %p171, %p172
      %p175 = scmp.ne.s32.totalorder %s158, %s174
      %p176 = scmp.eq.s32.totalorder %s19, 0
      %p177 = por %p175, %p176
      %p178 = scmp.le.s32.totalorder 1, %s13
      %p179 = scmp.lt.s32.totalorder %s13, 3
      %p180 = pnand %p178, %p179
      %p181 = pneg %p180
      // Predicated region
      $region9: #{brainx_forward.23} parent=5 // pred_check
        _
      $region10: #{brainx_forward.23} parent=5 // pred_check_branch
        %183 = sbr.rel (%p180) target = $region12
      $region11: #{brainx_forward.23} parent=5 // pred_region
        %s184 = ssub.s32 %s13, 1
        // Predicated region
        $region13: #{brainx_forward.23} parent=11 // pred_check
          %p185 = pneg %p60
        $region14: #{brainx_forward.23} parent=11 // pred_check_branch
          %187 = sbr.rel (%p185) target = $region16
        $region15: #{brainx_forward.23} parent=11 // pred_region
          _
        $region16: #{brainx_forward.23} parent=11 // pred_fallthru
          _
        // Predicated region
        $region17: #{brainx_forward.23} parent=11 // pred_check
          %p188 = pneg %p81
        $region18: #{brainx_forward.23} parent=11 // pred_check_branch
          %190 = sbr.rel (%p188) target = $region20
        $region19: #{brainx_forward.23} parent=11 // pred_region
          %192 = vsyncadd [#allocation3], 0
          %s193 = sshll.u32 %s2, 4
          %s194 = int_to_ptr.hbm [resolvable:$true] %s193
          %s195 = sshll.u32 [#allocation2], 4
          %s196 = int_to_ptr.vmem [resolvable:$true] %s195
          %201 = dma.hbm_to_vmem [thread:$0]  %s194, 512, %s196, [#allocation3], 128, 128, 8
        $region20: #{brainx_forward.23} parent=11 // pred_fallthru
          _
        // Predicated region
        $region21: #{brainx_forward.23} parent=11 // pred_check
          %p202 = pneg %p102
        $region22: #{brainx_forward.23} parent=11 // pred_check_branch
          %204 = sbr.rel (%p202) target = $region24
        $region23: #{brainx_forward.23} parent=11 // pred_region
          _
        $region24: #{brainx_forward.23} parent=11 // pred_fallthru
          _
        // Predicated region
        $region25: #{brainx_forward.23} parent=11 // pred_check
          %p205 = pneg %p123
        $region26: #{brainx_forward.23} parent=11 // pred_check_branch
          %207 = sbr.rel (%p205) target = $region28
        $region27: #{brainx_forward.23} parent=11 // pred_region
          _
        $region28: #{brainx_forward.23} parent=11 // pred_fallthru
          _
        // Predicated region
        $region29: #{brainx_forward.23} parent=11 // pred_check
          %p208 = pneg %p144
        $region30: #{brainx_forward.23} parent=11 // pred_check_branch
          %210 = sbr.rel (%p208) target = $region32
        $region31: #{brainx_forward.23} parent=11 // pred_region
          _
        $region32: #{brainx_forward.23} parent=11 // pred_fallthru
          _
      $region12: #{brainx_forward.23} parent=5 // pred_fallthru
        _
      %p211 = scmp.lt.s32.totalorder %s13, 2
      // Predicated region
      $region33: #{brainx_forward.23} parent=5 // pred_check
        %p212 = pneg %p211
      $region34: #{brainx_forward.23} parent=5 // pred_check_branch
        %214 = sbr.rel (%p212) target = $region36
      $region35: #{brainx_forward.23} parent=5 // pred_region
        // Predicated region
        $region37: #{brainx_forward.23} parent=35 // pred_check
          %p215 = pneg %p33
        $region38: #{brainx_forward.23} parent=35 // pred_check_branch
          %217 = sbr.rel (%p215) target = $region40
        $region39: #{brainx_forward.23} parent=35 // pred_region
          %p218 = scmp.lt.s32.totalorder %s13, 1
          %s219 = scalar_select %p218, %s13, 1
          %s220 = scalar_lea.vmem %s0, %s219
        $region40: #{brainx_forward.23} parent=35 // pred_fallthru
          _
      $region36: #{brainx_forward.23} parent=5 // pred_fallthru
        _
      %p221 = scmp.le.s32.totalorder 1, %s13
      %p222 = scmp.lt.s32.totalorder %s13, 3
      %p223 = pnand %p221, %p222
      %p224 = pneg %p223
      // Predicated region
      $region41: #{brainx_forward.23} parent=5 // pred_check
        _
      $region42: #{brainx_forward.23} parent=5 // pred_check_branch
        %226 = sbr.rel (%p223) target = $region44
      $region43: #{brainx_forward.23} parent=5 // pred_region
        %s227 = ssub.s32 %s13, 1
        // Predicated region
        $region45: #{brainx_forward.23} parent=43 // pred_check
          %p228 = pneg %p81
        $region46: #{brainx_forward.23} parent=43 // pred_check_branch
          %230 = sbr.rel (%p228) target = $region48
        $region47: #{brainx_forward.23} parent=43 // pred_region
          %232 = dma.done [#allocation3], 512
        $region48: #{brainx_forward.23} parent=43 // pred_fallthru
          _
        %p233 = scmp.lt.s32.totalorder %s18, 1
        %s234 = scalar_select %p233, %s18, 1
        %s235 = scalar_lea.vmem %s0, %s234
        %p236 = pneg %p39
        %p237 = pneg %p36
        %p238 = pneg %p60
        %p239 = pneg %p57
        %p240 = pneg %p81
        %p241 = pneg %p78
        %p242 = pneg %p102
        %p243 = pneg %p99
        %p244 = pneg %p123
        %p245 = pneg %p120
        %p246 = pneg %p144
        %p247 = pneg %p141
        %p248 = pneg %p170
        %p249 = pneg %p167
        %p250 = scmp.lt.s32.totalorder %s18, 1
        %s251 = scalar_select %p250, %s18, 1
        %s252 = smul.addr %s251, 4
        %s253 = smul.addr %s252, 4
        %s254 = scalar_lea.vmem %s6, %s253
        %p255 = scmp.lt.s32.totalorder %s18, 1
        %s256 = scalar_select %p255, %s18, 1
        %s257 = scalar_lea.vmem %s0, %s256
        %p258 = scmp.lt.s32.totalorder %s18, 1
        %s259 = scalar_select %p258, %s18, 1
        %s260 = smul.addr %s259, 4
        %s261 = smul.addr %s260, 4
        %s262 = scalar_lea.vmem %s6, %s261
        %v263 = vld [vmem:[%s257] sm:$0x1]
        %v264 = vld [vmem:[%s1] sm:$0xff]
        %v265 = vld [vmem:[%s1 + $0x8] sm:$0xff]
        %v266 = vld [vmem:[%s1 + $0x10] sm:$0xff]
        %v267 = vld [vmem:[%s1 + $0x18] sm:$0xff]
        %269 = vset.pattern.permute.xlu0 0
        %270 = vperm.xlu0 %269, %v264
        %v271 = vpop.permute.xlu0 %270
        %274 = vset.pattern.permute.xlu0 0
        %275 = vperm.xlu0 %274, %v265
        %v276 = vpop.permute.xlu0 %275
        %279 = vset.pattern.permute.xlu0 0
        %280 = vperm.xlu0 %279, %v266
        %v281 = vpop.permute.xlu0 %280
        %284 = vset.pattern.permute.xlu0 0
        %285 = vperm.xlu0 %284, %v267
        %v286 = vpop.permute.xlu0 %285
        %v289 = vperm.slane %v263, 0
        %v291 = vmul.f32 %v271, %v289
        %v292 = vmul.f32 %v276, %v289
        %v293 = vmul.f32 %v281, %v289
        %v294 = vmul.f32 %v286, %v289
        %v295 = vld [vmem:[#allocation2] sm:$0xff]
        %v296 = vld [vmem:[#allocation2 + $0x8] sm:$0xff]
        %v297 = vld [vmem:[#allocation2 + $0x10] sm:$0xff]
        %v298 = vld [vmem:[#allocation2 + $0x18] sm:$0xff]
        %v299 = vadd.f32 %v291, %v295
        %v300 = vadd.f32 %v292, %v296
        %v301 = vadd.f32 %v293, %v297
        %v302 = vadd.f32 %v294, %v298
        %303 = vadd.xlane.f32.xlu0 %v299
        %v304 = vpop.xlane.xlu0 %303
        %305 = vadd.xlane.f32.xlu0 %v300
        %v306 = vpop.xlane.xlu0 %305
        %307 = vadd.xlane.f32.xlu0 %v301
        %v308 = vpop.xlane.xlu0 %307
        %309 = vadd.xlane.f32.xlu0 %v302
        %v310 = vpop.xlane.xlu0 %309
        %v311 = vrcp.pop 128.0
        %v312 = vmul.f32 128.0, %v311
        %v313 = vsub.f32 1.0, %v312
        %v314 = vmul.f32 %v311, %v313
        %v315 = vadd.f32 %v311, %v314
        %vm316 = vweird.f32 %v311
        %v317 = vsel %vm316, %v311, %v315
        %v318 = vmul.f32 %v304, %v317
        %v319 = vmul.f32 %v306, %v317
        %v320 = vmul.f32 %v308, %v317
        %v321 = vmul.f32 %v310, %v317
        %v322 = vsub.f32 %v299, %v318
        %v323 = vsub.f32 %v300, %v319
        %v324 = vsub.f32 %v301, %v320
        %v325 = vsub.f32 %v302, %v321
        %v326 = vmul.f32 %v322, %v322
        %v327 = vmul.f32 %v323, %v323
        %v328 = vmul.f32 %v324, %v324
        %v329 = vmul.f32 %v325, %v325
        %330 = vadd.xlane.f32.xlu0 %v326
        %v331 = vpop.xlane.xlu0 %330
        %332 = vadd.xlane.f32.xlu0 %v327
        %v333 = vpop.xlane.xlu0 %332
        %334 = vadd.xlane.f32.xlu0 %v328
        %v335 = vpop.xlane.xlu0 %334
        %336 = vadd.xlane.f32.xlu0 %v329
        %v337 = vpop.xlane.xlu0 %336
        %v338 = vmul.f32 %v331, %v317
        %v339 = vmul.f32 %v333, %v317
        %v340 = vmul.f32 %v335, %v317
        %v341 = vmul.f32 %v337, %v317
        %v342 = vadd.f32 %v338, 1e-05
        %v343 = vadd.f32 %v339, 1e-05
        %v344 = vadd.f32 %v340, 1e-05
        %v345 = vadd.f32 %v341, 1e-05
        %v346 = vrsqrt.pop %v342
        %v347 = vmul.f32 %v346, %v342
        %v348 = vmul.f32 %v347, %v346
        %v349 = vmul.f32 0.5, %v348
        %v350 = vsub.f32 1.5, %v349
        %v351 = vmul.f32 %v346, %v350
        %vm352 = vweird.f32 %v342
        %vm353 = vweird.f32 %v346
        %vm354 = vmor %vm352, %vm353
        %v355 = vsel %vm354, %v346, %v351
        %v356 = vrsqrt.pop %v343
        %v357 = vmul.f32 %v356, %v343
        %v358 = vmul.f32 %v357, %v356
        %v359 = vmul.f32 0.5, %v358
        %v360 = vsub.f32 1.5, %v359
        %v361 = vmul.f32 %v356, %v360
        %vm362 = vweird.f32 %v343
        %vm363 = vweird.f32 %v356
        %vm364 = vmor %vm362, %vm363
        %v365 = vsel %vm364, %v356, %v361
        %v366 = vrsqrt.pop %v344
        %v367 = vmul.f32 %v366, %v344
        %v368 = vmul.f32 %v367, %v366
        %v369 = vmul.f32 0.5, %v368
        %v370 = vsub.f32 1.5, %v369
        %v371 = vmul.f32 %v366, %v370
        %vm372 = vweird.f32 %v344
        %vm373 = vweird.f32 %v366
        %vm374 = vmor %vm372, %vm373
        %v375 = vsel %vm374, %v366, %v371
        %v376 = vrsqrt.pop %v345
        %v377 = vmul.f32 %v376, %v345
        %v378 = vmul.f32 %v377, %v376
        %v379 = vmul.f32 0.5, %v378
        %v380 = vsub.f32 1.5, %v379
        %v381 = vmul.f32 %v376, %v380
        %vm382 = vweird.f32 %v345
        %vm383 = vweird.f32 %v376
        %vm384 = vmor %vm382, %vm383
        %v385 = vsel %vm384, %v376, %v381
        %v386 = vmul.f32 %v322, %v355
        %v387 = vmul.f32 %v323, %v365
        %v388 = vmul.f32 %v324, %v375
        %v389 = vmul.f32 %v325, %v385
        %v390 = vld [vmem:[%s3] sm:$0x1]
        %v392 = vperm.slane %v390, 0
        %v394 = vmul.f32 %v386, %v392
        %v395 = vmul.f32 %v387, %v392
        %v396 = vmul.f32 %v388, %v392
        %v397 = vmul.f32 %v389, %v392
        %v398 = vld [vmem:[%s4] sm:$0x1]
        %v400 = vperm.slane %v398, 0
        %v402 = vadd.f32 %v394, %v400
        %v403 = vadd.f32 %v395, %v400
        %v404 = vadd.f32 %v396, %v400
        %v405 = vadd.f32 %v397, %v400
        %v406 = vld [vmem:[%s5] sm:$0x1]
        %v408 = vperm.slane %v406, 0
        %v410 = vadd.f32 %v402, %v408
        %v411 = vadd.f32 %v403, %v408
        %v412 = vadd.f32 %v404, %v408
        %v413 = vadd.f32 %v405, %v408
        %v414 = vpack.c.bf16 %v410, %v410
        %v415 = vpack.c.bf16 %v411, %v411
        %v416 = vpack.c.bf16 %v412, %v412
        %v417 = vpack.c.bf16 %v413, %v413
        %418 = vst [vmem:[%s262] sm:$0xf] %v414
        %419 = vst [vmem:[%s262 + $0x4] sm:$0xf] %v415
        %420 = vst [vmem:[%s262 + $0x8] sm:$0xf] %v416
        %421 = vst [vmem:[%s262 + $0xc] sm:$0xf] %v417
        %p422 = scmp.lt.s32.totalorder %s18, 1
        %s423 = scalar_select %p422, %s18, 1
        %s424 = smul.addr %s423, 4
        %s425 = smul.addr %s424, 4
        %s426 = scalar_lea.vmem %s6, %s425
        // Predicated region
        $region49: #{brainx_forward.23} parent=43 // pred_check
          %p427 = pneg %p167
        $region50: #{brainx_forward.23} parent=43 // pred_check_branch
          %429 = sbr.rel (%p427) target = $region52
        $region51: #{brainx_forward.23} parent=43 // pred_region
          _
        $region52: #{brainx_forward.23} parent=43 // pred_fallthru
          _
      $region44: #{brainx_forward.23} parent=5 // pred_fallthru
        _
      %p430 = scmp.le.s32.totalorder 2, %s13
      // Predicated region
      $region53: #{brainx_forward.23} parent=5 // pred_check
        %p431 = pneg %p430
      $region54: #{brainx_forward.23} parent=5 // pred_check_branch
        %433 = sbr.rel (%p431) target = $region56
      $region55: #{brainx_forward.23} parent=5 // pred_region
        %s434 = ssub.s32 %s13, 2
        // Predicated region
        $region57: #{brainx_forward.23} parent=55 // pred_check
          %p435 = pneg %p173
        $region58: #{brainx_forward.23} parent=55 // pred_check_branch
          %437 = sbr.rel (%p435) target = $region60
        $region59: #{brainx_forward.23} parent=55 // pred_region
          %p438 = scmp.lt.s32.totalorder %s19, 1
          %s439 = scalar_select %p438, %s19, 1
          %s440 = smul.addr %s439, 4
          %s441 = smul.addr %s440, 4
          %s442 = scalar_lea.vmem %s6, %s441
        $region60: #{brainx_forward.23} parent=55 // pred_fallthru
          _
      $region56: #{brainx_forward.23} parent=5 // pred_fallthru
        _
    $region6: #{brainx_forward.23} parent=1 // loop_footer
      %s17 = sadd.s32 1, %s13
    $region7: #{brainx_forward.23} parent=1 // loop_footer_branch
      %12 = sbr.rel target = $region3
    $region8: #{brainx_forward.23} parent=1 // loop_exit
      _
    %443 = vsyncpa [#allocation3], 1
    %s444 = scalar_lea.sflag [#allocation3], 1
    %445 = vsyncpa %s444, 1

// kernel: brainx_forward.33
$region0: #{brainx_forward.33}
  #allocation0 [shape = 'u32[]', space=smem, size = 0x4, offset = 0x4, fixed_abs, tag = 'smem constant byte address 0x4 - core index']
  #allocation1 [shape = 'u32[72,128]{1,0:T(1,128)}', space=vmem, size = 0x9000, scoped, tag = 'internal scratch']
  %s0 = inlined_call_operand.vmem [shape: bf16[64,128], index: 0, kind: input, shape index: {}]
  %s1 = inlined_call_operand.vmem [shape: f32[1,128], index: 1, kind: input, shape index: {}]
  %s2 = inlined_call_operand.vmem [shape: f32[1,128], index: 2, kind: input, shape index: {}]
  %s3 = inlined_call_operand.vmem [shape: bf16[64,128], index: 3, kind: output, shape index: {}]
  %s4 = sld [smem:[#allocation0]]
  $region22: #{brainx_forward.33} parent=0
    _
  %s6 = ssub.s32 1, %s4
  %s7 = scalar_select 0, %s6, %s4
  // Predicated region
  $region2: #{brainx_forward.33} parent=0 // pred_check
    _
  $region3: #{brainx_forward.33} parent=0 // pred_check_branch
    %9 = sbr.rel (0) target = $region5
  $region4: #{brainx_forward.33} parent=0 // pred_region
    _
  $region5: #{brainx_forward.33} parent=0 // pred_fallthru
    _
  // Predicated region
  $region6: #{brainx_forward.33} parent=0 // pred_check
    _
  $region7: #{brainx_forward.33} parent=0 // pred_check_branch
    %11 = sbr.rel (0) target = $region9
  $region8: #{brainx_forward.33} parent=0 // pred_region
    _
  $region9: #{brainx_forward.33} parent=0 // pred_fallthru
    _
  // Predicated region
  $region10: #{brainx_forward.33} parent=0 // pred_check
    _
  $region11: #{brainx_forward.33} parent=0 // pred_check_branch
    %13 = sbr.rel (0) target = $region13
  $region12: #{brainx_forward.33} parent=0 // pred_region
    _
  $region13: #{brainx_forward.33} parent=0 // pred_fallthru
    _
  %v14 = vld [vmem:[%s0] sm:$0xf]
  %v15 = vld [vmem:[%s0 + $0x4] sm:$0xf]
  %v16 = vld [vmem:[%s0 + $0x8] sm:$0xf]
  %v17 = vld [vmem:[%s0 + $0xc] sm:$0xf]
  %v18 = vld [vmem:[%s0 + $0x10] sm:$0xf]
  %v19 = vld [vmem:[%s0 + $0x14] sm:$0xf]
  %v20 = vld [vmem:[%s0 + $0x18] sm:$0xf]
  %v21 = vld [vmem:[%s0 + $0x1c] sm:$0xf]
  %v22 = vunpack.c.l.bf16 %v14
  %v23 = vunpack.c.l.bf16 %v15
  %v24 = vunpack.c.l.bf16 %v16
  %v25 = vunpack.c.l.bf16 %v17
  %v26 = vunpack.c.l.bf16 %v18
  %v27 = vunpack.c.l.bf16 %v19
  %v28 = vunpack.c.l.bf16 %v20
  %v29 = vunpack.c.l.bf16 %v21
  %30 = vadd.xlane.f32.xlu0 %v22
  %v31 = vpop.xlane.xlu0 %30
  %32 = vadd.xlane.f32.xlu0 %v23
  %v33 = vpop.xlane.xlu0 %32
  %34 = vadd.xlane.f32.xlu0 %v24
  %v35 = vpop.xlane.xlu0 %34
  %36 = vadd.xlane.f32.xlu0 %v25
  %v37 = vpop.xlane.xlu0 %36
  %38 = vadd.xlane.f32.xlu0 %v26
  %v39 = vpop.xlane.xlu0 %38
  %40 = vadd.xlane.f32.xlu0 %v27
  %v41 = vpop.xlane.xlu0 %40
  %42 = vadd.xlane.f32.xlu0 %v28
  %v43 = vpop.xlane.xlu0 %42
  %44 = vadd.xlane.f32.xlu0 %v29
  %v45 = vpop.xlane.xlu0 %44
  %v46 = vrcp.pop 128.0
  %v47 = vmul.f32 128.0, %v46
  %v48 = vsub.f32 1.0, %v47
  %v49 = vmul.f32 %v46, %v48
  %v50 = vadd.f32 %v46, %v49
  %vm51 = vweird.f32 %v46
  %v52 = vsel %vm51, %v46, %v50
  %v53 = vmul.f32 %v31, %v52
  %v54 = vmul.f32 %v33, %v52
  %v55 = vmul.f32 %v35, %v52
  %v56 = vmul.f32 %v37, %v52
  %v57 = vmul.f32 %v39, %v52
  %v58 = vmul.f32 %v41, %v52
  %v59 = vmul.f32 %v43, %v52
  %v60 = vmul.f32 %v45, %v52
  %v61 = vsub.f32 %v22, %v53
  %v62 = vsub.f32 %v23, %v54
  %v63 = vsub.f32 %v24, %v55
  %v64 = vsub.f32 %v25, %v56
  %v65 = vsub.f32 %v26, %v57
  %v66 = vsub.f32 %v27, %v58
  %v67 = vsub.f32 %v28, %v59
  %v68 = vsub.f32 %v29, %v60
  %v69 = vmul.f32 %v61, %v61
  %v70 = vmul.f32 %v62, %v62
  %v71 = vmul.f32 %v63, %v63
  %v72 = vmul.f32 %v64, %v64
  %v73 = vmul.f32 %v65, %v65
  %v74 = vmul.f32 %v66, %v66
  %v75 = vmul.f32 %v67, %v67
  %v76 = vmul.f32 %v68, %v68
  %77 = vadd.xlane.f32.xlu0 %v69
  %v78 = vpop.xlane.xlu0 %77
  %79 = vadd.xlane.f32.xlu0 %v70
  %v80 = vpop.xlane.xlu0 %79
  %81 = vadd.xlane.f32.xlu0 %v71
  %v82 = vpop.xlane.xlu0 %81
  %83 = vadd.xlane.f32.xlu0 %v72
  %v84 = vpop.xlane.xlu0 %83
  %85 = vadd.xlane.f32.xlu0 %v73
  %v86 = vpop.xlane.xlu0 %85
  %87 = vadd.xlane.f32.xlu0 %v74
  %v88 = vpop.xlane.xlu0 %87
  %89 = vadd.xlane.f32.xlu0 %v75
  %v90 = vpop.xlane.xlu0 %89
  %91 = vadd.xlane.f32.xlu0 %v76
  %v92 = vpop.xlane.xlu0 %91
  %v93 = vmul.f32 %v78, %v52
  %v94 = vmul.f32 %v80, %v52
  %v95 = vmul.f32 %v82, %v52
  %v96 = vmul.f32 %v84, %v52
  %v97 = vmul.f32 %v86, %v52
  %v98 = vmul.f32 %v88, %v52
  %v99 = vmul.f32 %v90, %v52
  %v100 = vmul.f32 %v92, %v52
  %v101 = vadd.f32 %v93, 1e-05
  %v102 = vadd.f32 %v94, 1e-05
  %v103 = vadd.f32 %v95, 1e-05
  %v104 = vadd.f32 %v96, 1e-05
  %v105 = vadd.f32 %v97, 1e-05
  %v106 = vadd.f32 %v98, 1e-05
  %v107 = vadd.f32 %v99, 1e-05
  %v108 = vadd.f32 %v100, 1e-05
  %v109 = vrsqrt.pop %v101
  %v110 = vmul.f32 %v109, %v101
  %v111 = vmul.f32 %v110, %v109
  %v112 = vmul.f32 0.5, %v111
  %v113 = vsub.f32 1.5, %v112
  %v114 = vmul.f32 %v109, %v113
  %vm115 = vweird.f32 %v101
  %vm116 = vweird.f32 %v109
  %vm117 = vmor %vm115, %vm116
  %v118 = vsel %vm117, %v109, %v114
  %v119 = vrsqrt.pop %v102
  %v120 = vmul.f32 %v119, %v102
  %v121 = vmul.f32 %v120, %v119
  %v122 = vmul.f32 0.5, %v121
  %v123 = vsub.f32 1.5, %v122
  %v124 = vmul.f32 %v119, %v123
  %vm125 = vweird.f32 %v102
  %vm126 = vweird.f32 %v119
  %vm127 = vmor %vm125, %vm126
  %v128 = vsel %vm127, %v119, %v124
  %v129 = vrsqrt.pop %v103
  %v130 = vmul.f32 %v129, %v103
  %v131 = vmul.f32 %v130, %v129
  %v132 = vmul.f32 0.5, %v131
  %v133 = vsub.f32 1.5, %v132
  %v134 = vmul.f32 %v129, %v133
  %vm135 = vweird.f32 %v103
  %vm136 = vweird.f32 %v129
  %vm137 = vmor %vm135, %vm136
  %v138 = vsel %vm137, %v129, %v134
  %v139 = vrsqrt.pop %v104
  %v140 = vmul.f32 %v139, %v104
  %v141 = vmul.f32 %v140, %v139
  %v142 = vmul.f32 0.5, %v141
  %v143 = vsub.f32 1.5, %v142
  %v144 = vmul.f32 %v139, %v143
  %vm145 = vweird.f32 %v104
  %vm146 = vweird.f32 %v139
  %vm147 = vmor %vm145, %vm146
  %v148 = vsel %vm147, %v139, %v144
  %v149 = vrsqrt.pop %v105
  %v150 = vmul.f32 %v149, %v105
  %v151 = vmul.f32 %v150, %v149
  %v152 = vmul.f32 0.5, %v151
  %v153 = vsub.f32 1.5, %v152
  %v154 = vmul.f32 %v149, %v153
  %vm155 = vweird.f32 %v105
  %vm156 = vweird.f32 %v149
  %vm157 = vmor %vm155, %vm156
  %v158 = vsel %vm157, %v149, %v154
  %v159 = vrsqrt.pop %v106
  %v160 = vmul.f32 %v159, %v106
  %v161 = vmul.f32 %v160, %v159
  %v162 = vmul.f32 0.5, %v161
  %v163 = vsub.f32 1.5, %v162
  %v164 = vmul.f32 %v159, %v163
  %vm165 = vweird.f32 %v106
  %vm166 = vweird.f32 %v159
  %vm167 = vmor %vm165, %vm166
  %v168 = vsel %vm167, %v159, %v164
  %v169 = vrsqrt.pop %v107
  %v170 = vmul.f32 %v169, %v107
  %v171 = vmul.f32 %v170, %v169
  %v172 = vmul.f32 0.5, %v171
  %v173 = vsub.f32 1.5, %v172
  %v174 = vmul.f32 %v169, %v173
  %vm175 = vweird.f32 %v107
  %vm176 = vweird.f32 %v169
  %vm177 = vmor %vm175, %vm176
  %v178 = vsel %vm177, %v169, %v174
  %v179 = vrsqrt.pop %v108
  %v180 = vmul.f32 %v179, %v108
  %v181 = vmul.f32 %v180, %v179
  %v182 = vmul.f32 0.5, %v181
  %v183 = vsub.f32 1.5, %v182
  %v184 = vmul.f32 %v179, %v183
  %vm185 = vweird.f32 %v108
  %vm186 = vweird.f32 %v179
  %vm187 = vmor %vm185, %vm186
  %v188 = vsel %vm187, %v179, %v184
  %v189 = vmul.f32 %v61, %v118
  %v190 = vmul.f32 %v62, %v128
  %v191 = vmul.f32 %v63, %v138
  %v192 = vmul.f32 %v64, %v148
  %v193 = vmul.f32 %v65, %v158
  %v194 = vmul.f32 %v66, %v168
  %v195 = vmul.f32 %v67, %v178
  %v196 = vmul.f32 %v68, %v188
  %v197 = vld [vmem:[%s1] sm:$0x1]
  %v199 = vperm.slane %v197, 0
  %v201 = vmul.f32 %v189, %v199
  %v202 = vmul.f32 %v190, %v199
  %v203 = vmul.f32 %v191, %v199
  %v204 = vmul.f32 %v192, %v199
  %v205 = vmul.f32 %v193, %v199
  %v206 = vmul.f32 %v194, %v199
  %v207 = vmul.f32 %v195, %v199
  %v208 = vmul.f32 %v196, %v199
  %v209 = vld [vmem:[%s2] sm:$0x1]
  %v211 = vperm.slane %v209, 0
  %v213 = vadd.f32 %v201, %v211
  %v214 = vadd.f32 %v202, %v211
  %v215 = vadd.f32 %v203, %v211
  %v216 = vadd.f32 %v204, %v211
  %v217 = vadd.f32 %v205, %v211
  %v218 = vadd.f32 %v206, %v211
  %v219 = vadd.f32 %v207, %v211
  %v220 = vadd.f32 %v208, %v211
  %v221 = vpack.c.bf16 %v213, %v213
  %v222 = vpack.c.bf16 %v214, %v214
  %v223 = vpack.c.bf16 %v215, %v215
  %v224 = vpack.c.bf16 %v216, %v216
  %v225 = vpack.c.bf16 %v217, %v217
  %v226 = vpack.c.bf16 %v218, %v218
  %v227 = vpack.c.bf16 %v219, %v219
  %v228 = vpack.c.bf16 %v220, %v220
  %229 = vst [vmem:[%s3] sm:$0xf] %v221
  %230 = vst [vmem:[%s3 + $0x4] sm:$0xf] %v222
  %231 = vst [vmem:[%s3 + $0x8] sm:$0xf] %v223
  %232 = vst [vmem:[%s3 + $0xc] sm:$0xf] %v224
  %233 = vst [vmem:[%s3 + $0x10] sm:$0xf] %v225
  %234 = vst [vmem:[%s3 + $0x14] sm:$0xf] %v226
  %235 = vst [vmem:[%s3 + $0x18] sm:$0xf] %v227
  %236 = vst [vmem:[%s3 + $0x1c] sm:$0xf] %v228
  // Predicated region
  $region14: #{brainx_forward.33} parent=0 // pred_check
    _
  $region15: #{brainx_forward.33} parent=0 // pred_check_branch
    %238 = sbr.rel (0) target = $region17
  $region16: #{brainx_forward.33} parent=0 // pred_region
    _
  $region17: #{brainx_forward.33} parent=0 // pred_fallthru
    _
  // Predicated region
  $region18: #{brainx_forward.33} parent=0 // pred_check
    _
  $region19: #{brainx_forward.33} parent=0 // pred_check_branch
    %240 = sbr.rel (0) target = $region21
  $region20: #{brainx_forward.33} parent=0 // pred_region
    _
  $region21: #{brainx_forward.33} parent=0 // pred_fallthru
    _

// kernel: brainx_forward.26
$region0: #{brainx_forward.26}
  #allocation0 [shape = 'u32[]', space=smem, size = 0x4, offset = 0x4, fixed_abs, tag = 'smem constant byte address 0x4 - core index']
  #allocation1 [shape = 'u32[72,128]{1,0:T(1,128)}', space=vmem, size = 0x9000, scoped, tag = 'internal scratch']
  %s0 = inlined_call_operand.vmem [shape: bf16[64,128], index: 0, kind: input, shape index: {}]
  %s1 = inlined_call_operand.vmem [shape: bf16[128,128], index: 1, kind: input, shape index: {}]
  %s2 = inlined_call_operand.vmem [shape: bf16[64,128], index: 2, kind: output, shape index: {}]
  %s3 = sld [smem:[#allocation0]]
  $region18: #{brainx_forward.26} parent=0
    _
  %s5 = ssub.s32 1, %s3
  %s6 = scalar_select 0, %s5, %s3
  // Predicated region
  $region2: #{brainx_forward.26} parent=0 // pred_check
    _
  $region3: #{brainx_forward.26} parent=0 // pred_check_branch
    %8 = sbr.rel (0) target = $region5
  $region4: #{brainx_forward.26} parent=0 // pred_region
    _
  $region5: #{brainx_forward.26} parent=0 // pred_fallthru
    _
  // Predicated region
  $region6: #{brainx_forward.26} parent=0 // pred_check
    _
  $region7: #{brainx_forward.26} parent=0 // pred_check_branch
    %10 = sbr.rel (0) target = $region9
  $region8: #{brainx_forward.26} parent=0 // pred_region
    _
  $region9: #{brainx_forward.26} parent=0 // pred_fallthru
    _
  %v11 = vld [vmem:[%s0] sm:$0xf]
  %v12 = vld [vmem:[%s0 + $0x4] sm:$0xf]
  %v13 = vld [vmem:[%s0 + $0x8] sm:$0xf]
  %v14 = vld [vmem:[%s0 + $0xc] sm:$0xf]
  %v15 = vld [vmem:[%s0 + $0x10] sm:$0xf]
  %v16 = vld [vmem:[%s0 + $0x14] sm:$0xf]
  %v17 = vld [vmem:[%s0 + $0x18] sm:$0xf]
  %v18 = vld [vmem:[%s0 + $0x1c] sm:$0xf]
  %v19 = vld [vmem:[%s1] sm:$0xf]
  %v20 = vld [vmem:[%s1 + $0x4] sm:$0xf]
  %v21 = vld [vmem:[%s1 + $0x8] sm:$0xf]
  %v22 = vld [vmem:[%s1 + $0xc] sm:$0xf]
  %v23 = vld [vmem:[%s1 + $0x10] sm:$0xf]
  %v24 = vld [vmem:[%s1 + $0x14] sm:$0xf]
  %v25 = vld [vmem:[%s1 + $0x18] sm:$0xf]
  %v26 = vld [vmem:[%s1 + $0x1c] sm:$0xf]
  %v27 = vld [vmem:[%s1 + $0x20] sm:$0xf]
  %v28 = vld [vmem:[%s1 + $0x24] sm:$0xf]
  %v29 = vld [vmem:[%s1 + $0x28] sm:$0xf]
  %v30 = vld [vmem:[%s1 + $0x2c] sm:$0xf]
  %v31 = vld [vmem:[%s1 + $0x30] sm:$0xf]
  %v32 = vld [vmem:[%s1 + $0x34] sm:$0xf]
  %v33 = vld [vmem:[%s1 + $0x38] sm:$0xf]
  %v34 = vld [vmem:[%s1 + $0x3c] sm:$0xf]
  %v43 = vunpack.c.l.b16 %v11
  %v44 = vunpack.c.l.b16 %v12
  %v45 = vunpack.c.l.b16 %v13
  %v46 = vunpack.c.l.b16 %v14
  %v47 = vunpack.c.l.b16 %v15
  %v48 = vunpack.c.l.b16 %v16
  %v49 = vunpack.c.l.b16 %v17
  %v50 = vunpack.c.l.b16 %v18
  %v51 = vpack.c.b16 %v44, %v43
  %v52 = vpack.c.b16 %v46, %v45
  %v53 = vpack.c.b16 %v48, %v47
  %v54 = vpack.c.b16 %v50, %v49
  %v75 = vunpack.c.l.b16 %v19
  %v76 = vunpack.c.l.b16 %v20
  %v77 = vunpack.c.l.b16 %v21
  %v78 = vunpack.c.l.b16 %v22
  %v79 = vunpack.c.l.b16 %v23
  %v80 = vunpack.c.l.b16 %v24
  %v81 = vunpack.c.l.b16 %v25
  %v82 = vunpack.c.l.b16 %v26
  %v83 = vunpack.c.l.b16 %v27
  %v84 = vunpack.c.l.b16 %v28
  %v85 = vunpack.c.l.b16 %v29
  %v86 = vunpack.c.l.b16 %v30
  %v87 = vunpack.c.l.b16 %v31
  %v88 = vunpack.c.l.b16 %v32
  %v89 = vunpack.c.l.b16 %v33
  %v90 = vunpack.c.l.b16 %v34
  %v91 = vpack.c.b16 %v76, %v75
  %v92 = vpack.c.b16 %v78, %v77
  %v93 = vpack.c.b16 %v80, %v79
  %v94 = vpack.c.b16 %v82, %v81
  %v95 = vpack.c.b16 %v84, %v83
  %v96 = vpack.c.b16 %v86, %v85
  %v97 = vpack.c.b16 %v88, %v87
  %v98 = vpack.c.b16 %v90, %v89
  %107 = vmatpush.bf16.msra.mxu0 %v98
  %108 = vmatpush.bf16.msra.mxu0 %v97
  %109 = vmatpush.bf16.msra.mxu0 %v96
  %110 = vmatpush.bf16.msra.mxu0 %v95
  %111 = vmatpush.bf16.msra.mxu0 %v94
  %112 = vmatpush.bf16.msra.mxu0 %v93
  %113 = vmatpush.bf16.msra.mxu0 %v92
  %114 = vmatpush.bf16.msra.mxu0 %v91
  %115 = vmatmul.bf16.gmra.mxu0 %v51
  %v116 = vpop.f32.mrf.mxu0
  %v117 = vadd.f32 0.0, %v116
  %v118 = vpop.f32.mrf.mxu0
  %v119 = vadd.f32 0.0, %v118
  %120 = vmatmul.bf16.gmra.mxu0 %v52
  %v121 = vpop.f32.mrf.mxu0
  %v122 = vadd.f32 0.0, %v121
  %v123 = vpop.f32.mrf.mxu0
  %v124 = vadd.f32 0.0, %v123
  %125 = vmatmul.bf16.gmra.mxu0 %v53
  %v126 = vpop.f32.mrf.mxu0
  %v127 = vadd.f32 0.0, %v126
  %v128 = vpop.f32.mrf.mxu0
  %v129 = vadd.f32 0.0, %v128
  %130 = vmatmul.bf16.gmra.mxu0 %v54
  %v131 = vpop.f32.mrf.mxu0
  %v132 = vadd.f32 0.0, %v131
  %v133 = vpop.f32.mrf.mxu0
  %v134 = vadd.f32 0.0, %v133
  %135 = vdwg.mxu0
  %v136 = vpack.c.bf16 %v117, %v117
  %v137 = vpack.c.bf16 %v119, %v119
  %v138 = vpack.c.bf16 %v122, %v122
  %v139 = vpack.c.bf16 %v124, %v124
  %v140 = vpack.c.bf16 %v127, %v127
  %v141 = vpack.c.bf16 %v129, %v129
  %v142 = vpack.c.bf16 %v132, %v132
  %v143 = vpack.c.bf16 %v134, %v134
  %144 = vst [vmem:[%s2] sm:$0xf] %v136
  %145 = vst [vmem:[%s2 + $0x4] sm:$0xf] %v137
  %146 = vst [vmem:[%s2 + $0x8] sm:$0xf] %v138
  %147 = vst [vmem:[%s2 + $0xc] sm:$0xf] %v139
  %148 = vst [vmem:[%s2 + $0x10] sm:$0xf] %v140
  %149 = vst [vmem:[%s2 + $0x14] sm:$0xf] %v141
  %150 = vst [vmem:[%s2 + $0x18] sm:$0xf] %v142
  %151 = vst [vmem:[%s2 + $0x1c] sm:$0xf] %v143
  // Predicated region
  $region10: #{brainx_forward.26} parent=0 // pred_check
    _
  $region11: #{brainx_forward.26} parent=0 // pred_check_branch
    %153 = sbr.rel (0) target = $region13
  $region12: #{brainx_forward.26} parent=0 // pred_region
    _
  $region13: #{brainx_forward.26} parent=0 // pred_fallthru
    _
  // Predicated region
  $region14: #{brainx_forward.26} parent=0 // pred_check
    _
  $region15: #{brainx_forward.26} parent=0 // pred_check_branch
    %155 = sbr.rel (0) target = $region17
  $region16: #{brainx_forward.26} parent=0 // pred_region
    _
  $region17: #{brainx_forward.26} parent=0 // pred_fallthru
    _

// kernel: brainx_forward.27
$region0: #{brainx_forward.27}
  #allocation0 [shape = 'u32[]', space=smem, size = 0x4, offset = 0x4, fixed_abs, tag = 'smem constant byte address 0x4 - core index']
  #allocation1 [shape = 'u32[72,128]{1,0:T(1,128)}', space=vmem, size = 0x9000, scoped, tag = 'internal scratch']
  %s0 = inlined_call_operand.vmem [shape: bf16[128,128], index: 0, kind: input, shape index: {}]
  %s1 = inlined_call_operand.vmem [shape: bf16[128,128], index: 1, kind: input, shape index: {}]
  %s2 = inlined_call_operand.vmem [shape: bf16[128,128], index: 2, kind: output, shape index: {}]
  %s3 = sld [smem:[#allocation0]]
  $region18: #{brainx_forward.27} parent=0
    _
  %s5 = ssub.s32 1, %s3
  %s6 = scalar_select 0, %s5, %s3
  // Predicated region
  $region2: #{brainx_forward.27} parent=0 // pred_check
    _
  $region3: #{brainx_forward.27} parent=0 // pred_check_branch
    %8 = sbr.rel (0) target = $region5
  $region4: #{brainx_forward.27} parent=0 // pred_region
    _
  $region5: #{brainx_forward.27} parent=0 // pred_fallthru
    _
  // Predicated region
  $region6: #{brainx_forward.27} parent=0 // pred_check
    _
  $region7: #{brainx_forward.27} parent=0 // pred_check_branch
    %10 = sbr.rel (0) target = $region9
  $region8: #{brainx_forward.27} parent=0 // pred_region
    _
  $region9: #{brainx_forward.27} parent=0 // pred_fallthru
    _
  %v11 = vld [vmem:[%s0] sm:$0xf]
  %v12 = vld [vmem:[%s0 + $0x4] sm:$0xf]
  %v13 = vld [vmem:[%s0 + $0x8] sm:$0xf]
  %v14 = vld [vmem:[%s0 + $0xc] sm:$0xf]
  %v15 = vld [vmem:[%s0 + $0x10] sm:$0xf]
  %v16 = vld [vmem:[%s0 + $0x14] sm:$0xf]
  %v17 = vld [vmem:[%s0 + $0x18] sm:$0xf]
  %v18 = vld [vmem:[%s0 + $0x1c] sm:$0xf]
  %v19 = vld [vmem:[%s0 + $0x20] sm:$0xf]
  %v20 = vld [vmem:[%s0 + $0x24] sm:$0xf]
  %v21 = vld [vmem:[%s0 + $0x28] sm:$0xf]
  %v22 = vld [vmem:[%s0 + $0x2c] sm:$0xf]
  %v23 = vld [vmem:[%s0 + $0x30] sm:$0xf]
  %v24 = vld [vmem:[%s0 + $0x34] sm:$0xf]
  %v25 = vld [vmem:[%s0 + $0x38] sm:$0xf]
  %v26 = vld [vmem:[%s0 + $0x3c] sm:$0xf]
  %v27 = vld [vmem:[%s1] sm:$0xf]
  %v28 = vld [vmem:[%s1 + $0x4] sm:$0xf]
  %v29 = vld [vmem:[%s1 + $0x8] sm:$0xf]
  %v30 = vld [vmem:[%s1 + $0xc] sm:$0xf]
  %v31 = vld [vmem:[%s1 + $0x10] sm:$0xf]
  %v32 = vld [vmem:[%s1 + $0x14] sm:$0xf]
  %v33 = vld [vmem:[%s1 + $0x18] sm:$0xf]
  %v34 = vld [vmem:[%s1 + $0x1c] sm:$0xf]
  %v35 = vld [vmem:[%s1 + $0x20] sm:$0xf]
  %v36 = vld [vmem:[%s1 + $0x24] sm:$0xf]
  %v37 = vld [vmem:[%s1 + $0x28] sm:$0xf]
  %v38 = vld [vmem:[%s1 + $0x2c] sm:$0xf]
  %v39 = vld [vmem:[%s1 + $0x30] sm:$0xf]
  %v40 = vld [vmem:[%s1 + $0x34] sm:$0xf]
  %v41 = vld [vmem:[%s1 + $0x38] sm:$0xf]
  %v42 = vld [vmem:[%s1 + $0x3c] sm:$0xf]
  %v59 = vunpack.c.l.b16 %v11
  %v60 = vunpack.c.l.b16 %v12
  %v61 = vunpack.c.l.b16 %v13
  %v62 = vunpack.c.l.b16 %v14
  %v63 = vunpack.c.l.b16 %v15
  %v64 = vunpack.c.l.b16 %v16
  %v65 = vunpack.c.l.b16 %v17
  %v66 = vunpack.c.l.b16 %v18
  %v67 = vunpack.c.l.b16 %v19
  %v68 = vunpack.c.l.b16 %v20
  %v69 = vunpack.c.l.b16 %v21
  %v70 = vunpack.c.l.b16 %v22
  %v71 = vunpack.c.l.b16 %v23
  %v72 = vunpack.c.l.b16 %v24
  %v73 = vunpack.c.l.b16 %v25
  %v74 = vunpack.c.l.b16 %v26
  %v75 = vpack.c.b16 %v60, %v59
  %v76 = vpack.c.b16 %v62, %v61
  %v77 = vpack.c.b16 %v64, %v63
  %v78 = vpack.c.b16 %v66, %v65
  %v79 = vpack.c.b16 %v68, %v67
  %v80 = vpack.c.b16 %v70, %v69
  %v81 = vpack.c.b16 %v72, %v71
  %v82 = vpack.c.b16 %v74, %v73
  %v107 = vunpack.c.l.b16 %v27
  %v108 = vunpack.c.l.b16 %v28
  %v109 = vunpack.c.l.b16 %v29
  %v110 = vunpack.c.l.b16 %v30
  %v111 = vunpack.c.l.b16 %v31
  %v112 = vunpack.c.l.b16 %v32
  %v113 = vunpack.c.l.b16 %v33
  %v114 = vunpack.c.l.b16 %v34
  %v115 = vunpack.c.l.b16 %v35
  %v116 = vunpack.c.l.b16 %v36
  %v117 = vunpack.c.l.b16 %v37
  %v118 = vunpack.c.l.b16 %v38
  %v119 = vunpack.c.l.b16 %v39
  %v120 = vunpack.c.l.b16 %v40
  %v121 = vunpack.c.l.b16 %v41
  %v122 = vunpack.c.l.b16 %v42
  %v123 = vpack.c.b16 %v108, %v107
  %v124 = vpack.c.b16 %v110, %v109
  %v125 = vpack.c.b16 %v112, %v111
  %v126 = vpack.c.b16 %v114, %v113
  %v127 = vpack.c.b16 %v116, %v115
  %v128 = vpack.c.b16 %v118, %v117
  %v129 = vpack.c.b16 %v120, %v119
  %v130 = vpack.c.b16 %v122, %v121
  %139 = vmatpush.bf16.msra.mxu0 %v130
  %140 = vmatpush.bf16.msra.mxu0 %v129
  %141 = vmatpush.bf16.msra.mxu0 %v128
  %142 = vmatpush.bf16.msra.mxu0 %v127
  %143 = vmatpush.bf16.msra.mxu0 %v126
  %144 = vmatpush.bf16.msra.mxu0 %v125
  %145 = vmatpush.bf16.msra.mxu0 %v124
  %146 = vmatpush.bf16.msra.mxu0 %v123
  %147 = vmatmul.bf16.gmra.mxu0 %v75
  %v148 = vpop.f32.mrf.mxu0
  %v149 = vadd.f32 0.0, %v148
  %v150 = vpop.f32.mrf.mxu0
  %v151 = vadd.f32 0.0, %v150
  %152 = vmatmul.bf16.gmra.mxu0 %v76
  %v153 = vpop.f32.mrf.mxu0
  %v154 = vadd.f32 0.0, %v153
  %v155 = vpop.f32.mrf.mxu0
  %v156 = vadd.f32 0.0, %v155
  %157 = vmatmul.bf16.gmra.mxu0 %v77
  %v158 = vpop.f32.mrf.mxu0
  %v159 = vadd.f32 0.0, %v158
  %v160 = vpop.f32.mrf.mxu0
  %v161 = vadd.f32 0.0, %v160
  %162 = vmatmul.bf16.gmra.mxu0 %v78
  %v163 = vpop.f32.mrf.mxu0
  %v164 = vadd.f32 0.0, %v163
  %v165 = vpop.f32.mrf.mxu0
  %v166 = vadd.f32 0.0, %v165
  %167 = vmatmul.bf16.gmra.mxu0 %v79
  %v168 = vpop.f32.mrf.mxu0
  %v169 = vadd.f32 0.0, %v168
  %v170 = vpop.f32.mrf.mxu0
  %v171 = vadd.f32 0.0, %v170
  %172 = vmatmul.bf16.gmra.mxu0 %v80
  %v173 = vpop.f32.mrf.mxu0
  %v174 = vadd.f32 0.0, %v173
  %v175 = vpop.f32.mrf.mxu0
  %v176 = vadd.f32 0.0, %v175
  %177 = vmatmul.bf16.gmra.mxu0 %v81
  %v178 = vpop.f32.mrf.mxu0
  %v179 = vadd.f32 0.0, %v178
  %v180 = vpop.f32.mrf.mxu0
  %v181 = vadd.f32 0.0, %v180
  %182 = vmatmul.bf16.gmra.mxu0 %v82
  %v183 = vpop.f32.mrf.mxu0
  %v184 = vadd.f32 0.0, %v183
  %v185 = vpop.f32.mrf.mxu0
  %v186 = vadd.f32 0.0, %v185
  %187 = vdwg.mxu0
  %v188 = vpack.c.bf16 %v149, %v149
  %v189 = vpack.c.bf16 %v151, %v151
  %v190 = vpack.c.bf16 %v154, %v154
  %v191 = vpack.c.bf16 %v156, %v156
  %v192 = vpack.c.bf16 %v159, %v159
  %v193 = vpack.c.bf16 %v161, %v161
  %v194 = vpack.c.bf16 %v164, %v164
  %v195 = vpack.c.bf16 %v166, %v166
  %v196 = vpack.c.bf16 %v169, %v169
  %v197 = vpack.c.bf16 %v171, %v171
  %v198 = vpack.c.bf16 %v174, %v174
  %v199 = vpack.c.bf16 %v176, %v176
  %v200 = vpack.c.bf16 %v179, %v179
  %v201 = vpack.c.bf16 %v181, %v181
  %v202 = vpack.c.bf16 %v184, %v184
  %v203 = vpack.c.bf16 %v186, %v186
  %204 = vst [vmem:[%s2] sm:$0xf] %v188
  %205 = vst [vmem:[%s2 + $0x4] sm:$0xf] %v189
  %206 = vst [vmem:[%s2 + $0x8] sm:$0xf] %v190
  %207 = vst [vmem:[%s2 + $0xc] sm:$0xf] %v191
  %208 = vst [vmem:[%s2 + $0x10] sm:$0xf] %v192
  %209 = vst [vmem:[%s2 + $0x14] sm:$0xf] %v193
  %210 = vst [vmem:[%s2 + $0x18] sm:$0xf] %v194
  %211 = vst [vmem:[%s2 + $0x1c] sm:$0xf] %v195
  %212 = vst [vmem:[%s2 + $0x20] sm:$0xf] %v196
  %213 = vst [vmem:[%s2 + $0x24] sm:$0xf] %v197
  %214 = vst [vmem:[%s2 + $0x28] sm:$0xf] %v198
  %215 = vst [vmem:[%s2 + $0x2c] sm:$0xf] %v199
  %216 = vst [vmem:[%s2 + $0x30] sm:$0xf] %v200
  %217 = vst [vmem:[%s2 + $0x34] sm:$0xf] %v201
  %218 = vst [vmem:[%s2 + $0x38] sm:$0xf] %v202
  %219 = vst [vmem:[%s2 + $0x3c] sm:$0xf] %v203
  // Predicated region
  $region10: #{brainx_forward.27} parent=0 // pred_check
    _
  $region11: #{brainx_forward.27} parent=0 // pred_check_branch
    %221 = sbr.rel (0) target = $region13
  $region12: #{brainx_forward.27} parent=0 // pred_region
    _
  $region13: #{brainx_forward.27} parent=0 // pred_fallthru
    _
  // Predicated region
  $region14: #{brainx_forward.27} parent=0 // pred_check
    _
  $region15: #{brainx_forward.27} parent=0 // pred_check_branch
    %223 = sbr.rel (0) target = $region17
  $region16: #{brainx_forward.27} parent=0 // pred_region
    _
  $region17: #{brainx_forward.27} parent=0 // pred_fallthru
    _

// kernel: brainx_forward.29
$region0: #{brainx_forward.29}
  #allocation0 [shape = 'u32[]', space=smem, size = 0x4, offset = 0x4, fixed_abs, tag = 'smem constant byte address 0x4 - core index']
  #allocation1 [shape = 'u32[72,128]{1,0:T(1,128)}', space=vmem, size = 0x9000, scoped, tag = 'internal scratch']
  %s0 = inlined_call_operand.vmem [shape: bf16[64,128], index: 0, kind: input, shape index: {}]
  %s1 = inlined_call_operand.vmem [shape: bf16[128,128], index: 1, kind: input, shape index: {}]
  %s2 = inlined_call_operand.vmem [shape: f32[64,128], index: 2, kind: input, shape index: {}]
  %s3 = inlined_call_operand.vmem [shape: f32[64,128], index: 3, kind: output, shape index: {}]
  %s4 = sld [smem:[#allocation0]]
  $region22: #{brainx_forward.29} parent=0
    _
  %s6 = ssub.s32 1, %s4
  %s7 = scalar_select 0, %s6, %s4
  // Predicated region
  $region2: #{brainx_forward.29} parent=0 // pred_check
    _
  $region3: #{brainx_forward.29} parent=0 // pred_check_branch
    %9 = sbr.rel (0) target = $region5
  $region4: #{brainx_forward.29} parent=0 // pred_region
    _
  $region5: #{brainx_forward.29} parent=0 // pred_fallthru
    _
  // Predicated region
  $region6: #{brainx_forward.29} parent=0 // pred_check
    _
  $region7: #{brainx_forward.29} parent=0 // pred_check_branch
    %11 = sbr.rel (0) target = $region9
  $region8: #{brainx_forward.29} parent=0 // pred_region
    _
  $region9: #{brainx_forward.29} parent=0 // pred_fallthru
    _
  // Predicated region
  $region10: #{brainx_forward.29} parent=0 // pred_check
    _
  $region11: #{brainx_forward.29} parent=0 // pred_check_branch
    %13 = sbr.rel (0) target = $region13
  $region12: #{brainx_forward.29} parent=0 // pred_region
    _
  $region13: #{brainx_forward.29} parent=0 // pred_fallthru
    _
  %v14 = vld [vmem:[%s0] sm:$0xf]
  %v15 = vld [vmem:[%s0 + $0x4] sm:$0xf]
  %v16 = vld [vmem:[%s0 + $0x8] sm:$0xf]
  %v17 = vld [vmem:[%s0 + $0xc] sm:$0xf]
  %v18 = vld [vmem:[%s0 + $0x10] sm:$0xf]
  %v19 = vld [vmem:[%s0 + $0x14] sm:$0xf]
  %v20 = vld [vmem:[%s0 + $0x18] sm:$0xf]
  %v21 = vld [vmem:[%s0 + $0x1c] sm:$0xf]
  %v22 = vld [vmem:[%s1] sm:$0xf]
  %v23 = vld [vmem:[%s1 + $0x4] sm:$0xf]
  %v24 = vld [vmem:[%s1 + $0x8] sm:$0xf]
  %v25 = vld [vmem:[%s1 + $0xc] sm:$0xf]
  %v26 = vld [vmem:[%s1 + $0x10] sm:$0xf]
  %v27 = vld [vmem:[%s1 + $0x14] sm:$0xf]
  %v28 = vld [vmem:[%s1 + $0x18] sm:$0xf]
  %v29 = vld [vmem:[%s1 + $0x1c] sm:$0xf]
  %v30 = vld [vmem:[%s1 + $0x20] sm:$0xf]
  %v31 = vld [vmem:[%s1 + $0x24] sm:$0xf]
  %v32 = vld [vmem:[%s1 + $0x28] sm:$0xf]
  %v33 = vld [vmem:[%s1 + $0x2c] sm:$0xf]
  %v34 = vld [vmem:[%s1 + $0x30] sm:$0xf]
  %v35 = vld [vmem:[%s1 + $0x34] sm:$0xf]
  %v36 = vld [vmem:[%s1 + $0x38] sm:$0xf]
  %v37 = vld [vmem:[%s1 + $0x3c] sm:$0xf]
  %v38 = vld [vmem:[%s2] sm:$0xff]
  %v39 = vld [vmem:[%s2 + $0x8] sm:$0xff]
  %v40 = vld [vmem:[%s2 + $0x10] sm:$0xff]
  %v41 = vld [vmem:[%s2 + $0x18] sm:$0xff]
  %v42 = vld [vmem:[%s2 + $0x20] sm:$0xff]
  %v43 = vld [vmem:[%s2 + $0x28] sm:$0xff]
  %v44 = vld [vmem:[%s2 + $0x30] sm:$0xff]
  %v45 = vld [vmem:[%s2 + $0x38] sm:$0xff]
  %v54 = vunpack.c.l.b16 %v14
  %v55 = vunpack.c.l.b16 %v15
  %v56 = vunpack.c.l.b16 %v16
  %v57 = vunpack.c.l.b16 %v17
  %v58 = vunpack.c.l.b16 %v18
  %v59 = vunpack.c.l.b16 %v19
  %v60 = vunpack.c.l.b16 %v20
  %v61 = vunpack.c.l.b16 %v21
  %v62 = vpack.c.b16 %v55, %v54
  %v63 = vpack.c.b16 %v57, %v56
  %v64 = vpack.c.b16 %v59, %v58
  %v65 = vpack.c.b16 %v61, %v60
  %v86 = vunpack.c.l.b16 %v22
  %v87 = vunpack.c.l.b16 %v23
  %v88 = vunpack.c.l.b16 %v24
  %v89 = vunpack.c.l.b16 %v25
  %v90 = vunpack.c.l.b16 %v26
  %v91 = vunpack.c.l.b16 %v27
  %v92 = vunpack.c.l.b16 %v28
  %v93 = vunpack.c.l.b16 %v29
  %v94 = vunpack.c.l.b16 %v30
  %v95 = vunpack.c.l.b16 %v31
  %v96 = vunpack.c.l.b16 %v32
  %v97 = vunpack.c.l.b16 %v33
  %v98 = vunpack.c.l.b16 %v34
  %v99 = vunpack.c.l.b16 %v35
  %v100 = vunpack.c.l.b16 %v36
  %v101 = vunpack.c.l.b16 %v37
  %v102 = vpack.c.b16 %v87, %v86
  %v103 = vpack.c.b16 %v89, %v88
  %v104 = vpack.c.b16 %v91, %v90
  %v105 = vpack.c.b16 %v93, %v92
  %v106 = vpack.c.b16 %v95, %v94
  %v107 = vpack.c.b16 %v97, %v96
  %v108 = vpack.c.b16 %v99, %v98
  %v109 = vpack.c.b16 %v101, %v100
  %118 = vmatpush.bf16.msra.mxu0 %v109
  %119 = vmatpush.bf16.msra.mxu0 %v108
  %120 = vmatpush.bf16.msra.mxu0 %v107
  %121 = vmatpush.bf16.msra.mxu0 %v106
  %122 = vmatpush.bf16.msra.mxu0 %v105
  %123 = vmatpush.bf16.msra.mxu0 %v104
  %124 = vmatpush.bf16.msra.mxu0 %v103
  %125 = vmatpush.bf16.msra.mxu0 %v102
  %126 = vmatmul.bf16.gmra.mxu0 %v62
  %v127 = vpop.f32.mrf.mxu0
  %v128 = vadd.f32 %v38, %v127
  %v129 = vpop.f32.mrf.mxu0
  %v130 = vadd.f32 %v39, %v129
  %131 = vmatmul.bf16.gmra.mxu0 %v63
  %v132 = vpop.f32.mrf.mxu0
  %v133 = vadd.f32 %v40, %v132
  %v134 = vpop.f32.mrf.mxu0
  %v135 = vadd.f32 %v41, %v134
  %136 = vmatmul.bf16.gmra.mxu0 %v64
  %v137 = vpop.f32.mrf.mxu0
  %v138 = vadd.f32 %v42, %v137
  %v139 = vpop.f32.mrf.mxu0
  %v140 = vadd.f32 %v43, %v139
  %141 = vmatmul.bf16.gmra.mxu0 %v65
  %v142 = vpop.f32.mrf.mxu0
  %v143 = vadd.f32 %v44, %v142
  %v144 = vpop.f32.mrf.mxu0
  %v145 = vadd.f32 %v45, %v144
  %146 = vdwg.mxu0
  %147 = vst [vmem:[%s3] sm:$0xff] %v128
  %148 = vst [vmem:[%s3 + $0x8] sm:$0xff] %v130
  %149 = vst [vmem:[%s3 + $0x10] sm:$0xff] %v133
  %150 = vst [vmem:[%s3 + $0x18] sm:$0xff] %v135
  %151 = vst [vmem:[%s3 + $0x20] sm:$0xff] %v138
  %152 = vst [vmem:[%s3 + $0x28] sm:$0xff] %v140
  %153 = vst [vmem:[%s3 + $0x30] sm:$0xff] %v143
  %154 = vst [vmem:[%s3 + $0x38] sm:$0xff] %v145
  // Predicated region
  $region14: #{brainx_forward.29} parent=0 // pred_check
    _
  $region15: #{brainx_forward.29} parent=0 // pred_check_branch
    %156 = sbr.rel (0) target = $region17
  $region16: #{brainx_forward.29} parent=0 // pred_region
    _
  $region17: #{brainx_forward.29} parent=0 // pred_fallthru
    _
  // Predicated region
  $region18: #{brainx_forward.29} parent=0 // pred_check
    _
  $region19: #{brainx_forward.29} parent=0 // pred_check_branch
    %158 = sbr.rel (0) target = $region21
  $region20: #{brainx_forward.29} parent=0 // pred_region
    _
  $region21: #{brainx_forward.29} parent=0 // pred_fallthru
    _

// kernel: brainx_forward.28
$region0: #{brainx_forward.28}
  #allocation0 [shape = 'u32[]', space=smem, size = 0x4, offset = 0x4, fixed_abs, tag = 'smem constant byte address 0x4 - core index']
  #allocation1 [shape = 'u32[72,128]{1,0:T(1,128)}', space=vmem, size = 0x9000, scoped, tag = 'internal scratch']
  %s0 = inlined_call_operand.vmem [shape: bf16[2,4,32,16], index: 0, kind: input, shape index: {}]
  %s1 = inlined_call_operand.vmem [shape: bf16[2,4,64,16], index: 1, kind: input, shape index: {}]
  %s2 = inlined_call_operand.vmem [shape: bf16[2,4,64,16], index: 2, kind: input, shape index: {}]
  %s3 = inlined_call_operand.vmem [shape: bf16[2,4,32,16], index: 3, kind: output, shape index: {}]
  %s4 = sld [smem:[#allocation0]]
  $region45: #{brainx_forward.28} parent=0
    _
  %s6 = ssub.s32 1, %s4
  %s7 = scalar_select 0, %s6, %s4
  loop: start=0, step=1, limit=10
  $region2: #{brainx_forward.28} parent=0 // loop_pre_header
    _
  $region3: #{brainx_forward.28} parent=0 // loop_header
    %s9 = sphi 0, %s13
    %p10 = scmp.ge.s32.totalorder %s9, 10
    %s16 = sphi 0, %s28
    %s17 = sphi 0, %s24
    %s18 = sphi 0, %s16
    %s19 = sphi 0, %s17
    %s20 = sphi 0, %s18
    %s21 = sphi 0, %s19
    %s33 = sphi 0, %s35
    %s36 = sphi 0, %s33
    %s37 = sphi 0, %s36
    %s53 = sphi 0, %s37
    %s61 = sphi 0, %s63
    %s64 = sphi 0, %s61
    %s65 = sphi 0, %s64
    %s81 = sphi 0, %s65
    %s89 = sphi 0, %s91
    %s92 = sphi 0, %s89
    %s93 = sphi 0, %s92
    %s109 = sphi 0, %s93
    %s117 = sphi 0, %s119
    %s120 = sphi 0, %s117
    %s121 = sphi 0, %s120
    %s137 = sphi 0, %s121
  $region4: #{brainx_forward.28} parent=0 // loop_header_branch
    %12 = sbr.rel (%p10) target = $region8
  $region5: #{brainx_forward.28} parent=0 // loop_body
    %s14 = ssub.s32 %s9, 1
    %s15 = ssub.s32 %s9, 2
    %s22 = sadd.s32 1, %s17
    %p23 = scmp.ge.s32.totalorder %s22, 4
    %s24 = scalar_select %p23, 0, %s22
    %s25 = sadd.s32 1, %s16
    %s26 = scalar_select %p23, %s25, %s16
    %p27 = scmp.ge.s32.totalorder %s26, 2
    %s28 = scalar_select %p27, 0, %s26
    %s29 = ssub.s32 %s16, %s28
    %s30 = ssub.s32 %s17, %s24
    %s31 = sor.u32 %s29, %s30
    %p32 = scmp.eq.s32.totalorder %s31, 0
    %s34 = sadd.s32 %s33, 1
    %s35 = scalar_select %p32, %s33, %s34
    %p38 = pneg %p32
    %p39 = scmp.eq.s32.totalorder %s9, 7
    %p40 = por %p38, %p39
    %p41 = scmp.ne.s32.totalorder %s33, %s36
    %p42 = scmp.eq.s32.totalorder %s9, 0
    %p43 = por %p41, %p42
    %p44 = scmp.ne.s32.totalorder %s33, %s36
    %p45 = scmp.eq.s32.totalorder %s14, 7
    %p46 = por %p44, %p45
    %p47 = scmp.ne.s32.totalorder %s36, %s37
    %p48 = scmp.eq.s32.totalorder %s14, 0
    %p49 = por %p47, %p48
    %p50 = scmp.ne.s32.totalorder %s36, %s37
    %p51 = scmp.eq.s32.totalorder %s15, 7
    %p52 = por %p50, %p51
    %p54 = scmp.ne.s32.totalorder %s37, %s53
    %p55 = scmp.eq.s32.totalorder %s15, 0
    %p56 = por %p54, %p55
    %s57 = ssub.s32 %s16, %s28
    %s58 = ssub.s32 %s17, %s24
    %s59 = sor.u32 %s57, %s58
    %p60 = scmp.eq.s32.totalorder %s59, 0
    %s62 = sadd.s32 %s61, 1
    %s63 = scalar_select %p60, %s61, %s62
    %p66 = pneg %p60
    %p67 = scmp.eq.s32.totalorder %s9, 7
    %p68 = por %p66, %p67
    %p69 = scmp.ne.s32.totalorder %s61, %s64
    %p70 = scmp.eq.s32.totalorder %s9, 0
    %p71 = por %p69, %p70
    %p72 = scmp.ne.s32.totalorder %s61, %s64
    %p73 = scmp.eq.s32.totalorder %s14, 7
    %p74 = por %p72, %p73
    %p75 = scmp.ne.s32.totalorder %s64, %s65
    %p76 = scmp.eq.s32.totalorder %s14, 0
    %p77 = por %p75, %p76
    %p78 = scmp.ne.s32.totalorder %s64, %s65
    %p79 = scmp.eq.s32.totalorder %s15, 7
    %p80 = por %p78, %p79
    %p82 = scmp.ne.s32.totalorder %s65, %s81
    %p83 = scmp.eq.s32.totalorder %s15, 0
    %p84 = por %p82, %p83
    %s85 = ssub.s32 %s16, %s28
    %s86 = ssub.s32 %s17, %s24
    %s87 = sor.u32 %s85, %s86
    %p88 = scmp.eq.s32.totalorder %s87, 0
    %s90 = sadd.s32 %s89, 1
    %s91 = scalar_select %p88, %s89, %s90
    %p94 = pneg %p88
    %p95 = scmp.eq.s32.totalorder %s9, 7
    %p96 = por %p94, %p95
    %p97 = scmp.ne.s32.totalorder %s89, %s92
    %p98 = scmp.eq.s32.totalorder %s9, 0
    %p99 = por %p97, %p98
    %p100 = scmp.ne.s32.totalorder %s89, %s92
    %p101 = scmp.eq.s32.totalorder %s14, 7
    %p102 = por %p100, %p101
    %p103 = scmp.ne.s32.totalorder %s92, %s93
    %p104 = scmp.eq.s32.totalorder %s14, 0
    %p105 = por %p103, %p104
    %p106 = scmp.ne.s32.totalorder %s92, %s93
    %p107 = scmp.eq.s32.totalorder %s15, 7
    %p108 = por %p106, %p107
    %p110 = scmp.ne.s32.totalorder %s93, %s109
    %p111 = scmp.eq.s32.totalorder %s15, 0
    %p112 = por %p110, %p111
    %s113 = ssub.s32 %s16, %s28
    %s114 = ssub.s32 %s17, %s24
    %s115 = sor.u32 %s113, %s114
    %p116 = scmp.eq.s32.totalorder %s115, 0
    %s118 = sadd.s32 %s117, 1
    %s119 = scalar_select %p116, %s117, %s118
    %p122 = pneg %p116
    %p123 = scmp.eq.s32.totalorder %s9, 7
    %p124 = por %p122, %p123
    %p125 = scmp.ne.s32.totalorder %s117, %s120
    %p126 = scmp.eq.s32.totalorder %s9, 0
    %p127 = por %p125, %p126
    %p128 = scmp.ne.s32.totalorder %s117, %s120
    %p129 = scmp.eq.s32.totalorder %s14, 7
    %p130 = por %p128, %p129
    %p131 = scmp.ne.s32.totalorder %s120, %s121
    %p132 = scmp.eq.s32.totalorder %s14, 0
    %p133 = por %p131, %p132
    %p134 = scmp.ne.s32.totalorder %s120, %s121
    %p135 = scmp.eq.s32.totalorder %s15, 7
    %p136 = por %p134, %p135
    %p138 = scmp.ne.s32.totalorder %s121, %s137
    %p139 = scmp.eq.s32.totalorder %s15, 0
    %p140 = por %p138, %p139
    %p141 = scmp.le.s32.totalorder 1, %s9
    %p142 = scmp.lt.s32.totalorder %s9, 9
    %p143 = pnand %p141, %p142
    %p144 = pneg %p143
    // Predicated region
    $region9: #{brainx_forward.28} parent=5 // pred_check
      _
    $region10: #{brainx_forward.28} parent=5 // pred_check_branch
      %146 = sbr.rel (%p143) target = $region12
    $region11: #{brainx_forward.28} parent=5 // pred_region
      %s147 = ssub.s32 %s9, 1
    $region12: #{brainx_forward.28} parent=5 // pred_fallthru
      _
    %p148 = scmp.lt.s32.totalorder %s9, 8
    // Predicated region
    $region13: #{brainx_forward.28} parent=5 // pred_check
      %p149 = pneg %p148
    $region14: #{brainx_forward.28} parent=5 // pred_check_branch
      %151 = sbr.rel (%p149) target = $region16
    $region15: #{brainx_forward.28} parent=5 // pred_region
      // Predicated region
      $region17: #{brainx_forward.28} parent=15 // pred_check
        %p152 = pneg %p43
      $region18: #{brainx_forward.28} parent=15 // pred_check_branch
        %154 = sbr.rel (%p152) target = $region20
      $region19: #{brainx_forward.28} parent=15 // pred_region
        %p155 = scmp.lt.s32.totalorder %s16, 1
        %s156 = scalar_select %p155, %s16, 1
        %p157 = scmp.lt.s32.totalorder %s17, 3
        %s158 = scalar_select %p157, %s17, 3
        %s159 = smul.addr %s158, 4
        %s160 = smul.addr %s156, 16
        %s161 = sadd.s32 %s159, %s160
        %s162 = smul.addr %s161, 4
        %s163 = scalar_lea.vmem %s0, %s162
      $region20: #{brainx_forward.28} parent=15 // pred_fallthru
        _
      // Predicated region
      $region21: #{brainx_forward.28} parent=15 // pred_check
        %p164 = pneg %p71
      $region22: #{brainx_forward.28} parent=15 // pred_check_branch
        %166 = sbr.rel (%p164) target = $region24
      $region23: #{brainx_forward.28} parent=15 // pred_region
        %p167 = scmp.lt.s32.totalorder %s16, 1
        %s168 = scalar_select %p167, %s16, 1
        %p169 = scmp.lt.s32.totalorder %s17, 3
        %s170 = scalar_select %p169, %s17, 3
        %s171 = smul.addr %s170, 8
        %s172 = smul.addr %s168, 32
        %s173 = sadd.s32 %s171, %s172
        %s174 = smul.addr %s173, 4
        %s175 = scalar_lea.vmem %s1, %s174
      $region24: #{brainx_forward.28} parent=15 // pred_fallthru
        _
      // Predicated region
      $region25: #{brainx_forward.28} parent=15 // pred_check
        %p176 = pneg %p99
      $region26: #{brainx_forward.28} parent=15 // pred_check_branch
        %178 = sbr.rel (%p176) target = $region28
      $region27: #{brainx_forward.28} parent=15 // pred_region
        %p179 = scmp.lt.s32.totalorder %s16, 1
        %s180 = scalar_select %p179, %s16, 1
        %p181 = scmp.lt.s32.totalorder %s17, 3
        %s182 = scalar_select %p181, %s17, 3
        %s183 = smul.addr %s182, 8
        %s184 = smul.addr %s180, 32
        %s185 = sadd.s32 %s183, %s184
        %s186 = smul.addr %s185, 4
        %s187 = scalar_lea.vmem %s2, %s186
      $region28: #{brainx_forward.28} parent=15 // pred_fallthru
        _
    $region16: #{brainx_forward.28} parent=5 // pred_fallthru
      _
    %p188 = scmp.le.s32.totalorder 1, %s9
    %p189 = scmp.lt.s32.totalorder %s9, 9
    %p190 = pnand %p188, %p189
    %p191 = pneg %p190
    // Predicated region
    $region29: #{brainx_forward.28} parent=5 // pred_check
      _
    $region30: #{brainx_forward.28} parent=5 // pred_check_branch
      %193 = sbr.rel (%p190) target = $region32
    $region31: #{brainx_forward.28} parent=5 // pred_region
      %s194 = ssub.s32 %s9, 1
      %p195 = scmp.lt.s32.totalorder %s18, 1
      %s196 = scalar_select %p195, %s18, 1
      %p197 = scmp.lt.s32.totalorder %s19, 3
      %s198 = scalar_select %p197, %s19, 3
      %s199 = smul.addr %s198, 4
      %s200 = smul.addr %s196, 16
      %s201 = sadd.s32 %s199, %s200
      %s202 = smul.addr %s201, 4
      %s203 = scalar_lea.vmem %s0, %s202
      %p204 = pneg %p49
      %p205 = pneg %p46
      %p206 = scmp.lt.s32.totalorder %s18, 1
      %s207 = scalar_select %p206, %s18, 1
      %p208 = scmp.lt.s32.totalorder %s19, 3
      %s209 = scalar_select %p208, %s19, 3
      %s210 = smul.addr %s209, 8
      %s211 = smul.addr %s207, 32
      %s212 = sadd.s32 %s210, %s211
      %s213 = smul.addr %s212, 4
      %s214 = scalar_lea.vmem %s1, %s213
      %p215 = pneg %p77
      %p216 = pneg %p74
      %p217 = scmp.lt.s32.totalorder %s18, 1
      %s218 = scalar_select %p217, %s18, 1
      %p219 = scmp.lt.s32.totalorder %s19, 3
      %s220 = scalar_select %p219, %s19, 3
      %s221 = smul.addr %s220, 8
      %s222 = smul.addr %s218, 32
      %s223 = sadd.s32 %s221, %s222
      %s224 = smul.addr %s223, 4
      %s225 = scalar_lea.vmem %s2, %s224
      %p226 = pneg %p105
      %p227 = pneg %p102
      %p228 = pneg %p133
      %p229 = pneg %p130
      %p230 = scmp.lt.s32.totalorder %s18, 1
      %s231 = scalar_select %p230, %s18, 1
      %p232 = scmp.lt.s32.totalorder %s19, 3
      %s233 = scalar_select %p232, %s19, 3
      %s234 = smul.addr %s233, 4
      %s235 = smul.addr %s231, 16
      %s236 = sadd.s32 %s234, %s235
      %s237 = smul.addr %s236, 4
      %s238 = scalar_lea.vmem %s3, %s237
      %p239 = scmp.lt.s32.totalorder %s18, 1
      %s240 = scalar_select %p239, %s18, 1
      %p241 = scmp.lt.s32.totalorder %s19, 3
      %s242 = scalar_select %p241, %s19, 3
      %s243 = smul.addr %s242, 4
      %s244 = smul.addr %s240, 16
      %s245 = sadd.s32 %s243, %s244
      %s246 = smul.addr %s245, 4
      %s247 = scalar_lea.vmem %s0, %s246
      %p248 = scmp.lt.s32.totalorder %s18, 1
      %s249 = scalar_select %p248, %s18, 1
      %p250 = scmp.lt.s32.totalorder %s19, 3
      %s251 = scalar_select %p250, %s19, 3
      %s252 = smul.addr %s251, 8
      %s253 = smul.addr %s249, 32
      %s254 = sadd.s32 %s252, %s253
      %s255 = smul.addr %s254, 4
      %s256 = scalar_lea.vmem %s1, %s255
      %p257 = scmp.lt.s32.totalorder %s18, 1
      %s258 = scalar_select %p257, %s18, 1
      %p259 = scmp.lt.s32.totalorder %s19, 3
      %s260 = scalar_select %p259, %s19, 3
      %s261 = smul.addr %s260, 8
      %s262 = smul.addr %s258, 32
      %s263 = sadd.s32 %s261, %s262
      %s264 = smul.addr %s263, 4
      %s265 = scalar_lea.vmem %s2, %s264
      %p266 = scmp.lt.s32.totalorder %s18, 1
      %s267 = scalar_select %p266, %s18, 1
      %p268 = scmp.lt.s32.totalorder %s19, 3
      %s269 = scalar_select %p268, %s19, 3
      %s270 = smul.addr %s269, 4
      %s271 = smul.addr %s267, 16
      %s272 = sadd.s32 %s270, %s271
      %s273 = smul.addr %s272, 4
      %s274 = scalar_lea.vmem %s3, %s273
      %v276 = vld [vmem:[%s247] sm:$0xf]
      %v277 = vld [vmem:[%s247 + $0x4] sm:$0xf]
      %v278 = vld [vmem:[%s247 + $0x8] sm:$0xf]
      %v279 = vld [vmem:[%s247 + $0xc] sm:$0xf]
      %v280 = vld [vmem:[%s256] sm:$0xf]
      %v281 = vld [vmem:[%s256 + $0x4] sm:$0xf]
      %v282 = vld [vmem:[%s256 + $0x8] sm:$0xf]
      %v283 = vld [vmem:[%s256 + $0xc] sm:$0xf]
      %v284 = vld [vmem:[%s256 + $0x10] sm:$0xf]
      %v285 = vld [vmem:[%s256 + $0x14] sm:$0xf]
      %v286 = vld [vmem:[%s256 + $0x18] sm:$0xf]
      %v287 = vld [vmem:[%s256 + $0x1c] sm:$0xf]
      %v288 = vld [vmem:[%s265] sm:$0xf]
      %v289 = vld [vmem:[%s265 + $0x4] sm:$0xf]
      %v290 = vld [vmem:[%s265 + $0x8] sm:$0xf]
      %v291 = vld [vmem:[%s265 + $0xc] sm:$0xf]
      %v292 = vld [vmem:[%s265 + $0x10] sm:$0xf]
      %v293 = vld [vmem:[%s265 + $0x14] sm:$0xf]
      %v294 = vld [vmem:[%s265 + $0x18] sm:$0xf]
      %v295 = vld [vmem:[%s265 + $0x1c] sm:$0xf]
      %v300 = vunpack.c.l.b16 %v276
      %v301 = vunpack.c.l.b16 %v277
      %v302 = vunpack.c.l.b16 %v278
      %v303 = vunpack.c.l.b16 %v279
      %v304 = vpack.c.b16 %v301, %v300
      %v305 = vpack.c.b16 %v303, %v302
      %v314 = vunpack.c.l.b16 %v280
      %v315 = vunpack.c.l.b16 %v281
      %v316 = vunpack.c.l.b16 %v282
      %v317 = vunpack.c.l.b16 %v283
      %v318 = vunpack.c.l.b16 %v284
      %v319 = vunpack.c.l.b16 %v285
      %v320 = vunpack.c.l.b16 %v286
      %v321 = vunpack.c.l.b16 %v287
      %v322 = vpack.c.b16 %v315, %v314
      %v323 = vpack.c.b16 %v317, %v316
      %v324 = vpack.c.b16 %v319, %v318
      %v325 = vpack.c.b16 %v321, %v320
      %vm326 = vcmask 130048
      %v328 = vsel %vm326, %v304, 0
      %v331 = vsel %vm326, %v305, 0
      %v334 = vsel %vm326, %v322, 0
      %v337 = vsel %vm326, %v323, 0
      %v340 = vsel %vm326, %v324, 0
      %v343 = vsel %vm326, %v325, 0
      %345 = vmatpush.bf16.xpose.msra.mxu0 0
      %346 = vmatpush.bf16.xpose.msra.mxu0 0
      %347 = vmatpush.bf16.xpose.msra.mxu0 0
      %348 = vmatpush.bf16.xpose.msra.mxu0 0
      %349 = vmatpush.bf16.xpose.msra.mxu0 %v343
      %350 = vmatpush.bf16.xpose.msra.mxu0 %v340
      %351 = vmatpush.bf16.xpose.msra.mxu0 %v337
      %352 = vmatpush.bf16.xpose.msra.mxu0 %v334
      %353 = vmatmul.bf16.gmra.mxu0 %v328
      %v354 = vpop.f32.mrf.mxu0
      %v355 = vadd.f32 0.0, %v354
      %v356 = vpop.f32.mrf.mxu0
      %v357 = vadd.f32 0.0, %v356
      %358 = vmatmul.bf16.gmra.mxu0 %v331
      %v359 = vpop.f32.mrf.mxu0
      %v360 = vadd.f32 0.0, %v359
      %v361 = vpop.f32.mrf.mxu0
      %v362 = vadd.f32 0.0, %v361
      %363 = vdwg.mxu0
      %v364 = vmul.f32 %v355, 0.25
      %v365 = vmul.f32 %v357, 0.25
      %v366 = vmul.f32 %v360, 0.25
      %v367 = vmul.f32 %v362, 0.25
      %vm368 = vcmask 523264
      %v369 = vsel %vm368, %v364, -inf
      %370 = vmax.xlane.f32.xlu0 %v369
      %v371 = vpop.xlane.xlu0 %370
      %v372 = vsel %vm368, %v365, -inf
      %373 = vmax.xlane.f32.xlu0 %v372
      %v374 = vpop.xlane.xlu0 %373
      %v375 = vsel %vm368, %v366, -inf
      %376 = vmax.xlane.f32.xlu0 %v375
      %v377 = vpop.xlane.xlu0 %376
      %v378 = vsel %vm368, %v367, -inf
      %379 = vmax.xlane.f32.xlu0 %v378
      %v380 = vpop.xlane.xlu0 %379
      %v381 = vsub.f32 %v364, %v371
      %v382 = vsub.f32 %v365, %v374
      %v383 = vsub.f32 %v366, %v377
      %v384 = vsub.f32 %v367, %v380
      %v385 = vmul.f32 %v381, 1.442695
      %v386 = vpow.pop %v385
      %v387 = vmul.f32 %v382, 1.442695
      %v388 = vpow.pop %v387
      %v389 = vmul.f32 %v383, 1.442695
      %v390 = vpow.pop %v389
      %v391 = vmul.f32 %v384, 1.442695
      %v392 = vpow.pop %v391
      %v393 = vsel %vm368, %v386, 0.0
      %394 = vadd.xlane.f32.xlu0 %v393
      %v395 = vpop.xlane.xlu0 %394
      %v396 = vsel %vm368, %v388, 0.0
      %397 = vadd.xlane.f32.xlu0 %v396
      %v398 = vpop.xlane.xlu0 %397
      %v399 = vsel %vm368, %v390, 0.0
      %400 = vadd.xlane.f32.xlu0 %v399
      %v401 = vpop.xlane.xlu0 %400
      %v402 = vsel %vm368, %v392, 0.0
      %403 = vadd.xlane.f32.xlu0 %v402
      %v404 = vpop.xlane.xlu0 %403
      %v405 = vrcp.pop %v395
      %v406 = vrcp.pop %v398
      %v407 = vrcp.pop %v401
      %v408 = vrcp.pop %v404
      %v409 = vmul.f32 %v386, %v405
      %v410 = vmul.f32 %v388, %v406
      %v411 = vmul.f32 %v390, %v407
      %v412 = vmul.f32 %v392, %v408
      %v413 = vpack.c.bf16 %v410, %v409
      %v414 = vpack.c.bf16 %v412, %v411
      %v423 = vunpack.c.l.b16 %v288
      %v424 = vunpack.c.l.b16 %v289
      %v425 = vunpack.c.l.b16 %v290
      %v426 = vunpack.c.l.b16 %v291
      %v427 = vunpack.c.l.b16 %v292
      %v428 = vunpack.c.l.b16 %v293
      %v429 = vunpack.c.l.b16 %v294
      %v430 = vunpack.c.l.b16 %v295
      %v431 = vpack.c.b16 %v424, %v423
      %v432 = vpack.c.b16 %v426, %v425
      %v433 = vpack.c.b16 %v428, %v427
      %v434 = vpack.c.b16 %v430, %v429
      %v440 = vsel %vm368, %v413, 0
      %v443 = vsel %vm368, %v414, 0
      %445 = vmatpush.bf16.msra.mxu0 0
      %446 = vmatpush.bf16.msra.mxu0 0
      %447 = vmatpush.bf16.msra.mxu0 0
      %448 = vmatpush.bf16.msra.mxu0 0
      %449 = vmatpush.bf16.msra.mxu0 %v434
      %450 = vmatpush.bf16.msra.mxu0 %v433
      %451 = vmatpush.bf16.msra.mxu0 %v432
      %452 = vmatpush.bf16.msra.mxu0 %v431
      %453 = vmatmul.bf16.gmra.mxu0 %v440
      %v454 = vpop.f32.mrf.mxu0
      %v455 = vadd.f32 0.0, %v454
      %v456 = vpop.f32.mrf.mxu0
      %v457 = vadd.f32 0.0, %v456
      %458 = vmatmul.bf16.gmra.mxu0 %v443
      %v459 = vpop.f32.mrf.mxu0
      %v460 = vadd.f32 0.0, %v459
      %v461 = vpop.f32.mrf.mxu0
      %v462 = vadd.f32 0.0, %v461
      %463 = vdwg.mxu0
      %v464 = vpack.c.bf16 %v455, %v455
      %v465 = vpack.c.bf16 %v457, %v457
      %v466 = vpack.c.bf16 %v460, %v460
      %v467 = vpack.c.bf16 %v462, %v462
      %vm468 = vcmask 125952
      %469 = vst.msk [vmem:[%s274] sm:$0xf] %vm468, %v464
      %470 = vst.msk [vmem:[%s274 + $0x4] sm:$0xf] %vm468, %v465
      %471 = vst.msk [vmem:[%s274 + $0x8] sm:$0xf] %vm468, %v466
      %472 = vst.msk [vmem:[%s274 + $0xc] sm:$0xf] %vm468, %v467
      %p473 = scmp.lt.s32.totalorder %s18, 1
      %s474 = scalar_select %p473, %s18, 1
      %p475 = scmp.lt.s32.totalorder %s19, 3
      %s476 = scalar_select %p475, %s19, 3
      %s477 = smul.addr %s476, 4
      %s478 = smul.addr %s474, 16
      %s479 = sadd.s32 %s477, %s478
      %s480 = smul.addr %s479, 4
      %s481 = scalar_lea.vmem %s3, %s480
      // Predicated region
      $region33: #{brainx_forward.28} parent=31 // pred_check
        %p482 = pneg %p130
      $region34: #{brainx_forward.28} parent=31 // pred_check_branch
        %484 = sbr.rel (%p482) target = $region36
      $region35: #{brainx_forward.28} parent=31 // pred_region
        _
      $region36: #{brainx_forward.28} parent=31 // pred_fallthru
        _
    $region32: #{brainx_forward.28} parent=5 // pred_fallthru
      _
    %p485 = scmp.le.s32.totalorder 2, %s9
    // Predicated region
    $region37: #{brainx_forward.28} parent=5 // pred_check
      %p486 = pneg %p485
    $region38: #{brainx_forward.28} parent=5 // pred_check_branch
      %488 = sbr.rel (%p486) target = $region40
    $region39: #{brainx_forward.28} parent=5 // pred_region
      %s489 = ssub.s32 %s9, 2
      // Predicated region
      $region41: #{brainx_forward.28} parent=39 // pred_check
        %p490 = pneg %p136
      $region42: #{brainx_forward.28} parent=39 // pred_check_branch
        %492 = sbr.rel (%p490) target = $region44
      $region43: #{brainx_forward.28} parent=39 // pred_region
        %p493 = scmp.lt.s32.totalorder %s20, 1
        %s494 = scalar_select %p493, %s20, 1
        %p495 = scmp.lt.s32.totalorder %s21, 3
        %s496 = scalar_select %p495, %s21, 3
        %s497 = smul.addr %s496, 4
        %s498 = smul.addr %s494, 16
        %s499 = sadd.s32 %s497, %s498
        %s500 = smul.addr %s499, 4
        %s501 = scalar_lea.vmem %s3, %s500
      $region44: #{brainx_forward.28} parent=39 // pred_fallthru
        _
    $region40: #{brainx_forward.28} parent=5 // pred_fallthru
      _
  $region6: #{brainx_forward.28} parent=0 // loop_footer
    %s13 = sadd.s32 1, %s9
  $region7: #{brainx_forward.28} parent=0 // loop_footer_branch
    %8 = sbr.rel target = $region3
  $region8: #{brainx_forward.28} parent=0 // loop_exit
    _

// kernel: brainx_forward.31
$region0: #{brainx_forward.31}
  #allocation0 [shape = 'u32[]', space=smem, size = 0x4, offset = 0x4, fixed_abs, tag = 'smem constant byte address 0x4 - core index']
  #allocation1 [shape = 'u32[72,128]{1,0:T(1,128)}', space=vmem, size = 0x9000, scoped, tag = 'internal scratch']
  %s0 = inlined_call_operand.vmem [shape: bf16[64,128], index: 0, kind: input, shape index: {}]
  %s1 = inlined_call_operand.vmem [shape: bf16[128,512], index: 1, kind: input, shape index: {}]
  %s2 = inlined_call_operand.vmem [shape: bf16[64,512], index: 2, kind: output, shape index: {}]
  %s3 = sld [smem:[#allocation0]]
  $region18: #{brainx_forward.31} parent=0
    _
  %s5 = ssub.s32 1, %s3
  %s6 = scalar_select 0, %s5, %s3
  // Predicated region
  $region2: #{brainx_forward.31} parent=0 // pred_check
    _
  $region3: #{brainx_forward.31} parent=0 // pred_check_branch
    %8 = sbr.rel (0) target = $region5
  $region4: #{brainx_forward.31} parent=0 // pred_region
    _
  $region5: #{brainx_forward.31} parent=0 // pred_fallthru
    _
  // Predicated region
  $region6: #{brainx_forward.31} parent=0 // pred_check
    _
  $region7: #{brainx_forward.31} parent=0 // pred_check_branch
    %10 = sbr.rel (0) target = $region9
  $region8: #{brainx_forward.31} parent=0 // pred_region
    _
  $region9: #{brainx_forward.31} parent=0 // pred_fallthru
    _
  %v11 = vld [vmem:[%s0] sm:$0xf]
  %v12 = vld [vmem:[%s0 + $0x4] sm:$0xf]
  %v13 = vld [vmem:[%s0 + $0x8] sm:$0xf]
  %v14 = vld [vmem:[%s0 + $0xc] sm:$0xf]
  %v15 = vld [vmem:[%s0 + $0x10] sm:$0xf]
  %v16 = vld [vmem:[%s0 + $0x14] sm:$0xf]
  %v17 = vld [vmem:[%s0 + $0x18] sm:$0xf]
  %v18 = vld [vmem:[%s0 + $0x1c] sm:$0xf]
  %v19 = vld [vmem:[%s1] sm:$0xff]
  %v20 = vld [vmem:[%s1 + $0x8] sm:$0xff]
  %v21 = vld [vmem:[%s1 + $0x10] sm:$0xff]
  %v22 = vld [vmem:[%s1 + $0x18] sm:$0xff]
  %v23 = vld [vmem:[%s1 + $0x20] sm:$0xff]
  %v24 = vld [vmem:[%s1 + $0x28] sm:$0xff]
  %v25 = vld [vmem:[%s1 + $0x30] sm:$0xff]
  %v26 = vld [vmem:[%s1 + $0x38] sm:$0xff]
  %v27 = vld [vmem:[%s1 + $0x40] sm:$0xff]
  %v28 = vld [vmem:[%s1 + $0x48] sm:$0xff]
  %v29 = vld [vmem:[%s1 + $0x50] sm:$0xff]
  %v30 = vld [vmem:[%s1 + $0x58] sm:$0xff]
  %v31 = vld [vmem:[%s1 + $0x60] sm:$0xff]
  %v32 = vld [vmem:[%s1 + $0x68] sm:$0xff]
  %v33 = vld [vmem:[%s1 + $0x70] sm:$0xff]
  %v34 = vld [vmem:[%s1 + $0x78] sm:$0xff]
  %v35 = vld [vmem:[%s1 + $0x80] sm:$0xff]
  %v36 = vld [vmem:[%s1 + $0x88] sm:$0xff]
  %v37 = vld [vmem:[%s1 + $0x90] sm:$0xff]
  %v38 = vld [vmem:[%s1 + $0x98] sm:$0xff]
  %v39 = vld [vmem:[%s1 + $0xa0] sm:$0xff]
  %v40 = vld [vmem:[%s1 + $0xa8] sm:$0xff]
  %v41 = vld [vmem:[%s1 + $0xb0] sm:$0xff]
  %v42 = vld [vmem:[%s1 + $0xb8] sm:$0xff]
  %v43 = vld [vmem:[%s1 + $0xc0] sm:$0xff]
  %v44 = vld [vmem:[%s1 + $0xc8] sm:$0xff]
  %v45 = vld [vmem:[%s1 + $0xd0] sm:$0xff]
  %v46 = vld [vmem:[%s1 + $0xd8] sm:$0xff]
  %v47 = vld [vmem:[%s1 + $0xe0] sm:$0xff]
  %v48 = vld [vmem:[%s1 + $0xe8] sm:$0xff]
  %v49 = vld [vmem:[%s1 + $0xf0] sm:$0xff]
  %v50 = vld [vmem:[%s1 + $0xf8] sm:$0xff]
  %v59 = vunpack.c.l.b16 %v11
  %v60 = vunpack.c.l.b16 %v12
  %v61 = vunpack.c.l.b16 %v13
  %v62 = vunpack.c.l.b16 %v14
  %v63 = vunpack.c.l.b16 %v15
  %v64 = vunpack.c.l.b16 %v16
  %v65 = vunpack.c.l.b16 %v17
  %v66 = vunpack.c.l.b16 %v18
  %v67 = vpack.c.b16 %v60, %v59
  %v68 = vpack.c.b16 %v62, %v61
  %v69 = vpack.c.b16 %v64, %v63
  %v70 = vpack.c.b16 %v66, %v65
  %v107 = vunpack.c.l.b16 %v19
  %v108 = vunpack.c.h.b16 %v19
  %v109 = vunpack.c.l.b16 %v20
  %v110 = vunpack.c.h.b16 %v20
  %v111 = vunpack.c.l.b16 %v21
  %v112 = vunpack.c.h.b16 %v21
  %v113 = vunpack.c.l.b16 %v22
  %v114 = vunpack.c.h.b16 %v22
  %v115 = vunpack.c.l.b16 %v23
  %v116 = vunpack.c.h.b16 %v23
  %v117 = vunpack.c.l.b16 %v24
  %v118 = vunpack.c.h.b16 %v24
  %v119 = vunpack.c.l.b16 %v25
  %v120 = vunpack.c.h.b16 %v25
  %v121 = vunpack.c.l.b16 %v26
  %v122 = vunpack.c.h.b16 %v26
  %v123 = vunpack.c.l.b16 %v27
  %v124 = vunpack.c.h.b16 %v27
  %v125 = vunpack.c.l.b16 %v28
  %v126 = vunpack.c.h.b16 %v28
  %v127 = vunpack.c.l.b16 %v29
  %v128 = vunpack.c.h.b16 %v29
  %v129 = vunpack.c.l.b16 %v30
  %v130 = vunpack.c.h.b16 %v30
  %v131 = vunpack.c.l.b16 %v31
  %v132 = vunpack.c.h.b16 %v31
  %v133 = vunpack.c.l.b16 %v32
  %v134 = vunpack.c.h.b16 %v32
  %v135 = vunpack.c.l.b16 %v33
  %v136 = vunpack.c.h.b16 %v33
  %v137 = vunpack.c.l.b16 %v34
  %v138 = vunpack.c.h.b16 %v34
  %v139 = vunpack.c.l.b16 %v35
  %v140 = vunpack.c.h.b16 %v35
  %v141 = vunpack.c.l.b16 %v36
  %v142 = vunpack.c.h.b16 %v36
  %v143 = vunpack.c.l.b16 %v37
  %v144 = vunpack.c.h.b16 %v37
  %v145 = vunpack.c.l.b16 %v38
  %v146 = vunpack.c.h.b16 %v38
  %v147 = vunpack.c.l.b16 %v39
  %v148 = vunpack.c.h.b16 %v39
  %v149 = vunpack.c.l.b16 %v40
  %v150 = vunpack.c.h.b16 %v40
  %v151 = vunpack.c.l.b16 %v41
  %v152 = vunpack.c.h.b16 %v41
  %v153 = vunpack.c.l.b16 %v42
  %v154 = vunpack.c.h.b16 %v42
  %v155 = vunpack.c.l.b16 %v43
  %v156 = vunpack.c.h.b16 %v43
  %v157 = vunpack.c.l.b16 %v44
  %v158 = vunpack.c.h.b16 %v44
  %v159 = vunpack.c.l.b16 %v45
  %v160 = vunpack.c.h.b16 %v45
  %v161 = vunpack.c.l.b16 %v46
  %v162 = vunpack.c.h.b16 %v46
  %v163 = vunpack.c.l.b16 %v47
  %v164 = vunpack.c.h.b16 %v47
  %v165 = vunpack.c.l.b16 %v48
  %v166 = vunpack.c.h.b16 %v48
  %v167 = vunpack.c.l.b16 %v49
  %v168 = vunpack.c.h.b16 %v49
  %v169 = vunpack.c.l.b16 %v50
  %v170 = vunpack.c.h.b16 %v50
  %v171 = vpack.c.b16 %v111, %v107
  %v172 = vpack.c.b16 %v112, %v108
  %v173 = vpack.c.b16 %v113, %v109
  %v174 = vpack.c.b16 %v114, %v110
  %v175 = vpack.c.b16 %v119, %v115
  %v176 = vpack.c.b16 %v120, %v116
  %v177 = vpack.c.b16 %v121, %v117
  %v178 = vpack.c.b16 %v122, %v118
  %v179 = vpack.c.b16 %v127, %v123
  %v180 = vpack.c.b16 %v128, %v124
  %v181 = vpack.c.b16 %v129, %v125
  %v182 = vpack.c.b16 %v130, %v126
  %v183 = vpack.c.b16 %v135, %v131
  %v184 = vpack.c.b16 %v136, %v132
  %v185 = vpack.c.b16 %v137, %v133
  %v186 = vpack.c.b16 %v138, %v134
  %v187 = vpack.c.b16 %v143, %v139
  %v188 = vpack.c.b16 %v144, %v140
  %v189 = vpack.c.b16 %v145, %v141
  %v190 = vpack.c.b16 %v146, %v142
  %v191 = vpack.c.b16 %v151, %v147
  %v192 = vpack.c.b16 %v152, %v148
  %v193 = vpack.c.b16 %v153, %v149
  %v194 = vpack.c.b16 %v154, %v150
  %v195 = vpack.c.b16 %v159, %v155
  %v196 = vpack.c.b16 %v160, %v156
  %v197 = vpack.c.b16 %v161, %v157
  %v198 = vpack.c.b16 %v162, %v158
  %v199 = vpack.c.b16 %v167, %v163
  %v200 = vpack.c.b16 %v168, %v164
  %v201 = vpack.c.b16 %v169, %v165
  %v202 = vpack.c.b16 %v170, %v166
  %235 = vmatpush.bf16.msra.mxu0 %v199
  %236 = vmatpush.bf16.msra.mxu0 %v195
  %237 = vmatpush.bf16.msra.mxu0 %v191
  %238 = vmatpush.bf16.msra.mxu0 %v187
  %239 = vmatpush.bf16.msra.mxu0 %v183
  %240 = vmatpush.bf16.msra.mxu0 %v179
  %241 = vmatpush.bf16.msra.mxu0 %v175
  %242 = vmatpush.bf16.msra.mxu0 %v171
  %243 = vmatmul.bf16.gmra.mxu0 %v67
  %v244 = vpop.f32.mrf.mxu0
  %v245 = vadd.f32 0.0, %v244
  %v246 = vpop.f32.mrf.mxu0
  %v247 = vadd.f32 0.0, %v246
  %248 = vmatmul.bf16.gmra.mxu0 %v68
  %v249 = vpop.f32.mrf.mxu0
  %v250 = vadd.f32 0.0, %v249
  %v251 = vpop.f32.mrf.mxu0
  %v252 = vadd.f32 0.0, %v251
  %253 = vmatmul.bf16.gmra.mxu0 %v69
  %v254 = vpop.f32.mrf.mxu0
  %v255 = vadd.f32 0.0, %v254
  %v256 = vpop.f32.mrf.mxu0
  %v257 = vadd.f32 0.0, %v256
  %258 = vmatmul.bf16.gmra.mxu0 %v70
  %v259 = vpop.f32.mrf.mxu0
  %v260 = vadd.f32 0.0, %v259
  %v261 = vpop.f32.mrf.mxu0
  %v262 = vadd.f32 0.0, %v261
  %263 = vdwg.mxu0
  %264 = vmatpush.bf16.msra.mxu0 %v200
  %265 = vmatpush.bf16.msra.mxu0 %v196
  %266 = vmatpush.bf16.msra.mxu0 %v192
  %267 = vmatpush.bf16.msra.mxu0 %v188
  %268 = vmatpush.bf16.msra.mxu0 %v184
  %269 = vmatpush.bf16.msra.mxu0 %v180
  %270 = vmatpush.bf16.msra.mxu0 %v176
  %271 = vmatpush.bf16.msra.mxu0 %v172
  %272 = vmatmul.bf16.gmra.mxu0 %v67
  %v273 = vpop.f32.mrf.mxu0
  %v274 = vadd.f32 0.0, %v273
  %v275 = vpop.f32.mrf.mxu0
  %v276 = vadd.f32 0.0, %v275
  %277 = vmatmul.bf16.gmra.mxu0 %v68
  %v278 = vpop.f32.mrf.mxu0
  %v279 = vadd.f32 0.0, %v278
  %v280 = vpop.f32.mrf.mxu0
  %v281 = vadd.f32 0.0, %v280
  %282 = vmatmul.bf16.gmra.mxu0 %v69
  %v283 = vpop.f32.mrf.mxu0
  %v284 = vadd.f32 0.0, %v283
  %v285 = vpop.f32.mrf.mxu0
  %v286 = vadd.f32 0.0, %v285
  %287 = vmatmul.bf16.gmra.mxu0 %v70
  %v288 = vpop.f32.mrf.mxu0
  %v289 = vadd.f32 0.0, %v288
  %v290 = vpop.f32.mrf.mxu0
  %v291 = vadd.f32 0.0, %v290
  %292 = vdwg.mxu0
  %293 = vmatpush.bf16.msra.mxu0 %v201
  %294 = vmatpush.bf16.msra.mxu0 %v197
  %295 = vmatpush.bf16.msra.mxu0 %v193
  %296 = vmatpush.bf16.msra.mxu0 %v189
  %297 = vmatpush.bf16.msra.mxu0 %v185
  %298 = vmatpush.bf16.msra.mxu0 %v181
  %299 = vmatpush.bf16.msra.mxu0 %v177
  %300 = vmatpush.bf16.msra.mxu0 %v173
  %301 = vmatmul.bf16.gmra.mxu0 %v67
  %v302 = vpop.f32.mrf.mxu0
  %v303 = vadd.f32 0.0, %v302
  %v304 = vpop.f32.mrf.mxu0
  %v305 = vadd.f32 0.0, %v304
  %306 = vmatmul.bf16.gmra.mxu0 %v68
  %v307 = vpop.f32.mrf.mxu0
  %v308 = vadd.f32 0.0, %v307
  %v309 = vpop.f32.mrf.mxu0
  %v310 = vadd.f32 0.0, %v309
  %311 = vmatmul.bf16.gmra.mxu0 %v69
  %v312 = vpop.f32.mrf.mxu0
  %v313 = vadd.f32 0.0, %v312
  %v314 = vpop.f32.mrf.mxu0
  %v315 = vadd.f32 0.0, %v314
  %316 = vmatmul.bf16.gmra.mxu0 %v70
  %v317 = vpop.f32.mrf.mxu0
  %v318 = vadd.f32 0.0, %v317
  %v319 = vpop.f32.mrf.mxu0
  %v320 = vadd.f32 0.0, %v319
  %321 = vdwg.mxu0
  %322 = vmatpush.bf16.msra.mxu0 %v202
  %323 = vmatpush.bf16.msra.mxu0 %v198
  %324 = vmatpush.bf16.msra.mxu0 %v194
  %325 = vmatpush.bf16.msra.mxu0 %v190
  %326 = vmatpush.bf16.msra.mxu0 %v186
  %327 = vmatpush.bf16.msra.mxu0 %v182
  %328 = vmatpush.bf16.msra.mxu0 %v178
  %329 = vmatpush.bf16.msra.mxu0 %v174
  %330 = vmatmul.bf16.gmra.mxu0 %v67
  %v331 = vpop.f32.mrf.mxu0
  %v332 = vadd.f32 0.0, %v331
  %v333 = vpop.f32.mrf.mxu0
  %v334 = vadd.f32 0.0, %v333
  %335 = vmatmul.bf16.gmra.mxu0 %v68
  %v336 = vpop.f32.mrf.mxu0
  %v337 = vadd.f32 0.0, %v336
  %v338 = vpop.f32.mrf.mxu0
  %v339 = vadd.f32 0.0, %v338
  %340 = vmatmul.bf16.gmra.mxu0 %v69
  %v341 = vpop.f32.mrf.mxu0
  %v342 = vadd.f32 0.0, %v341
  %v343 = vpop.f32.mrf.mxu0
  %v344 = vadd.f32 0.0, %v343
  %345 = vmatmul.bf16.gmra.mxu0 %v70
  %v346 = vpop.f32.mrf.mxu0
  %v347 = vadd.f32 0.0, %v346
  %v348 = vpop.f32.mrf.mxu0
  %v349 = vadd.f32 0.0, %v348
  %350 = vdwg.mxu0
  %v351 = vmul.f32 %v245, 0.5
  %v352 = vmul.f32 %v274, 0.5
  %v353 = vmul.f32 %v303, 0.5
  %v354 = vmul.f32 %v332, 0.5
  %v355 = vmul.f32 %v247, 0.5
  %v356 = vmul.f32 %v276, 0.5
  %v357 = vmul.f32 %v305, 0.5
  %v358 = vmul.f32 %v334, 0.5
  %v359 = vmul.f32 %v250, 0.5
  %v360 = vmul.f32 %v279, 0.5
  %v361 = vmul.f32 %v308, 0.5
  %v362 = vmul.f32 %v337, 0.5
  %v363 = vmul.f32 %v252, 0.5
  %v364 = vmul.f32 %v281, 0.5
  %v365 = vmul.f32 %v310, 0.5
  %v366 = vmul.f32 %v339, 0.5
  %v367 = vmul.f32 %v255, 0.5
  %v368 = vmul.f32 %v284, 0.5
  %v369 = vmul.f32 %v313, 0.5
  %v370 = vmul.f32 %v342, 0.5
  %v371 = vmul.f32 %v257, 0.5
  %v372 = vmul.f32 %v286, 0.5
  %v373 = vmul.f32 %v315, 0.5
  %v374 = vmul.f32 %v344, 0.5
  %v375 = vmul.f32 %v260, 0.5
  %v376 = vmul.f32 %v289, 0.5
  %v377 = vmul.f32 %v318, 0.5
  %v378 = vmul.f32 %v347, 0.5
  %v379 = vmul.f32 %v262, 0.5
  %v380 = vmul.f32 %v291, 0.5
  %v381 = vmul.f32 %v320, 0.5
  %v382 = vmul.f32 %v349, 0.5
  %v383 = vmul.f32 %v245, 0.70710677
  %v384 = vmul.f32 %v274, 0.70710677
  %v385 = vmul.f32 %v303, 0.70710677
  %v386 = vmul.f32 %v332, 0.70710677
  %v387 = vmul.f32 %v247, 0.70710677
  %v388 = vmul.f32 %v276, 0.70710677
  %v389 = vmul.f32 %v305, 0.70710677
  %v390 = vmul.f32 %v334, 0.70710677
  %v391 = vmul.f32 %v250, 0.70710677
  %v392 = vmul.f32 %v279, 0.70710677
  %v393 = vmul.f32 %v308, 0.70710677
  %v394 = vmul.f32 %v337, 0.70710677
  %v395 = vmul.f32 %v252, 0.70710677
  %v396 = vmul.f32 %v281, 0.70710677
  %v397 = vmul.f32 %v310, 0.70710677
  %v398 = vmul.f32 %v339, 0.70710677
  %v399 = vmul.f32 %v255, 0.70710677
  %v400 = vmul.f32 %v284, 0.70710677
  %v401 = vmul.f32 %v313, 0.70710677
  %v402 = vmul.f32 %v342, 0.70710677
  %v403 = vmul.f32 %v257, 0.70710677
  %v404 = vmul.f32 %v286, 0.70710677
  %v405 = vmul.f32 %v315, 0.70710677
  %v406 = vmul.f32 %v344, 0.70710677
  %v407 = vmul.f32 %v260, 0.70710677
  %v408 = vmul.f32 %v289, 0.70710677
  %v409 = vmul.f32 %v318, 0.70710677
  %v410 = vmul.f32 %v347, 0.70710677
  %v411 = vmul.f32 %v262, 0.70710677
  %v412 = vmul.f32 %v291, 0.70710677
  %v413 = vmul.f32 %v320, 0.70710677
  %v414 = vmul.f32 %v349, 0.70710677
  %v415 = vmul.f32 %v383, %v383
  %v416 = vmin.f32 16.0, %v415
  %v417 = vmul.f32 %v416, 2.1237322e-06
  %v418 = vadd.f32 %v417, 0.00028619796
  %v419 = vmul.f32 %v416, %v418
  %v420 = vadd.f32 %v419, 0.0036580483
  %v421 = vmul.f32 %v416, %v420
  %v422 = vadd.f32 %v421, 0.05243302
  %v423 = vmul.f32 %v416, %v422
  %v424 = vadd.f32 %v423, 0.18741608
  %v425 = vmul.f32 %v416, %v424
  %v426 = vadd.f32 %v425, 1.1283791
  %v427 = vmul.f32 %v383, %v426
  %v428 = vmul.f32 %v416, 3.8918573e-05
  %v429 = vadd.f32 %v428, 0.001143296
  %v430 = vmul.f32 %v416, %v429
  %v431 = vadd.f32 %v430, 0.014752088
  %v432 = vmul.f32 %v416, %v431
  %v433 = vadd.f32 %v432, 0.112945676
  %v434 = vmul.f32 %v416, %v433
  %v435 = vadd.f32 %v434, 0.4994258
  %v436 = vmul.f32 %v416, %v435
  %v437 = vadd.f32 %v436, 1.0
  %v438 = vrcp.pop %v437
  %v439 = vmul.f32 %v437, %v438
  %v440 = vsub.f32 1.0, %v439
  %v441 = vmul.f32 %v438, %v440
  %v442 = vadd.f32 %v438, %v441
  %vm443 = vweird.f32 %v437
  %vm444 = vweird.f32 %v438
  %vm445 = vmor %vm443, %vm444
  %v446 = vsel %vm445, %v438, %v442
  %v447 = vand.u32 2147483647, %v437
  %vm448 = vcmp.eq.f32.partialorder %v447, 8.507059e+37
  %v449 = vand.u32 %v437, 2147483648
  %v450 = vor.u32 1.1754944e-38, %v449
  %v451 = vsel %vm448, %v450, %v446
  %v452 = vmul.f32 %v427, %v451
  %v453 = vmin.f32 %v452, 1.0
  %v454 = vmax.f32 %v453, -1.0
  %v455 = vmul.f32 %v384, %v384
  %v456 = vmin.f32 16.0, %v455
  %v457 = vmul.f32 %v456, 2.1237322e-06
  %v458 = vadd.f32 %v457, 0.00028619796
  %v459 = vmul.f32 %v456, %v458
  %v460 = vadd.f32 %v459, 0.0036580483
  %v461 = vmul.f32 %v456, %v460
  %v462 = vadd.f32 %v461, 0.05243302
  %v463 = vmul.f32 %v456, %v462
  %v464 = vadd.f32 %v463, 0.18741608
  %v465 = vmul.f32 %v456, %v464
  %v466 = vadd.f32 %v465, 1.1283791
  %v467 = vmul.f32 %v384, %v466
  %v468 = vmul.f32 %v456, 3.8918573e-05
  %v469 = vadd.f32 %v468, 0.001143296
  %v470 = vmul.f32 %v456, %v469
  %v471 = vadd.f32 %v470, 0.014752088
  %v472 = vmul.f32 %v456, %v471
  %v473 = vadd.f32 %v472, 0.112945676
  %v474 = vmul.f32 %v456, %v473
  %v475 = vadd.f32 %v474, 0.4994258
  %v476 = vmul.f32 %v456, %v475
  %v477 = vadd.f32 %v476, 1.0
  %v478 = vrcp.pop %v477
  %v479 = vmul.f32 %v477, %v478
  %v480 = vsub.f32 1.0, %v479
  %v481 = vmul.f32 %v478, %v480
  %v482 = vadd.f32 %v478, %v481
  %vm483 = vweird.f32 %v477
  %vm484 = vweird.f32 %v478
  %vm485 = vmor %vm483, %vm484
  %v486 = vsel %vm485, %v478, %v482
  %v487 = vand.u32 2147483647, %v477
  %vm488 = vcmp.eq.f32.partialorder %v487, 8.507059e+37
  %v489 = vand.u32 %v477, 2147483648
  %v490 = vor.u32 1.1754944e-38, %v489
  %v491 = vsel %vm488, %v490, %v486
  %v492 = vmul.f32 %v467, %v491
  %v493 = vmin.f32 %v492, 1.0
  %v494 = vmax.f32 %v493, -1.0
  %v495 = vmul.f32 %v385, %v385
  %v496 = vmin.f32 16.0, %v495
  %v497 = vmul.f32 %v496, 2.1237322e-06
  %v498 = vadd.f32 %v497, 0.00028619796
  %v499 = vmul.f32 %v496, %v498
  %v500 = vadd.f32 %v499, 0.0036580483
  %v501 = vmul.f32 %v496, %v500
  %v502 = vadd.f32 %v501, 0.05243302
  %v503 = vmul.f32 %v496, %v502
  %v504 = vadd.f32 %v503, 0.18741608
  %v505 = vmul.f32 %v496, %v504
  %v506 = vadd.f32 %v505, 1.1283791
  %v507 = vmul.f32 %v385, %v506
  %v508 = vmul.f32 %v496, 3.8918573e-05
  %v509 = vadd.f32 %v508, 0.001143296
  %v510 = vmul.f32 %v496, %v509
  %v511 = vadd.f32 %v510, 0.014752088
  %v512 = vmul.f32 %v496, %v511
  %v513 = vadd.f32 %v512, 0.112945676
  %v514 = vmul.f32 %v496, %v513
  %v515 = vadd.f32 %v514, 0.4994258
  %v516 = vmul.f32 %v496, %v515
  %v517 = vadd.f32 %v516, 1.0
  %v518 = vrcp.pop %v517
  %v519 = vmul.f32 %v517, %v518
  %v520 = vsub.f32 1.0, %v519
  %v521 = vmul.f32 %v518, %v520
  %v522 = vadd.f32 %v518, %v521
  %vm523 = vweird.f32 %v517
  %vm524 = vweird.f32 %v518
  %vm525 = vmor %vm523, %vm524
  %v526 = vsel %vm525, %v518, %v522
  %v527 = vand.u32 2147483647, %v517
  %vm528 = vcmp.eq.f32.partialorder %v527, 8.507059e+37
  %v529 = vand.u32 %v517, 2147483648
  %v530 = vor.u32 1.1754944e-38, %v529
  %v531 = vsel %vm528, %v530, %v526
  %v532 = vmul.f32 %v507, %v531
  %v533 = vmin.f32 %v532, 1.0
  %v534 = vmax.f32 %v533, -1.0
  %v535 = vmul.f32 %v386, %v386
  %v536 = vmin.f32 16.0, %v535
  %v537 = vmul.f32 %v536, 2.1237322e-06
  %v538 = vadd.f32 %v537, 0.00028619796
  %v539 = vmul.f32 %v536, %v538
  %v540 = vadd.f32 %v539, 0.0036580483
  %v541 = vmul.f32 %v536, %v540
  %v542 = vadd.f32 %v541, 0.05243302
  %v543 = vmul.f32 %v536, %v542
  %v544 = vadd.f32 %v543, 0.18741608
  %v545 = vmul.f32 %v536, %v544
  %v546 = vadd.f32 %v545, 1.1283791
  %v547 = vmul.f32 %v386, %v546
  %v548 = vmul.f32 %v536, 3.8918573e-05
  %v549 = vadd.f32 %v548, 0.001143296
  %v550 = vmul.f32 %v536, %v549
  %v551 = vadd.f32 %v550, 0.014752088
  %v552 = vmul.f32 %v536, %v551
  %v553 = vadd.f32 %v552, 0.112945676
  %v554 = vmul.f32 %v536, %v553
  %v555 = vadd.f32 %v554, 0.4994258
  %v556 = vmul.f32 %v536, %v555
  %v557 = vadd.f32 %v556, 1.0
  %v558 = vrcp.pop %v557
  %v559 = vmul.f32 %v557, %v558
  %v560 = vsub.f32 1.0, %v559
  %v561 = vmul.f32 %v558, %v560
  %v562 = vadd.f32 %v558, %v561
  %vm563 = vweird.f32 %v557
  %vm564 = vweird.f32 %v558
  %vm565 = vmor %vm563, %vm564
  %v566 = vsel %vm565, %v558, %v562
  %v567 = vand.u32 2147483647, %v557
  %vm568 = vcmp.eq.f32.partialorder %v567, 8.507059e+37
  %v569 = vand.u32 %v557, 2147483648
  %v570 = vor.u32 1.1754944e-38, %v569
  %v571 = vsel %vm568, %v570, %v566
  %v572 = vmul.f32 %v547, %v571
  %v573 = vmin.f32 %v572, 1.0
  %v574 = vmax.f32 %v573, -1.0
  %v575 = vmul.f32 %v387, %v387
  %v576 = vmin.f32 16.0, %v575
  %v577 = vmul.f32 %v576, 2.1237322e-06
  %v578 = vadd.f32 %v577, 0.00028619796
  %v579 = vmul.f32 %v576, %v578
  %v580 = vadd.f32 %v579, 0.0036580483
  %v581 = vmul.f32 %v576, %v580
  %v582 = vadd.f32 %v581, 0.05243302
  %v583 = vmul.f32 %v576, %v582
  %v584 = vadd.f32 %v583, 0.18741608
  %v585 = vmul.f32 %v576, %v584
  %v586 = vadd.f32 %v585, 1.1283791
  %v587 = vmul.f32 %v387, %v586
  %v588 = vmul.f32 %v576, 3.8918573e-05
  %v589 = vadd.f32 %v588, 0.001143296
  %v590 = vmul.f32 %v576, %v589
  %v591 = vadd.f32 %v590, 0.014752088
  %v592 = vmul.f32 %v576, %v591
  %v593 = vadd.f32 %v592, 0.112945676
  %v594 = vmul.f32 %v576, %v593
  %v595 = vadd.f32 %v594, 0.4994258
  %v596 = vmul.f32 %v576, %v595
  %v597 = vadd.f32 %v596, 1.0
  %v598 = vrcp.pop %v597
  %v599 = vmul.f32 %v597, %v598
  %v600 = vsub.f32 1.0, %v599
  %v601 = vmul.f32 %v598, %v600
  %v602 = vadd.f32 %v598, %v601
  %vm603 = vweird.f32 %v597
  %vm604 = vweird.f32 %v598
  %vm605 = vmor %vm603, %vm604
  %v606 = vsel %vm605, %v598, %v602
  %v607 = vand.u32 2147483647, %v597
  %vm608 = vcmp.eq.f32.partialorder %v607, 8.507059e+37
  %v609 = vand.u32 %v597, 2147483648
  %v610 = vor.u32 1.1754944e-38, %v609
  %v611 = vsel %vm608, %v610, %v606
  %v612 = vmul.f32 %v587, %v611
  %v613 = vmin.f32 %v612, 1.0
  %v614 = vmax.f32 %v613, -1.0
  %v615 = vmul.f32 %v388, %v388
  %v616 = vmin.f32 16.0, %v615
  %v617 = vmul.f32 %v616, 2.1237322e-06
  %v618 = vadd.f32 %v617, 0.00028619796
  %v619 = vmul.f32 %v616, %v618
  %v620 = vadd.f32 %v619, 0.0036580483
  %v621 = vmul.f32 %v616, %v620
  %v622 = vadd.f32 %v621, 0.05243302
  %v623 = vmul.f32 %v616, %v622
  %v624 = vadd.f32 %v623, 0.18741608
  %v625 = vmul.f32 %v616, %v624
  %v626 = vadd.f32 %v625, 1.1283791
  %v627 = vmul.f32 %v388, %v626
  %v628 = vmul.f32 %v616, 3.8918573e-05
  %v629 = vadd.f32 %v628, 0.001143296
  %v630 = vmul.f32 %v616, %v629
  %v631 = vadd.f32 %v630, 0.014752088
  %v632 = vmul.f32 %v616, %v631
  %v633 = vadd.f32 %v632, 0.112945676
  %v634 = vmul.f32 %v616, %v633
  %v635 = vadd.f32 %v634, 0.4994258
  %v636 = vmul.f32 %v616, %v635
  %v637 = vadd.f32 %v636, 1.0
  %v638 = vrcp.pop %v637
  %v639 = vmul.f32 %v637, %v638
  %v640 = vsub.f32 1.0, %v639
  %v641 = vmul.f32 %v638, %v640
  %v642 = vadd.f32 %v638, %v641
  %vm643 = vweird.f32 %v637
  %vm644 = vweird.f32 %v638
  %vm645 = vmor %vm643, %vm644
  %v646 = vsel %vm645, %v638, %v642
  %v647 = vand.u32 2147483647, %v637
  %vm648 = vcmp.eq.f32.partialorder %v647, 8.507059e+37
  %v649 = vand.u32 %v637, 2147483648
  %v650 = vor.u32 1.1754944e-38, %v649
  %v651 = vsel %vm648, %v650, %v646
  %v652 = vmul.f32 %v627, %v651
  %v653 = vmin.f32 %v652, 1.0
  %v654 = vmax.f32 %v653, -1.0
  %v655 = vmul.f32 %v389, %v389
  %v656 = vmin.f32 16.0, %v655
  %v657 = vmul.f32 %v656, 2.1237322e-06
  %v658 = vadd.f32 %v657, 0.00028619796
  %v659 = vmul.f32 %v656, %v658
  %v660 = vadd.f32 %v659, 0.0036580483
  %v661 = vmul.f32 %v656, %v660
  %v662 = vadd.f32 %v661, 0.05243302
  %v663 = vmul.f32 %v656, %v662
  %v664 = vadd.f32 %v663, 0.18741608
  %v665 = vmul.f32 %v656, %v664
  %v666 = vadd.f32 %v665, 1.1283791
  %v667 = vmul.f32 %v389, %v666
  %v668 = vmul.f32 %v656, 3.8918573e-05
  %v669 = vadd.f32 %v668, 0.001143296
  %v670 = vmul.f32 %v656, %v669
  %v671 = vadd.f32 %v670, 0.014752088
  %v672 = vmul.f32 %v656, %v671
  %v673 = vadd.f32 %v672, 0.112945676
  %v674 = vmul.f32 %v656, %v673
  %v675 = vadd.f32 %v674, 0.4994258
  %v676 = vmul.f32 %v656, %v675
  %v677 = vadd.f32 %v676, 1.0
  %v678 = vrcp.pop %v677
  %v679 = vmul.f32 %v677, %v678
  %v680 = vsub.f32 1.0, %v679
  %v681 = vmul.f32 %v678, %v680
  %v682 = vadd.f32 %v678, %v681
  %vm683 = vweird.f32 %v677
  %vm684 = vweird.f32 %v678
  %vm685 = vmor %vm683, %vm684
  %v686 = vsel %vm685, %v678, %v682
  %v687 = vand.u32 2147483647, %v677
  %vm688 = vcmp.eq.f32.partialorder %v687, 8.507059e+37
  %v689 = vand.u32 %v677, 2147483648
  %v690 = vor.u32 1.1754944e-38, %v689
  %v691 = vsel %vm688, %v690, %v686
  %v692 = vmul.f32 %v667, %v691
  %v693 = vmin.f32 %v692, 1.0
  %v694 = vmax.f32 %v693, -1.0
  %v695 = vmul.f32 %v390, %v390
  %v696 = vmin.f32 16.0, %v695
  %v697 = vmul.f32 %v696, 2.1237322e-06
  %v698 = vadd.f32 %v697, 0.00028619796
  %v699 = vmul.f32 %v696, %v698
  %v700 = vadd.f32 %v699, 0.0036580483
  %v701 = vmul.f32 %v696, %v700
  %v702 = vadd.f32 %v701, 0.05243302
  %v703 = vmul.f32 %v696, %v702
  %v704 = vadd.f32 %v703, 0.18741608
  %v705 = vmul.f32 %v696, %v704
  %v706 = vadd.f32 %v705, 1.1283791
  %v707 = vmul.f32 %v390, %v706
  %v708 = vmul.f32 %v696, 3.8918573e-05
  %v709 = vadd.f32 %v708, 0.001143296
  %v710 = vmul.f32 %v696, %v709
  %v711 = vadd.f32 %v710, 0.014752088
  %v712 = vmul.f32 %v696, %v711
  %v713 = vadd.f32 %v712, 0.112945676
  %v714 = vmul.f32 %v696, %v713
  %v715 = vadd.f32 %v714, 0.4994258
  %v716 = vmul.f32 %v696, %v715
  %v717 = vadd.f32 %v716, 1.0
  %v718 = vrcp.pop %v717
  %v719 = vmul.f32 %v717, %v718
  %v720 = vsub.f32 1.0, %v719
  %v721 = vmul.f32 %v718, %v720
  %v722 = vadd.f32 %v718, %v721
  %vm723 = vweird.f32 %v717
  %vm724 = vweird.f32 %v718
  %vm725 = vmor %vm723, %vm724
  %v726 = vsel %vm725, %v718, %v722
  %v727 = vand.u32 2147483647, %v717
  %vm728 = vcmp.eq.f32.partialorder %v727, 8.507059e+37
  %v729 = vand.u32 %v717, 2147483648
  %v730 = vor.u32 1.1754944e-38, %v729
  %v731 = vsel %vm728, %v730, %v726
  %v732 = vmul.f32 %v707, %v731
  %v733 = vmin.f32 %v732, 1.0
  %v734 = vmax.f32 %v733, -1.0
  %v735 = vmul.f32 %v391, %v391
  %v736 = vmin.f32 16.0, %v735
  %v737 = vmul.f32 %v736, 2.1237322e-06
  %v738 = vadd.f32 %v737, 0.00028619796
  %v739 = vmul.f32 %v736, %v738
  %v740 = vadd.f32 %v739, 0.0036580483
  %v741 = vmul.f32 %v736, %v740
  %v742 = vadd.f32 %v741, 0.05243302
  %v743 = vmul.f32 %v736, %v742
  %v744 = vadd.f32 %v743, 0.18741608
  %v745 = vmul.f32 %v736, %v744
  %v746 = vadd.f32 %v745, 1.1283791
  %v747 = vmul.f32 %v391, %v746
  %v748 = vmul.f32 %v736, 3.8918573e-05
  %v749 = vadd.f32 %v748, 0.001143296
  %v750 = vmul.f32 %v736, %v749
  %v751 = vadd.f32 %v750, 0.014752088
  %v752 = vmul.f32 %v736, %v751
  %v753 = vadd.f32 %v752, 0.112945676
  %v754 = vmul.f32 %v736, %v753
  %v755 = vadd.f32 %v754, 0.4994258
  %v756 = vmul.f32 %v736, %v755
  %v757 = vadd.f32 %v756, 1.0
  %v758 = vrcp.pop %v757
  %v759 = vmul.f32 %v757, %v758
  %v760 = vsub.f32 1.0, %v759
  %v761 = vmul.f32 %v758, %v760
  %v762 = vadd.f32 %v758, %v761
  %vm763 = vweird.f32 %v757
  %vm764 = vweird.f32 %v758
  %vm765 = vmor %vm763, %vm764
  %v766 = vsel %vm765, %v758, %v762
  %v767 = vand.u32 2147483647, %v757
  %vm768 = vcmp.eq.f32.partialorder %v767, 8.507059e+37
  %v769 = vand.u32 %v757, 2147483648
  %v770 = vor.u32 1.1754944e-38, %v769
  %v771 = vsel %vm768, %v770, %v766
  %v772 = vmul.f32 %v747, %v771
  %v773 = vmin.f32 %v772, 1.0
  %v774 = vmax.f32 %v773, -1.0
  %v775 = vmul.f32 %v392, %v392
  %v776 = vmin.f32 16.0, %v775
  %v777 = vmul.f32 %v776, 2.1237322e-06
  %v778 = vadd.f32 %v777, 0.00028619796
  %v779 = vmul.f32 %v776, %v778
  %v780 = vadd.f32 %v779, 0.0036580483
  %v781 = vmul.f32 %v776, %v780
  %v782 = vadd.f32 %v781, 0.05243302
  %v783 = vmul.f32 %v776, %v782
  %v784 = vadd.f32 %v783, 0.18741608
  %v785 = vmul.f32 %v776, %v784
  %v786 = vadd.f32 %v785, 1.1283791
  %v787 = vmul.f32 %v392, %v786
  %v788 = vmul.f32 %v776, 3.8918573e-05
  %v789 = vadd.f32 %v788, 0.001143296
  %v790 = vmul.f32 %v776, %v789
  %v791 = vadd.f32 %v790, 0.014752088
  %v792 = vmul.f32 %v776, %v791
  %v793 = vadd.f32 %v792, 0.112945676
  %v794 = vmul.f32 %v776, %v793
  %v795 = vadd.f32 %v794, 0.4994258
  %v796 = vmul.f32 %v776, %v795
  %v797 = vadd.f32 %v796, 1.0
  %v798 = vrcp.pop %v797
  %v799 = vmul.f32 %v797, %v798
  %v800 = vsub.f32 1.0, %v799
  %v801 = vmul.f32 %v798, %v800
  %v802 = vadd.f32 %v798, %v801
  %vm803 = vweird.f32 %v797
  %vm804 = vweird.f32 %v798
  %vm805 = vmor %vm803, %vm804
  %v806 = vsel %vm805, %v798, %v802
  %v807 = vand.u32 2147483647, %v797
  %vm808 = vcmp.eq.f32.partialorder %v807, 8.507059e+37
  %v809 = vand.u32 %v797, 2147483648
  %v810 = vor.u32 1.1754944e-38, %v809
  %v811 = vsel %vm808, %v810, %v806
  %v812 = vmul.f32 %v787, %v811
  %v813 = vmin.f32 %v812, 1.0
  %v814 = vmax.f32 %v813, -1.0
  %v815 = vmul.f32 %v393, %v393
  %v816 = vmin.f32 16.0, %v815
  %v817 = vmul.f32 %v816, 2.1237322e-06
  %v818 = vadd.f32 %v817, 0.00028619796
  %v819 = vmul.f32 %v816, %v818
  %v820 = vadd.f32 %v819, 0.0036580483
  %v821 = vmul.f32 %v816, %v820
  %v822 = vadd.f32 %v821, 0.05243302
  %v823 = vmul.f32 %v816, %v822
  %v824 = vadd.f32 %v823, 0.18741608
  %v825 = vmul.f32 %v816, %v824
  %v826 = vadd.f32 %v825, 1.1283791
  %v827 = vmul.f32 %v393, %v826
  %v828 = vmul.f32 %v816, 3.8918573e-05
  %v829 = vadd.f32 %v828, 0.001143296
  %v830 = vmul.f32 %v816, %v829
  %v831 = vadd.f32 %v830, 0.014752088
  %v832 = vmul.f32 %v816, %v831
  %v833 = vadd.f32 %v832, 0.112945676
  %v834 = vmul.f32 %v816, %v833
  %v835 = vadd.f32 %v834, 0.4994258
  %v836 = vmul.f32 %v816, %v835
  %v837 = vadd.f32 %v836, 1.0
  %v838 = vrcp.pop %v837
  %v839 = vmul.f32 %v837, %v838
  %v840 = vsub.f32 1.0, %v839
  %v841 = vmul.f32 %v838, %v840
  %v842 = vadd.f32 %v838, %v841
  %vm843 = vweird.f32 %v837
  %vm844 = vweird.f32 %v838
  %vm845 = vmor %vm843, %vm844
  %v846 = vsel %vm845, %v838, %v842
  %v847 = vand.u32 2147483647, %v837
  %vm848 = vcmp.eq.f32.partialorder %v847, 8.507059e+37
  %v849 = vand.u32 %v837, 2147483648
  %v850 = vor.u32 1.1754944e-38, %v849
  %v851 = vsel %vm848, %v850, %v846
  %v852 = vmul.f32 %v827, %v851
  %v853 = vmin.f32 %v852, 1.0
  %v854 = vmax.f32 %v853, -1.0
  %v855 = vmul.f32 %v394, %v394
  %v856 = vmin.f32 16.0, %v855
  %v857 = vmul.f32 %v856, 2.1237322e-06
  %v858 = vadd.f32 %v857, 0.00028619796
  %v859 = vmul.f32 %v856, %v858
  %v860 = vadd.f32 %v859, 0.0036580483
  %v861 = vmul.f32 %v856, %v860
  %v862 = vadd.f32 %v861, 0.05243302
  %v863 = vmul.f32 %v856, %v862
  %v864 = vadd.f32 %v863, 0.18741608
  %v865 = vmul.f32 %v856, %v864
  %v866 = vadd.f32 %v865, 1.1283791
  %v867 = vmul.f32 %v394, %v866
  %v868 = vmul.f32 %v856, 3.8918573e-05
  %v869 = vadd.f32 %v868, 0.001143296
  %v870 = vmul.f32 %v856, %v869
  %v871 = vadd.f32 %v870, 0.014752088
  %v872 = vmul.f32 %v856, %v871
  %v873 = vadd.f32 %v872, 0.112945676
  %v874 = vmul.f32 %v856, %v873
  %v875 = vadd.f32 %v874, 0.4994258
  %v876 = vmul.f32 %v856, %v875
  %v877 = vadd.f32 %v876, 1.0
  %v878 = vrcp.pop %v877
  %v879 = vmul.f32 %v877, %v878
  %v880 = vsub.f32 1.0, %v879
  %v881 = vmul.f32 %v878, %v880
  %v882 = vadd.f32 %v878, %v881
  %vm883 = vweird.f32 %v877
  %vm884 = vweird.f32 %v878
  %vm885 = vmor %vm883, %vm884
  %v886 = vsel %vm885, %v878, %v882
  %v887 = vand.u32 2147483647, %v877
  %vm888 = vcmp.eq.f32.partialorder %v887, 8.507059e+37
  %v889 = vand.u32 %v877, 2147483648
  %v890 = vor.u32 1.1754944e-38, %v889
  %v891 = vsel %vm888, %v890, %v886
  %v892 = vmul.f32 %v867, %v891
  %v893 = vmin.f32 %v892, 1.0
  %v894 = vmax.f32 %v893, -1.0
  %v895 = vmul.f32 %v395, %v395
  %v896 = vmin.f32 16.0, %v895
  %v897 = vmul.f32 %v896, 2.1237322e-06
  %v898 = vadd.f32 %v897, 0.00028619796
  %v899 = vmul.f32 %v896, %v898
  %v900 = vadd.f32 %v899, 0.0036580483
  %v901 = vmul.f32 %v896, %v900
  %v902 = vadd.f32 %v901, 0.05243302
  %v903 = vmul.f32 %v896, %v902
  %v904 = vadd.f32 %v903, 0.18741608
  %v905 = vmul.f32 %v896, %v904
  %v906 = vadd.f32 %v905, 1.1283791
  %v907 = vmul.f32 %v395, %v906
  %v908 = vmul.f32 %v896, 3.8918573e-05
  %v909 = vadd.f32 %v908, 0.001143296
  %v910 = vmul.f32 %v896, %v909
  %v911 = vadd.f32 %v910, 0.014752088
  %v912 = vmul.f32 %v896, %v911
  %v913 = vadd.f32 %v912, 0.112945676
  %v914 = vmul.f32 %v896, %v913
  %v915 = vadd.f32 %v914, 0.4994258
  %v916 = vmul.f32 %v896, %v915
  %v917 = vadd.f32 %v916, 1.0
  %v918 = vrcp.pop %v917
  %v919 = vmul.f32 %v917, %v918
  %v920 = vsub.f32 1.0, %v919
  %v921 = vmul.f32 %v918, %v920
  %v922 = vadd.f32 %v918, %v921
  %vm923 = vweird.f32 %v917
  %vm924 = vweird.f32 %v918
  %vm925 = vmor %vm923, %vm924
  %v926 = vsel %vm925, %v918, %v922
  %v927 = vand.u32 2147483647, %v917
  %vm928 = vcmp.eq.f32.partialorder %v927, 8.507059e+37
  %v929 = vand.u32 %v917, 2147483648
  %v930 = vor.u32 1.1754944e-38, %v929
  %v931 = vsel %vm928, %v930, %v926
  %v932 = vmul.f32 %v907, %v931
  %v933 = vmin.f32 %v932, 1.0
  %v934 = vmax.f32 %v933, -1.0
  %v935 = vmul.f32 %v396, %v396
  %v936 = vmin.f32 16.0, %v935
  %v937 = vmul.f32 %v936, 2.1237322e-06
  %v938 = vadd.f32 %v937, 0.00028619796
  %v939 = vmul.f32 %v936, %v938
  %v940 = vadd.f32 %v939, 0.0036580483
  %v941 = vmul.f32 %v936, %v940
  %v942 = vadd.f32 %v941, 0.05243302
  %v943 = vmul.f32 %v936, %v942
  %v944 = vadd.f32 %v943, 0.18741608
  %v945 = vmul.f32 %v936, %v944
  %v946 = vadd.f32 %v945, 1.1283791
  %v947 = vmul.f32 %v396, %v946
  %v948 = vmul.f32 %v936, 3.8918573e-05
  %v949 = vadd.f32 %v948, 0.001143296
  %v950 = vmul.f32 %v936, %v949
  %v951 = vadd.f32 %v950, 0.014752088
  %v952 = vmul.f32 %v936, %v951
  %v953 = vadd.f32 %v952, 0.112945676
  %v954 = vmul.f32 %v936, %v953
  %v955 = vadd.f32 %v954, 0.4994258
  %v956 = vmul.f32 %v936, %v955
  %v957 = vadd.f32 %v956, 1.0
  %v958 = vrcp.pop %v957
  %v959 = vmul.f32 %v957, %v958
  %v960 = vsub.f32 1.0, %v959
  %v961 = vmul.f32 %v958, %v960
  %v962 = vadd.f32 %v958, %v961
  %vm963 = vweird.f32 %v957
  %vm964 = vweird.f32 %v958
  %vm965 = vmor %vm963, %vm964
  %v966 = vsel %vm965, %v958, %v962
  %v967 = vand.u32 2147483647, %v957
  %vm968 = vcmp.eq.f32.partialorder %v967, 8.507059e+37
  %v969 = vand.u32 %v957, 2147483648
  %v970 = vor.u32 1.1754944e-38, %v969
  %v971 = vsel %vm968, %v970, %v966
  %v972 = vmul.f32 %v947, %v971
  %v973 = vmin.f32 %v972, 1.0
  %v974 = vmax.f32 %v973, -1.0
  %v975 = vmul.f32 %v397, %v397
  %v976 = vmin.f32 16.0, %v975
  %v977 = vmul.f32 %v976, 2.1237322e-06
  %v978 = vadd.f32 %v977, 0.00028619796
  %v979 = vmul.f32 %v976, %v978
  %v980 = vadd.f32 %v979, 0.0036580483
  %v981 = vmul.f32 %v976, %v980
  %v982 = vadd.f32 %v981, 0.05243302
  %v983 = vmul.f32 %v976, %v982
  %v984 = vadd.f32 %v983, 0.18741608
  %v985 = vmul.f32 %v976, %v984
  %v986 = vadd.f32 %v985, 1.1283791
  %v987 = vmul.f32 %v397, %v986
  %v988 = vmul.f32 %v976, 3.8918573e-05
  %v989 = vadd.f32 %v988, 0.001143296
  %v990 = vmul.f32 %v976, %v989
  %v991 = vadd.f32 %v990, 0.014752088
  %v992 = vmul.f32 %v976, %v991
  %v993 = vadd.f32 %v992, 0.112945676
  %v994 = vmul.f32 %v976, %v993
  %v995 = vadd.f32 %v994, 0.4994258
  %v996 = vmul.f32 %v976, %v995
  %v997 = vadd.f32 %v996, 1.0
  %v998 = vrcp.pop %v997
  %v999 = vmul.f32 %v997, %v998
  %v1000 = vsub.f32 1.0, %v999
  %v1001 = vmul.f32 %v998, %v1000
  %v1002 = vadd.f32 %v998, %v1001
  %vm1003 = vweird.f32 %v997
  %vm1004 = vweird.f32 %v998
  %vm1005 = vmor %vm1003, %vm1004
  %v1006 = vsel %vm1005, %v998, %v1002
  %v1007 = vand.u32 2147483647, %v997
  %vm1008 = vcmp.eq.f32.partialorder %v1007, 8.507059e+37
  %v1009 = vand.u32 %v997, 2147483648
  %v1010 = vor.u32 1.1754944e-38, %v1009
  %v1011 = vsel %vm1008, %v1010, %v1006
  %v1012 = vmul.f32 %v987, %v1011
  %v1013 = vmin.f32 %v1012, 1.0
  %v1014 = vmax.f32 %v1013, -1.0
  %v1015 = vmul.f32 %v398, %v398
  %v1016 = vmin.f32 16.0, %v1015
  %v1017 = vmul.f32 %v1016, 2.1237322e-06
  %v1018 = vadd.f32 %v1017, 0.00028619796
  %v1019 = vmul.f32 %v1016, %v1018
  %v1020 = vadd.f32 %v1019, 0.0036580483
  %v1021 = vmul.f32 %v1016, %v1020
  %v1022 = vadd.f32 %v1021, 0.05243302
  %v1023 = vmul.f32 %v1016, %v1022
  %v1024 = vadd.f32 %v1023, 0.18741608
  %v1025 = vmul.f32 %v1016, %v1024
  %v1026 = vadd.f32 %v1025, 1.1283791
  %v1027 = vmul.f32 %v398, %v1026
  %v1028 = vmul.f32 %v1016, 3.8918573e-05
  %v1029 = vadd.f32 %v1028, 0.001143296
  %v1030 = vmul.f32 %v1016, %v1029
  %v1031 = vadd.f32 %v1030, 0.014752088
  %v1032 = vmul.f32 %v1016, %v1031
  %v1033 = vadd.f32 %v1032, 0.112945676
  %v1034 = vmul.f32 %v1016, %v1033
  %v1035 = vadd.f32 %v1034, 0.4994258
  %v1036 = vmul.f32 %v1016, %v1035
  %v1037 = vadd.f32 %v1036, 1.0
  %v1038 = vrcp.pop %v1037
  %v1039 = vmul.f32 %v1037, %v1038
  %v1040 = vsub.f32 1.0, %v1039
  %v1041 = vmul.f32 %v1038, %v1040
  %v1042 = vadd.f32 %v1038, %v1041
  %vm1043 = vweird.f32 %v1037
  %vm1044 = vweird.f32 %v1038
  %vm1045 = vmor %vm1043, %vm1044
  %v1046 = vsel %vm1045, %v1038, %v1042
  %v1047 = vand.u32 2147483647, %v1037
  %vm1048 = vcmp.eq.f32.partialorder %v1047, 8.507059e+37
  %v1049 = vand.u32 %v1037, 2147483648
  %v1050 = vor.u32 1.1754944e-38, %v1049
  %v1051 = vsel %vm1048, %v1050, %v1046
  %v1052 = vmul.f32 %v1027, %v1051
  %v1053 = vmin.f32 %v1052, 1.0
  %v1054 = vmax.f32 %v1053, -1.0
  %v1055 = vmul.f32 %v399, %v399
  %v1056 = vmin.f32 16.0, %v1055
  %v1057 = vmul.f32 %v1056, 2.1237322e-06
  %v1058 = vadd.f32 %v1057, 0.00028619796
  %v1059 = vmul.f32 %v1056, %v1058
  %v1060 = vadd.f32 %v1059, 0.0036580483
  %v1061 = vmul.f32 %v1056, %v1060
  %v1062 = vadd.f32 %v1061, 0.05243302
  %v1063 = vmul.f32 %v1056, %v1062
  %v1064 = vadd.f32 %v1063, 0.18741608
  %v1065 = vmul.f32 %v1056, %v1064
  %v1066 = vadd.f32 %v1065, 1.1283791
  %v1067 = vmul.f32 %v399, %v1066
  %v1068 = vmul.f32 %v1056, 3.8918573e-05
  %v1069 = vadd.f32 %v1068, 0.001143296
  %v1070 = vmul.f32 %v1056, %v1069
  %v1071 = vadd.f32 %v1070, 0.014752088
  %v1072 = vmul.f32 %v1056, %v1071
  %v1073 = vadd.f32 %v1072, 0.112945676
  %v1074 = vmul.f32 %v1056, %v1073
  %v1075 = vadd.f32 %v1074, 0.4994258
  %v1076 = vmul.f32 %v1056, %v1075
  %v1077 = vadd.f32 %v1076, 1.0
  %v1078 = vrcp.pop %v1077
  %v1079 = vmul.f32 %v1077, %v1078
  %v1080 = vsub.f32 1.0, %v1079
  %v1081 = vmul.f32 %v1078, %v1080
  %v1082 = vadd.f32 %v1078, %v1081
  %vm1083 = vweird.f32 %v1077
  %vm1084 = vweird.f32 %v1078
  %vm1085 = vmor %vm1083, %vm1084
  %v1086 = vsel %vm1085, %v1078, %v1082
  %v1087 = vand.u32 2147483647, %v1077
  %vm1088 = vcmp.eq.f32.partialorder %v1087, 8.507059e+37
  %v1089 = vand.u32 %v1077, 2147483648
  %v1090 = vor.u32 1.1754944e-38, %v1089
  %v1091 = vsel %vm1088, %v1090, %v1086
  %v1092 = vmul.f32 %v1067, %v1091
  %v1093 = vmin.f32 %v1092, 1.0
  %v1094 = vmax.f32 %v1093, -1.0
  %v1095 = vmul.f32 %v400, %v400
  %v1096 = vmin.f32 16.0, %v1095
  %v1097 = vmul.f32 %v1096, 2.1237322e-06
  %v1098 = vadd.f32 %v1097, 0.00028619796
  %v1099 = vmul.f32 %v1096, %v1098
  %v1100 = vadd.f32 %v1099, 0.0036580483
  %v1101 = vmul.f32 %v1096, %v1100
  %v1102 = vadd.f32 %v1101, 0.05243302
  %v1103 = vmul.f32 %v1096, %v1102
  %v1104 = vadd.f32 %v1103, 0.18741608
  %v1105 = vmul.f32 %v1096, %v1104
  %v1106 = vadd.f32 %v1105, 1.1283791
  %v1107 = vmul.f32 %v400, %v1106
  %v1108 = vmul.f32 %v1096, 3.8918573e-05
  %v1109 = vadd.f32 %v1108, 0.001143296
  %v1110 = vmul.f32 %v1096, %v1109
  %v1111 = vadd.f32 %v1110, 0.014752088
  %v1112 = vmul.f32 %v1096, %v1111
  %v1113 = vadd.f32 %v1112, 0.112945676
  %v1114 = vmul.f32 %v1096, %v1113
  %v1115 = vadd.f32 %v1114, 0.4994258
  %v1116 = vmul.f32 %v1096, %v1115
  %v1117 = vadd.f32 %v1116, 1.0
  %v1118 = vrcp.pop %v1117
  %v1119 = vmul.f32 %v1117, %v1118
  %v1120 = vsub.f32 1.0, %v1119
  %v1121 = vmul.f32 %v1118, %v1120
  %v1122 = vadd.f32 %v1118, %v1121
  %vm1123 = vweird.f32 %v1117
  %vm1124 = vweird.f32 %v1118
  %vm1125 = vmor %vm1123, %vm1124
  %v1126 = vsel %vm1125, %v1118, %v1122
  %v1127 = vand.u32 2147483647, %v1117
  %vm1128 = vcmp.eq.f32.partialorder %v1127, 8.507059e+37
  %v1129 = vand.u32 %v1117, 2147483648
  %v1130 = vor.u32 1.1754944e-38, %v1129
  %v1131 = vsel %vm1128, %v1130, %v1126
  %v1132 = vmul.f32 %v1107, %v1131
  %v1133 = vmin.f32 %v1132, 1.0
  %v1134 = vmax.f32 %v1133, -1.0
  %v1135 = vmul.f32 %v401, %v401
  %v1136 = vmin.f32 16.0, %v1135
  %v1137 = vmul.f32 %v1136, 2.1237322e-06
  %v1138 = vadd.f32 %v1137, 0.00028619796
  %v1139 = vmul.f32 %v1136, %v1138
  %v1140 = vadd.f32 %v1139, 0.0036580483
  %v1141 = vmul.f32 %v1136, %v1140
  %v1142 = vadd.f32 %v1141, 0.05243302
  %v1143 = vmul.f32 %v1136, %v1142
  %v1144 = vadd.f32 %v1143, 0.18741608
  %v1145 = vmul.f32 %v1136, %v1144
  %v1146 = vadd.f32 %v1145, 1.1283791
  %v1147 = vmul.f32 %v401, %v1146
  %v1148 = vmul.f32 %v1136, 3.8918573e-05
  %v1149 = vadd.f32 %v1148, 0.001143296
  %v1150 = vmul.f32 %v1136, %v1149
  %v1151 = vadd.f32 %v1150, 0.014752088
  %v1152 = vmul.f32 %v1136, %v1151
  %v1153 = vadd.f32 %v1152, 0.112945676
  %v1154 = vmul.f32 %v1136, %v1153
  %v1155 = vadd.f32 %v1154, 0.4994258
  %v1156 = vmul.f32 %v1136, %v1155
  %v1157 = vadd.f32 %v1156, 1.0
  %v1158 = vrcp.pop %v1157
  %v1159 = vmul.f32 %v1157, %v1158
  %v1160 = vsub.f32 1.0, %v1159
  %v1161 = vmul.f32 %v1158, %v1160
  %v1162 = vadd.f32 %v1158, %v1161
  %vm1163 = vweird.f32 %v1157
  %vm1164 = vweird.f32 %v1158
  %vm1165 = vmor %vm1163, %vm1164
  %v1166 = vsel %vm1165, %v1158, %v1162
  %v1167 = vand.u32 2147483647, %v1157
  %vm1168 = vcmp.eq.f32.partialorder %v1167, 8.507059e+37
  %v1169 = vand.u32 %v1157, 2147483648
  %v1170 = vor.u32 1.1754944e-38, %v1169
  %v1171 = vsel %vm1168, %v1170, %v1166
  %v1172 = vmul.f32 %v1147, %v1171
  %v1173 = vmin.f32 %v1172, 1.0
  %v1174 = vmax.f32 %v1173, -1.0
  %v1175 = vmul.f32 %v402, %v402
  %v1176 = vmin.f32 16.0, %v1175
  %v1177 = vmul.f32 %v1176, 2.1237322e-06
  %v1178 = vadd.f32 %v1177, 0.00028619796
  %v1179 = vmul.f32 %v1176, %v1178
  %v1180 = vadd.f32 %v1179, 0.0036580483
  %v1181 = vmul.f32 %v1176, %v1180
  %v1182 = vadd.f32 %v1181, 0.05243302
  %v1183 = vmul.f32 %v1176, %v1182
  %v1184 = vadd.f32 %v1183, 0.18741608
  %v1185 = vmul.f32 %v1176, %v1184
  %v1186 = vadd.f32 %v1185, 1.1283791
  %v1187 = vmul.f32 %v402, %v1186
  %v1188 = vmul.f32 %v1176, 3.8918573e-05
  %v1189 = vadd.f32 %v1188, 0.001143296
  %v1190 = vmul.f32 %v1176, %v1189
  %v1191 = vadd.f32 %v1190, 0.014752088
  %v1192 = vmul.f32 %v1176, %v1191
  %v1193 = vadd.f32 %v1192, 0.112945676
  %v1194 = vmul.f32 %v1176, %v1193
  %v1195 = vadd.f32 %v1194, 0.4994258
  %v1196 = vmul.f32 %v1176, %v1195
  %v1197 = vadd.f32 %v1196, 1.0
  %v1198 = vrcp.pop %v1197
  %v1199 = vmul.f32 %v1197, %v1198
  %v1200 = vsub.f32 1.0, %v1199
  %v1201 = vmul.f32 %v1198, %v1200
  %v1202 = vadd.f32 %v1198, %v1201
  %vm1203 = vweird.f32 %v1197
  %vm1204 = vweird.f32 %v1198
  %vm1205 = vmor %vm1203, %vm1204
  %v1206 = vsel %vm1205, %v1198, %v1202
  %v1207 = vand.u32 2147483647, %v1197
  %vm1208 = vcmp.eq.f32.partialorder %v1207, 8.507059e+37
  %v1209 = vand.u32 %v1197, 2147483648
  %v1210 = vor.u32 1.1754944e-38, %v1209
  %v1211 = vsel %vm1208, %v1210, %v1206
  %v1212 = vmul.f32 %v1187, %v1211
  %v1213 = vmin.f32 %v1212, 1.0
  %v1214 = vmax.f32 %v1213, -1.0
  %v1215 = vmul.f32 %v403, %v403
  %v1216 = vmin.f32 16.0, %v1215
  %v1217 = vmul.f32 %v1216, 2.1237322e-06
  %v1218 = vadd.f32 %v1217, 0.00028619796
  %v1219 = vmul.f32 %v1216, %v1218
  %v1220 = vadd.f32 %v1219, 0.0036580483
  %v1221 = vmul.f32 %v1216, %v1220
  %v1222 = vadd.f32 %v1221, 0.05243302
  %v1223 = vmul.f32 %v1216, %v1222
  %v1224 = vadd.f32 %v1223, 0.18741608
  %v1225 = vmul.f32 %v1216, %v1224
  %v1226 = vadd.f32 %v1225, 1.1283791
  %v1227 = vmul.f32 %v403, %v1226
  %v1228 = vmul.f32 %v1216, 3.8918573e-05
  %v1229 = vadd.f32 %v1228, 0.001143296
  %v1230 = vmul.f32 %v1216, %v1229
  %v1231 = vadd.f32 %v1230, 0.014752088
  %v1232 = vmul.f32 %v1216, %v1231
  %v1233 = vadd.f32 %v1232, 0.112945676
  %v1234 = vmul.f32 %v1216, %v1233
  %v1235 = vadd.f32 %v1234, 0.4994258
  %v1236 = vmul.f32 %v1216, %v1235
  %v1237 = vadd.f32 %v1236, 1.0
  %v1238 = vrcp.pop %v1237
  %v1239 = vmul.f32 %v1237, %v1238
  %v1240 = vsub.f32 1.0, %v1239
  %v1241 = vmul.f32 %v1238, %v1240
  %v1242 = vadd.f32 %v1238, %v1241
  %vm1243 = vweird.f32 %v1237
  %vm1244 = vweird.f32 %v1238
  %vm1245 = vmor %vm1243, %vm1244
  %v1246 = vsel %vm1245, %v1238, %v1242
  %v1247 = vand.u32 2147483647, %v1237
  %vm1248 = vcmp.eq.f32.partialorder %v1247, 8.507059e+37
  %v1249 = vand.u32 %v1237, 2147483648
  %v1250 = vor.u32 1.1754944e-38, %v1249
  %v1251 = vsel %vm1248, %v1250, %v1246
  %v1252 = vmul.f32 %v1227, %v1251
  %v1253 = vmin.f32 %v1252, 1.0
  %v1254 = vmax.f32 %v1253, -1.0
  %v1255 = vmul.f32 %v404, %v404
  %v1256 = vmin.f32 16.0, %v1255
  %v1257 = vmul.f32 %v1256, 2.1237322e-06
  %v1258 = vadd.f32 %v1257, 0.00028619796
  %v1259 = vmul.f32 %v1256, %v1258
  %v1260 = vadd.f32 %v1259, 0.0036580483
  %v1261 = vmul.f32 %v1256, %v1260
  %v1262 = vadd.f32 %v1261, 0.05243302
  %v1263 = vmul.f32 %v1256, %v1262
  %v1264 = vadd.f32 %v1263, 0.18741608
  %v1265 = vmul.f32 %v1256, %v1264
  %v1266 = vadd.f32 %v1265, 1.1283791
  %v1267 = vmul.f32 %v404, %v1266
  %v1268 = vmul.f32 %v1256, 3.8918573e-05
  %v1269 = vadd.f32 %v1268, 0.001143296
  %v1270 = vmul.f32 %v1256, %v1269
  %v1271 = vadd.f32 %v1270, 0.014752088
  %v1272 = vmul.f32 %v1256, %v1271
  %v1273 = vadd.f32 %v1272, 0.112945676
  %v1274 = vmul.f32 %v1256, %v1273
  %v1275 = vadd.f32 %v1274, 0.4994258
  %v1276 = vmul.f32 %v1256, %v1275
  %v1277 = vadd.f32 %v1276, 1.0
  %v1278 = vrcp.pop %v1277
  %v1279 = vmul.f32 %v1277, %v1278
  %v1280 = vsub.f32 1.0, %v1279
  %v1281 = vmul.f32 %v1278, %v1280
  %v1282 = vadd.f32 %v1278, %v1281
  %vm1283 = vweird.f32 %v1277
  %vm1284 = vweird.f32 %v1278
  %vm1285 = vmor %vm1283, %vm1284
  %v1286 = vsel %vm1285, %v1278, %v1282
  %v1287 = vand.u32 2147483647, %v1277
  %vm1288 = vcmp.eq.f32.partialorder %v1287, 8.507059e+37
  %v1289 = vand.u32 %v1277, 2147483648
  %v1290 = vor.u32 1.1754944e-38, %v1289
  %v1291 = vsel %vm1288, %v1290, %v1286
  %v1292 = vmul.f32 %v1267, %v1291
  %v1293 = vmin.f32 %v1292, 1.0
  %v1294 = vmax.f32 %v1293, -1.0
  %v1295 = vmul.f32 %v405, %v405
  %v1296 = vmin.f32 16.0, %v1295
  %v1297 = vmul.f32 %v1296, 2.1237322e-06
  %v1298 = vadd.f32 %v1297, 0.00028619796
  %v1299 = vmul.f32 %v1296, %v1298
  %v1300 = vadd.f32 %v1299, 0.0036580483
  %v1301 = vmul.f32 %v1296, %v1300
  %v1302 = vadd.f32 %v1301, 0.05243302
  %v1303 = vmul.f32 %v1296, %v1302
  %v1304 = vadd.f32 %v1303, 0.18741608
  %v1305 = vmul.f32 %v1296, %v1304
  %v1306 = vadd.f32 %v1305, 1.1283791
  %v1307 = vmul.f32 %v405, %v1306
  %v1308 = vmul.f32 %v1296, 3.8918573e-05
  %v1309 = vadd.f32 %v1308, 0.001143296
  %v1310 = vmul.f32 %v1296, %v1309
  %v1311 = vadd.f32 %v1310, 0.014752088
  %v1312 = vmul.f32 %v1296, %v1311
  %v1313 = vadd.f32 %v1312, 0.112945676
  %v1314 = vmul.f32 %v1296, %v1313
  %v1315 = vadd.f32 %v1314, 0.4994258
  %v1316 = vmul.f32 %v1296, %v1315
  %v1317 = vadd.f32 %v1316, 1.0
  %v1318 = vrcp.pop %v1317
  %v1319 = vmul.f32 %v1317, %v1318
  %v1320 = vsub.f32 1.0, %v1319
  %v1321 = vmul.f32 %v1318, %v1320
  %v1322 = vadd.f32 %v1318, %v1321
  %vm1323 = vweird.f32 %v1317
  %vm1324 = vweird.f32 %v1318
  %vm1325 = vmor %vm1323, %vm1324
  %v1326 = vsel %vm1325, %v1318, %v1322
  %v1327 = vand.u32 2147483647, %v1317
  %vm1328 = vcmp.eq.f32.partialorder %v1327, 8.507059e+37
  %v1329 = vand.u32 %v1317, 2147483648
  %v1330 = vor.u32 1.1754944e-38, %v1329
  %v1331 = vsel %vm1328, %v1330, %v1326
  %v1332 = vmul.f32 %v1307, %v1331
  %v1333 = vmin.f32 %v1332, 1.0
  %v1334 = vmax.f32 %v1333, -1.0
  %v1335 = vmul.f32 %v406, %v406
  %v1336 = vmin.f32 16.0, %v1335
  %v1337 = vmul.f32 %v1336, 2.1237322e-06
  %v1338 = vadd.f32 %v1337, 0.00028619796
  %v1339 = vmul.f32 %v1336, %v1338
  %v1340 = vadd.f32 %v1339, 0.0036580483
  %v1341 = vmul.f32 %v1336, %v1340
  %v1342 = vadd.f32 %v1341, 0.05243302
  %v1343 = vmul.f32 %v1336, %v1342
  %v1344 = vadd.f32 %v1343, 0.18741608
  %v1345 = vmul.f32 %v1336, %v1344
  %v1346 = vadd.f32 %v1345, 1.1283791
  %v1347 = vmul.f32 %v406, %v1346
  %v1348 = vmul.f32 %v1336, 3.8918573e-05
  %v1349 = vadd.f32 %v1348, 0.001143296
  %v1350 = vmul.f32 %v1336, %v1349
  %v1351 = vadd.f32 %v1350, 0.014752088
  %v1352 = vmul.f32 %v1336, %v1351
  %v1353 = vadd.f32 %v1352, 0.112945676
  %v1354 = vmul.f32 %v1336, %v1353
  %v1355 = vadd.f32 %v1354, 0.4994258
  %v1356 = vmul.f32 %v1336, %v1355
  %v1357 = vadd.f32 %v1356, 1.0
  %v1358 = vrcp.pop %v1357
  %v1359 = vmul.f32 %v1357, %v1358
  %v1360 = vsub.f32 1.0, %v1359
  %v1361 = vmul.f32 %v1358, %v1360
  %v1362 = vadd.f32 %v1358, %v1361
  %vm1363 = vweird.f32 %v1357
  %vm1364 = vweird.f32 %v1358
  %vm1365 = vmor %vm1363, %vm1364
  %v1366 = vsel %vm1365, %v1358, %v1362
  %v1367 = vand.u32 2147483647, %v1357
  %vm1368 = vcmp.eq.f32.partialorder %v1367, 8.507059e+37
  %v1369 = vand.u32 %v1357, 2147483648
  %v1370 = vor.u32 1.1754944e-38, %v1369
  %v1371 = vsel %vm1368, %v1370, %v1366
  %v1372 = vmul.f32 %v1347, %v1371
  %v1373 = vmin.f32 %v1372, 1.0
  %v1374 = vmax.f32 %v1373, -1.0
  %v1375 = vmul.f32 %v407, %v407
  %v1376 = vmin.f32 16.0, %v1375
  %v1377 = vmul.f32 %v1376, 2.1237322e-06
  %v1378 = vadd.f32 %v1377, 0.00028619796
  %v1379 = vmul.f32 %v1376, %v1378
  %v1380 = vadd.f32 %v1379, 0.0036580483
  %v1381 = vmul.f32 %v1376, %v1380
  %v1382 = vadd.f32 %v1381, 0.05243302
  %v1383 = vmul.f32 %v1376, %v1382
  %v1384 = vadd.f32 %v1383, 0.18741608
  %v1385 = vmul.f32 %v1376, %v1384
  %v1386 = vadd.f32 %v1385, 1.1283791
  %v1387 = vmul.f32 %v407, %v1386
  %v1388 = vmul.f32 %v1376, 3.8918573e-05
  %v1389 = vadd.f32 %v1388, 0.001143296
  %v1390 = vmul.f32 %v1376, %v1389
  %v1391 = vadd.f32 %v1390, 0.014752088
  %v1392 = vmul.f32 %v1376, %v1391
  %v1393 = vadd.f32 %v1392, 0.112945676
  %v1394 = vmul.f32 %v1376, %v1393
  %v1395 = vadd.f32 %v1394, 0.4994258
  %v1396 = vmul.f32 %v1376, %v1395
  %v1397 = vadd.f32 %v1396, 1.0
  %v1398 = vrcp.pop %v1397
  %v1399 = vmul.f32 %v1397, %v1398
  %v1400 = vsub.f32 1.0, %v1399
  %v1401 = vmul.f32 %v1398, %v1400
  %v1402 = vadd.f32 %v1398, %v1401
  %vm1403 = vweird.f32 %v1397
  %vm1404 = vweird.f32 %v1398
  %vm1405 = vmor %vm1403, %vm1404
  %v1406 = vsel %vm1405, %v1398, %v1402
  %v1407 = vand.u32 2147483647, %v1397
  %vm1408 = vcmp.eq.f32.partialorder %v1407, 8.507059e+37
  %v1409 = vand.u32 %v1397, 2147483648
  %v1410 = vor.u32 1.1754944e-38, %v1409
  %v1411 = vsel %vm1408, %v1410, %v1406
  %v1412 = vmul.f32 %v1387, %v1411
  %v1413 = vmin.f32 %v1412, 1.0
  %v1414 = vmax.f32 %v1413, -1.0
  %v1415 = vmul.f32 %v408, %v408
  %v1416 = vmin.f32 16.0, %v1415
  %v1417 = vmul.f32 %v1416, 2.1237322e-06
  %v1418 = vadd.f32 %v1417, 0.00028619796
  %v1419 = vmul.f32 %v1416, %v1418
  %v1420 = vadd.f32 %v1419, 0.0036580483
  %v1421 = vmul.f32 %v1416, %v1420
  %v1422 = vadd.f32 %v1421, 0.05243302
  %v1423 = vmul.f32 %v1416, %v1422
  %v1424 = vadd.f32 %v1423, 0.18741608
  %v1425 = vmul.f32 %v1416, %v1424
  %v1426 = vadd.f32 %v1425, 1.1283791
  %v1427 = vmul.f32 %v408, %v1426
  %v1428 = vmul.f32 %v1416, 3.8918573e-05
  %v1429 = vadd.f32 %v1428, 0.001143296
  %v1430 = vmul.f32 %v1416, %v1429
  %v1431 = vadd.f32 %v1430, 0.014752088
  %v1432 = vmul.f32 %v1416, %v1431
  %v1433 = vadd.f32 %v1432, 0.112945676
  %v1434 = vmul.f32 %v1416, %v1433
  %v1435 = vadd.f32 %v1434, 0.4994258
  %v1436 = vmul.f32 %v1416, %v1435
  %v1437 = vadd.f32 %v1436, 1.0
  %v1438 = vrcp.pop %v1437
  %v1439 = vmul.f32 %v1437, %v1438
  %v1440 = vsub.f32 1.0, %v1439
  %v1441 = vmul.f32 %v1438, %v1440
  %v1442 = vadd.f32 %v1438, %v1441
  %vm1443 = vweird.f32 %v1437
  %vm1444 = vweird.f32 %v1438
  %vm1445 = vmor %vm1443, %vm1444
  %v1446 = vsel %vm1445, %v1438, %v1442
  %v1447 = vand.u32 2147483647, %v1437
  %vm1448 = vcmp.eq.f32.partialorder %v1447, 8.507059e+37
  %v1449 = vand.u32 %v1437, 2147483648
  %v1450 = vor.u32 1.1754944e-38, %v1449
  %v1451 = vsel %vm1448, %v1450, %v1446
  %v1452 = vmul.f32 %v1427, %v1451
  %v1453 = vmin.f32 %v1452, 1.0
  %v1454 = vmax.f32 %v1453, -1.0
  %v1455 = vmul.f32 %v409, %v409
  %v1456 = vmin.f32 16.0, %v1455
  %v1457 = vmul.f32 %v1456, 2.1237322e-06
  %v1458 = vadd.f32 %v1457, 0.00028619796
  %v1459 = vmul.f32 %v1456, %v1458
  %v1460 = vadd.f32 %v1459, 0.0036580483
  %v1461 = vmul.f32 %v1456, %v1460
  %v1462 = vadd.f32 %v1461, 0.05243302
  %v1463 = vmul.f32 %v1456, %v1462
  %v1464 = vadd.f32 %v1463, 0.18741608
  %v1465 = vmul.f32 %v1456, %v1464
  %v1466 = vadd.f32 %v1465, 1.1283791
  %v1467 = vmul.f32 %v409, %v1466
  %v1468 = vmul.f32 %v1456, 3.8918573e-05
  %v1469 = vadd.f32 %v1468, 0.001143296
  %v1470 = vmul.f32 %v1456, %v1469
  %v1471 = vadd.f32 %v1470, 0.014752088
  %v1472 = vmul.f32 %v1456, %v1471
  %v1473 = vadd.f32 %v1472, 0.112945676
  %v1474 = vmul.f32 %v1456, %v1473
  %v1475 = vadd.f32 %v1474, 0.4994258
  %v1476 = vmul.f32 %v1456, %v1475
  %v1477 = vadd.f32 %v1476, 1.0
  %v1478 = vrcp.pop %v1477
  %v1479 = vmul.f32 %v1477, %v1478
  %v1480 = vsub.f32 1.0, %v1479
  %v1481 = vmul.f32 %v1478, %v1480
  %v1482 = vadd.f32 %v1478, %v1481
  %vm1483 = vweird.f32 %v1477
  %vm1484 = vweird.f32 %v1478
  %vm1485 = vmor %vm1483, %vm1484
  %v1486 = vsel %vm1485, %v1478, %v1482
  %v1487 = vand.u32 2147483647, %v1477
  %vm1488 = vcmp.eq.f32.partialorder %v1487, 8.507059e+37
  %v1489 = vand.u32 %v1477, 2147483648
  %v1490 = vor.u32 1.1754944e-38, %v1489
  %v1491 = vsel %vm1488, %v1490, %v1486
  %v1492 = vmul.f32 %v1467, %v1491
  %v1493 = vmin.f32 %v1492, 1.0
  %v1494 = vmax.f32 %v1493, -1.0
  %v1495 = vmul.f32 %v410, %v410
  %v1496 = vmin.f32 16.0, %v1495
  %v1497 = vmul.f32 %v1496, 2.1237322e-06
  %v1498 = vadd.f32 %v1497, 0.00028619796
  %v1499 = vmul.f32 %v1496, %v1498
  %v1500 = vadd.f32 %v1499, 0.0036580483
  %v1501 = vmul.f32 %v1496, %v1500
  %v1502 = vadd.f32 %v1501, 0.05243302
  %v1503 = vmul.f32 %v1496, %v1502
  %v1504 = vadd.f32 %v1503, 0.18741608
  %v1505 = vmul.f32 %v1496, %v1504
  %v1506 = vadd.f32 %v1505, 1.1283791
  %v1507 = vmul.f32 %v410, %v1506
  %v1508 = vmul.f32 %v1496, 3.8918573e-05
  %v1509 = vadd.f32 %v1508, 0.001143296
  %v1510 = vmul.f32 %v1496, %v1509
  %v1511 = vadd.f32 %v1510, 0.014752088
  %v1512 = vmul.f32 %v1496, %v1511
  %v1513 = vadd.f32 %v1512, 0.112945676
  %v1514 = vmul.f32 %v1496, %v1513
  %v1515 = vadd.f32 %v1514, 0.4994258
  %v1516 = vmul.f32 %v1496, %v1515
  %v1517 = vadd.f32 %v1516, 1.0
  %v1518 = vrcp.pop %v1517
  %v1519 = vmul.f32 %v1517, %v1518
  %v1520 = vsub.f32 1.0, %v1519
  %v1521 = vmul.f32 %v1518, %v1520
  %v1522 = vadd.f32 %v1518, %v1521
  %vm1523 = vweird.f32 %v1517
  %vm1524 = vweird.f32 %v1518
  %vm1525 = vmor %vm1523, %vm1524
  %v1526 = vsel %vm1525, %v1518, %v1522
  %v1527 = vand.u32 2147483647, %v1517
  %vm1528 = vcmp.eq.f32.partialorder %v1527, 8.507059e+37
  %v1529 = vand.u32 %v1517, 2147483648
  %v1530 = vor.u32 1.1754944e-38, %v1529
  %v1531 = vsel %vm1528, %v1530, %v1526
  %v1532 = vmul.f32 %v1507, %v1531
  %v1533 = vmin.f32 %v1532, 1.0
  %v1534 = vmax.f32 %v1533, -1.0
  %v1535 = vmul.f32 %v411, %v411
  %v1536 = vmin.f32 16.0, %v1535
  %v1537 = vmul.f32 %v1536, 2.1237322e-06
  %v1538 = vadd.f32 %v1537, 0.00028619796
  %v1539 = vmul.f32 %v1536, %v1538
  %v1540 = vadd.f32 %v1539, 0.0036580483
  %v1541 = vmul.f32 %v1536, %v1540
  %v1542 = vadd.f32 %v1541, 0.05243302
  %v1543 = vmul.f32 %v1536, %v1542
  %v1544 = vadd.f32 %v1543, 0.18741608
  %v1545 = vmul.f32 %v1536, %v1544
  %v1546 = vadd.f32 %v1545, 1.1283791
  %v1547 = vmul.f32 %v411, %v1546
  %v1548 = vmul.f32 %v1536, 3.8918573e-05
  %v1549 = vadd.f32 %v1548, 0.001143296
  %v1550 = vmul.f32 %v1536, %v1549
  %v1551 = vadd.f32 %v1550, 0.014752088
  %v1552 = vmul.f32 %v1536, %v1551
  %v1553 = vadd.f32 %v1552, 0.112945676
  %v1554 = vmul.f32 %v1536, %v1553
  %v1555 = vadd.f32 %v1554, 0.4994258
  %v1556 = vmul.f32 %v1536, %v1555
  %v1557 = vadd.f32 %v1556, 1.0
  %v1558 = vrcp.pop %v1557
  %v1559 = vmul.f32 %v1557, %v1558
  %v1560 = vsub.f32 1.0, %v1559
  %v1561 = vmul.f32 %v1558, %v1560
  %v1562 = vadd.f32 %v1558, %v1561
  %vm1563 = vweird.f32 %v1557
  %vm1564 = vweird.f32 %v1558
  %vm1565 = vmor %vm1563, %vm1564
  %v1566 = vsel %vm1565, %v1558, %v1562
  %v1567 = vand.u32 2147483647, %v1557
  %vm1568 = vcmp.eq.f32.partialorder %v1567, 8.507059e+37
  %v1569 = vand.u32 %v1557, 2147483648
  %v1570 = vor.u32 1.1754944e-38, %v1569
  %v1571 = vsel %vm1568, %v1570, %v1566
  %v1572 = vmul.f32 %v1547, %v1571
  %v1573 = vmin.f32 %v1572, 1.0
  %v1574 = vmax.f32 %v1573, -1.0
  %v1575 = vmul.f32 %v412, %v412
  %v1576 = vmin.f32 16.0, %v1575
  %v1577 = vmul.f32 %v1576, 2.1237322e-06
  %v1578 = vadd.f32 %v1577, 0.00028619796
  %v1579 = vmul.f32 %v1576, %v1578
  %v1580 = vadd.f32 %v1579, 0.0036580483
  %v1581 = vmul.f32 %v1576, %v1580
  %v1582 = vadd.f32 %v1581, 0.05243302
  %v1583 = vmul.f32 %v1576, %v1582
  %v1584 = vadd.f32 %v1583, 0.18741608
  %v1585 = vmul.f32 %v1576, %v1584
  %v1586 = vadd.f32 %v1585, 1.1283791
  %v1587 = vmul.f32 %v412, %v1586
  %v1588 = vmul.f32 %v1576, 3.8918573e-05
  %v1589 = vadd.f32 %v1588, 0.001143296
  %v1590 = vmul.f32 %v1576, %v1589
  %v1591 = vadd.f32 %v1590, 0.014752088
  %v1592 = vmul.f32 %v1576, %v1591
  %v1593 = vadd.f32 %v1592, 0.112945676
  %v1594 = vmul.f32 %v1576, %v1593
  %v1595 = vadd.f32 %v1594, 0.4994258
  %v1596 = vmul.f32 %v1576, %v1595
  %v1597 = vadd.f32 %v1596, 1.0
  %v1598 = vrcp.pop %v1597
  %v1599 = vmul.f32 %v1597, %v1598
  %v1600 = vsub.f32 1.0, %v1599
  %v1601 = vmul.f32 %v1598, %v1600
  %v1602 = vadd.f32 %v1598, %v1601
  %vm1603 = vweird.f32 %v1597
  %vm1604 = vweird.f32 %v1598
  %vm1605 = vmor %vm1603, %vm1604
  %v1606 = vsel %vm1605, %v1598, %v1602
  %v1607 = vand.u32 2147483647, %v1597
  %vm1608 = vcmp.eq.f32.partialorder %v1607, 8.507059e+37
  %v1609 = vand.u32 %v1597, 2147483648
  %v1610 = vor.u32 1.1754944e-38, %v1609
  %v1611 = vsel %vm1608, %v1610, %v1606
  %v1612 = vmul.f32 %v1587, %v1611
  %v1613 = vmin.f32 %v1612, 1.0
  %v1614 = vmax.f32 %v1613, -1.0
  %v1615 = vmul.f32 %v413, %v413
  %v1616 = vmin.f32 16.0, %v1615
  %v1617 = vmul.f32 %v1616, 2.1237322e-06
  %v1618 = vadd.f32 %v1617, 0.00028619796
  %v1619 = vmul.f32 %v1616, %v1618
  %v1620 = vadd.f32 %v1619, 0.0036580483
  %v1621 = vmul.f32 %v1616, %v1620
  %v1622 = vadd.f32 %v1621, 0.05243302
  %v1623 = vmul.f32 %v1616, %v1622
  %v1624 = vadd.f32 %v1623, 0.18741608
  %v1625 = vmul.f32 %v1616, %v1624
  %v1626 = vadd.f32 %v1625, 1.1283791
  %v1627 = vmul.f32 %v413, %v1626
  %v1628 = vmul.f32 %v1616, 3.8918573e-05
  %v1629 = vadd.f32 %v1628, 0.001143296
  %v1630 = vmul.f32 %v1616, %v1629
  %v1631 = vadd.f32 %v1630, 0.014752088
  %v1632 = vmul.f32 %v1616, %v1631
  %v1633 = vadd.f32 %v1632, 0.112945676
  %v1634 = vmul.f32 %v1616, %v1633
  %v1635 = vadd.f32 %v1634, 0.4994258
  %v1636 = vmul.f32 %v1616, %v1635
  %v1637 = vadd.f32 %v1636, 1.0
  %v1638 = vrcp.pop %v1637
  %v1639 = vmul.f32 %v1637, %v1638
  %v1640 = vsub.f32 1.0, %v1639
  %v1641 = vmul.f32 %v1638, %v1640
  %v1642 = vadd.f32 %v1638, %v1641
  %vm1643 = vweird.f32 %v1637
  %vm1644 = vweird.f32 %v1638
  %vm1645 = vmor %vm1643, %vm1644
  %v1646 = vsel %vm1645, %v1638, %v1642
  %v1647 = vand.u32 2147483647, %v1637
  %vm1648 = vcmp.eq.f32.partialorder %v1647, 8.507059e+37
  %v1649 = vand.u32 %v1637, 2147483648
  %v1650 = vor.u32 1.1754944e-38, %v1649
  %v1651 = vsel %vm1648, %v1650, %v1646
  %v1652 = vmul.f32 %v1627, %v1651
  %v1653 = vmin.f32 %v1652, 1.0
  %v1654 = vmax.f32 %v1653, -1.0
  %v1655 = vmul.f32 %v414, %v414
  %v1656 = vmin.f32 16.0, %v1655
  %v1657 = vmul.f32 %v1656, 2.1237322e-06
  %v1658 = vadd.f32 %v1657, 0.00028619796
  %v1659 = vmul.f32 %v1656, %v1658
  %v1660 = vadd.f32 %v1659, 0.0036580483
  %v1661 = vmul.f32 %v1656, %v1660
  %v1662 = vadd.f32 %v1661, 0.05243302
  %v1663 = vmul.f32 %v1656, %v1662
  %v1664 = vadd.f32 %v1663, 0.18741608
  %v1665 = vmul.f32 %v1656, %v1664
  %v1666 = vadd.f32 %v1665, 1.1283791
  %v1667 = vmul.f32 %v414, %v1666
  %v1668 = vmul.f32 %v1656, 3.8918573e-05
  %v1669 = vadd.f32 %v1668, 0.001143296
  %v1670 = vmul.f32 %v1656, %v1669
  %v1671 = vadd.f32 %v1670, 0.014752088
  %v1672 = vmul.f32 %v1656, %v1671
  %v1673 = vadd.f32 %v1672, 0.112945676
  %v1674 = vmul.f32 %v1656, %v1673
  %v1675 = vadd.f32 %v1674, 0.4994258
  %v1676 = vmul.f32 %v1656, %v1675
  %v1677 = vadd.f32 %v1676, 1.0
  %v1678 = vrcp.pop %v1677
  %v1679 = vmul.f32 %v1677, %v1678
  %v1680 = vsub.f32 1.0, %v1679
  %v1681 = vmul.f32 %v1678, %v1680
  %v1682 = vadd.f32 %v1678, %v1681
  %vm1683 = vweird.f32 %v1677
  %vm1684 = vweird.f32 %v1678
  %vm1685 = vmor %vm1683, %vm1684
  %v1686 = vsel %vm1685, %v1678, %v1682
  %v1687 = vand.u32 2147483647, %v1677
  %vm1688 = vcmp.eq.f32.partialorder %v1687, 8.507059e+37
  %v1689 = vand.u32 %v1677, 2147483648
  %v1690 = vor.u32 1.1754944e-38, %v1689
  %v1691 = vsel %vm1688, %v1690, %v1686
  %v1692 = vmul.f32 %v1667, %v1691
  %v1693 = vmin.f32 %v1692, 1.0
  %v1694 = vmax.f32 %v1693, -1.0
  %v1695 = vadd.f32 %v454, 1.0
  %v1696 = vadd.f32 %v494, 1.0
  %v1697 = vadd.f32 %v534, 1.0
  %v1698 = vadd.f32 %v574, 1.0
  %v1699 = vadd.f32 %v614, 1.0
  %v1700 = vadd.f32 %v654, 1.0
  %v1701 = vadd.f32 %v694, 1.0
  %v1702 = vadd.f32 %v734, 1.0
  %v1703 = vadd.f32 %v774, 1.0
  %v1704 = vadd.f32 %v814, 1.0
  %v1705 = vadd.f32 %v854, 1.0
  %v1706 = vadd.f32 %v894, 1.0
  %v1707 = vadd.f32 %v934, 1.0
  %v1708 = vadd.f32 %v974, 1.0
  %v1709 = vadd.f32 %v1014, 1.0
  %v1710 = vadd.f32 %v1054, 1.0
  %v1711 = vadd.f32 %v1094, 1.0
  %v1712 = vadd.f32 %v1134, 1.0
  %v1713 = vadd.f32 %v1174, 1.0
  %v1714 = vadd.f32 %v1214, 1.0
  %v1715 = vadd.f32 %v1254, 1.0
  %v1716 = vadd.f32 %v1294, 1.0
  %v1717 = vadd.f32 %v1334, 1.0
  %v1718 = vadd.f32 %v1374, 1.0
  %v1719 = vadd.f32 %v1414, 1.0
  %v1720 = vadd.f32 %v1454, 1.0
  %v1721 = vadd.f32 %v1494, 1.0
  %v1722 = vadd.f32 %v1534, 1.0
  %v1723 = vadd.f32 %v1574, 1.0
  %v1724 = vadd.f32 %v1614, 1.0
  %v1725 = vadd.f32 %v1654, 1.0
  %v1726 = vadd.f32 %v1694, 1.0
  %v1727 = vmul.f32 %v351, %v1695
  %v1728 = vmul.f32 %v352, %v1696
  %v1729 = vmul.f32 %v353, %v1697
  %v1730 = vmul.f32 %v354, %v1698
  %v1731 = vmul.f32 %v355, %v1699
  %v1732 = vmul.f32 %v356, %v1700
  %v1733 = vmul.f32 %v357, %v1701
  %v1734 = vmul.f32 %v358, %v1702
  %v1735 = vmul.f32 %v359, %v1703
  %v1736 = vmul.f32 %v360, %v1704
  %v1737 = vmul.f32 %v361, %v1705
  %v1738 = vmul.f32 %v362, %v1706
  %v1739 = vmul.f32 %v363, %v1707
  %v1740 = vmul.f32 %v364, %v1708
  %v1741 = vmul.f32 %v365, %v1709
  %v1742 = vmul.f32 %v366, %v1710
  %v1743 = vmul.f32 %v367, %v1711
  %v1744 = vmul.f32 %v368, %v1712
  %v1745 = vmul.f32 %v369, %v1713
  %v1746 = vmul.f32 %v370, %v1714
  %v1747 = vmul.f32 %v371, %v1715
  %v1748 = vmul.f32 %v372, %v1716
  %v1749 = vmul.f32 %v373, %v1717
  %v1750 = vmul.f32 %v374, %v1718
  %v1751 = vmul.f32 %v375, %v1719
  %v1752 = vmul.f32 %v376, %v1720
  %v1753 = vmul.f32 %v377, %v1721
  %v1754 = vmul.f32 %v378, %v1722
  %v1755 = vmul.f32 %v379, %v1723
  %v1756 = vmul.f32 %v380, %v1724
  %v1757 = vmul.f32 %v381, %v1725
  %v1758 = vmul.f32 %v382, %v1726
  %v1759 = vpack.c.bf16 %v1728, %v1727
  %v1760 = vpack.c.bf16 %v1730, %v1729
  %v1761 = vpack.c.bf16 %v1732, %v1731
  %v1762 = vpack.c.bf16 %v1734, %v1733
  %v1763 = vpack.c.bf16 %v1736, %v1735
  %v1764 = vpack.c.bf16 %v1738, %v1737
  %v1765 = vpack.c.bf16 %v1740, %v1739
  %v1766 = vpack.c.bf16 %v1742, %v1741
  %v1767 = vpack.c.bf16 %v1744, %v1743
  %v1768 = vpack.c.bf16 %v1746, %v1745
  %v1769 = vpack.c.bf16 %v1748, %v1747
  %v1770 = vpack.c.bf16 %v1750, %v1749
  %v1771 = vpack.c.bf16 %v1752, %v1751
  %v1772 = vpack.c.bf16 %v1754, %v1753
  %v1773 = vpack.c.bf16 %v1756, %v1755
  %v1774 = vpack.c.bf16 %v1758, %v1757
  %1775 = vst [vmem:[%s2] sm:$0xff] %v1759
  %1776 = vst [vmem:[%s2 + $0x8] sm:$0xff] %v1760
  %1777 = vst [vmem:[%s2 + $0x10] sm:$0xff] %v1761
  %1778 = vst [vmem:[%s2 + $0x18] sm:$0xff] %v1762
  %1779 = vst [vmem:[%s2 + $0x20] sm:$0xff] %v1763
  %1780 = vst [vmem:[%s2 + $0x28] sm:$0xff] %v1764
  %1781 = vst [vmem:[%s2 + $0x30] sm:$0xff] %v1765
  %1782 = vst [vmem:[%s2 + $0x38] sm:$0xff] %v1766
  %1783 = vst [vmem:[%s2 + $0x40] sm:$0xff] %v1767
  %1784 = vst [vmem:[%s2 + $0x48] sm:$0xff] %v1768
  %1785 = vst [vmem:[%s2 + $0x50] sm:$0xff] %v1769
  %1786 = vst [vmem:[%s2 + $0x58] sm:$0xff] %v1770
  %1787 = vst [vmem:[%s2 + $0x60] sm:$0xff] %v1771
  %1788 = vst [vmem:[%s2 + $0x68] sm:$0xff] %v1772
  %1789 = vst [vmem:[%s2 + $0x70] sm:$0xff] %v1773
  %1790 = vst [vmem:[%s2 + $0x78] sm:$0xff] %v1774
  // Predicated region
  $region10: #{brainx_forward.31} parent=0 // pred_check
    _
  $region11: #{brainx_forward.31} parent=0 // pred_check_branch
    %1792 = sbr.rel (0) target = $region13
  $region12: #{brainx_forward.31} parent=0 // pred_region
    _
  $region13: #{brainx_forward.31} parent=0 // pred_fallthru
    _
  // Predicated region
  $region14: #{brainx_forward.31} parent=0 // pred_check
    _
  $region15: #{brainx_forward.31} parent=0 // pred_check_branch
    %1794 = sbr.rel (0) target = $region17
  $region16: #{brainx_forward.31} parent=0 // pred_region
    _
  $region17: #{brainx_forward.31} parent=0 // pred_fallthru
    _

// kernel: brainx_forward.32
$region0: #{brainx_forward.32}
  #allocation0 [shape = 'u32[]', space=smem, size = 0x4, offset = 0x4, fixed_abs, tag = 'smem constant byte address 0x4 - core index']
  #allocation1 [shape = 'u32[72,128]{1,0:T(1,128)}', space=vmem, size = 0x9000, scoped, tag = 'internal scratch']
  %s0 = inlined_call_operand.vmem [shape: bf16[64,512], index: 0, kind: input, shape index: {}]
  %s1 = inlined_call_operand.vmem [shape: bf16[512,128], index: 1, kind: input, shape index: {}]
  %s2 = inlined_call_operand.vmem [shape: f32[64,128], index: 2, kind: input, shape index: {}]
  %s3 = inlined_call_operand.vmem [shape: f32[64,128], index: 3, kind: output, shape index: {}]
  %s4 = sld [smem:[#allocation0]]
  $region22: #{brainx_forward.32} parent=0
    _
  %s6 = ssub.s32 1, %s4
  %s7 = scalar_select 0, %s6, %s4
  // Predicated region
  $region2: #{brainx_forward.32} parent=0 // pred_check
    _
  $region3: #{brainx_forward.32} parent=0 // pred_check_branch
    %9 = sbr.rel (0) target = $region5
  $region4: #{brainx_forward.32} parent=0 // pred_region
    _
  $region5: #{brainx_forward.32} parent=0 // pred_fallthru
    _
  // Predicated region
  $region6: #{brainx_forward.32} parent=0 // pred_check
    _
  $region7: #{brainx_forward.32} parent=0 // pred_check_branch
    %11 = sbr.rel (0) target = $region9
  $region8: #{brainx_forward.32} parent=0 // pred_region
    _
  $region9: #{brainx_forward.32} parent=0 // pred_fallthru
    _
  // Predicated region
  $region10: #{brainx_forward.32} parent=0 // pred_check
    _
  $region11: #{brainx_forward.32} parent=0 // pred_check_branch
    %13 = sbr.rel (0) target = $region13
  $region12: #{brainx_forward.32} parent=0 // pred_region
    _
  $region13: #{brainx_forward.32} parent=0 // pred_fallthru
    _
  %v14 = vld [vmem:[%s0] sm:$0xff]
  %v15 = vld [vmem:[%s0 + $0x8] sm:$0xff]
  %v16 = vld [vmem:[%s0 + $0x10] sm:$0xff]
  %v17 = vld [vmem:[%s0 + $0x18] sm:$0xff]
  %v18 = vld [vmem:[%s0 + $0x20] sm:$0xff]
  %v19 = vld [vmem:[%s0 + $0x28] sm:$0xff]
  %v20 = vld [vmem:[%s0 + $0x30] sm:$0xff]
  %v21 = vld [vmem:[%s0 + $0x38] sm:$0xff]
  %v22 = vld [vmem:[%s0 + $0x40] sm:$0xff]
  %v23 = vld [vmem:[%s0 + $0x48] sm:$0xff]
  %v24 = vld [vmem:[%s0 + $0x50] sm:$0xff]
  %v25 = vld [vmem:[%s0 + $0x58] sm:$0xff]
  %v26 = vld [vmem:[%s0 + $0x60] sm:$0xff]
  %v27 = vld [vmem:[%s0 + $0x68] sm:$0xff]
  %v28 = vld [vmem:[%s0 + $0x70] sm:$0xff]
  %v29 = vld [vmem:[%s0 + $0x78] sm:$0xff]
  %v30 = vld [vmem:[%s1] sm:$0xf]
  %v31 = vld [vmem:[%s1 + $0x4] sm:$0xf]
  %v32 = vld [vmem:[%s1 + $0x8] sm:$0xf]
  %v33 = vld [vmem:[%s1 + $0xc] sm:$0xf]
  %v34 = vld [vmem:[%s1 + $0x10] sm:$0xf]
  %v35 = vld [vmem:[%s1 + $0x14] sm:$0xf]
  %v36 = vld [vmem:[%s1 + $0x18] sm:$0xf]
  %v37 = vld [vmem:[%s1 + $0x1c] sm:$0xf]
  %v38 = vld [vmem:[%s1 + $0x20] sm:$0xf]
  %v39 = vld [vmem:[%s1 + $0x24] sm:$0xf]
  %v40 = vld [vmem:[%s1 + $0x28] sm:$0xf]
  %v41 = vld [vmem:[%s1 + $0x2c] sm:$0xf]
  %v42 = vld [vmem:[%s1 + $0x30] sm:$0xf]
  %v43 = vld [vmem:[%s1 + $0x34] sm:$0xf]
  %v44 = vld [vmem:[%s1 + $0x38] sm:$0xf]
  %v45 = vld [vmem:[%s1 + $0x3c] sm:$0xf]
  %v46 = vld [vmem:[%s1 + $0x40] sm:$0xf]
  %v47 = vld [vmem:[%s1 + $0x44] sm:$0xf]
  %v48 = vld [vmem:[%s1 + $0x48] sm:$0xf]
  %v49 = vld [vmem:[%s1 + $0x4c] sm:$0xf]
  %v50 = vld [vmem:[%s1 + $0x50] sm:$0xf]
  %v51 = vld [vmem:[%s1 + $0x54] sm:$0xf]
  %v52 = vld [vmem:[%s1 + $0x58] sm:$0xf]
  %v53 = vld [vmem:[%s1 + $0x5c] sm:$0xf]
  %v54 = vld [vmem:[%s1 + $0x60] sm:$0xf]
  %v55 = vld [vmem:[%s1 + $0x64] sm:$0xf]
  %v56 = vld [vmem:[%s1 + $0x68] sm:$0xf]
  %v57 = vld [vmem:[%s1 + $0x6c] sm:$0xf]
  %v58 = vld [vmem:[%s1 + $0x70] sm:$0xf]
  %v59 = vld [vmem:[%s1 + $0x74] sm:$0xf]
  %v60 = vld [vmem:[%s1 + $0x78] sm:$0xf]
  %v61 = vld [vmem:[%s1 + $0x7c] sm:$0xf]
  %v62 = vld [vmem:[%s1 + $0x80] sm:$0xf]
  %v63 = vld [vmem:[%s1 + $0x84] sm:$0xf]
  %v64 = vld [vmem:[%s1 + $0x88] sm:$0xf]
  %v65 = vld [vmem:[%s1 + $0x8c] sm:$0xf]
  %v66 = vld [vmem:[%s1 + $0x90] sm:$0xf]
  %v67 = vld [vmem:[%s1 + $0x94] sm:$0xf]
  %v68 = vld [vmem:[%s1 + $0x98] sm:$0xf]
  %v69 = vld [vmem:[%s1 + $0x9c] sm:$0xf]
  %v70 = vld [vmem:[%s1 + $0xa0] sm:$0xf]
  %v71 = vld [vmem:[%s1 + $0xa4] sm:$0xf]
  %v72 = vld [vmem:[%s1 + $0xa8] sm:$0xf]
  %v73 = vld [vmem:[%s1 + $0xac] sm:$0xf]
  %v74 = vld [vmem:[%s1 + $0xb0] sm:$0xf]
  %v75 = vld [vmem:[%s1 + $0xb4] sm:$0xf]
  %v76 = vld [vmem:[%s1 + $0xb8] sm:$0xf]
  %v77 = vld [vmem:[%s1 + $0xbc] sm:$0xf]
  %v78 = vld [vmem:[%s1 + $0xc0] sm:$0xf]
  %v79 = vld [vmem:[%s1 + $0xc4] sm:$0xf]
  %v80 = vld [vmem:[%s1 + $0xc8] sm:$0xf]
  %v81 = vld [vmem:[%s1 + $0xcc] sm:$0xf]
  %v82 = vld [vmem:[%s1 + $0xd0] sm:$0xf]
  %v83 = vld [vmem:[%s1 + $0xd4] sm:$0xf]
  %v84 = vld [vmem:[%s1 + $0xd8] sm:$0xf]
  %v85 = vld [vmem:[%s1 + $0xdc] sm:$0xf]
  %v86 = vld [vmem:[%s1 + $0xe0] sm:$0xf]
  %v87 = vld [vmem:[%s1 + $0xe4] sm:$0xf]
  %v88 = vld [vmem:[%s1 + $0xe8] sm:$0xf]
  %v89 = vld [vmem:[%s1 + $0xec] sm:$0xf]
  %v90 = vld [vmem:[%s1 + $0xf0] sm:$0xf]
  %v91 = vld [vmem:[%s1 + $0xf4] sm:$0xf]
  %v92 = vld [vmem:[%s1 + $0xf8] sm:$0xf]
  %v93 = vld [vmem:[%s1 + $0xfc] sm:$0xf]
  %v94 = vld [vmem:[%s2] sm:$0xff]
  %v95 = vld [vmem:[%s2 + $0x8] sm:$0xff]
  %v96 = vld [vmem:[%s2 + $0x10] sm:$0xff]
  %v97 = vld [vmem:[%s2 + $0x18] sm:$0xff]
  %v98 = vld [vmem:[%s2 + $0x20] sm:$0xff]
  %v99 = vld [vmem:[%s2 + $0x28] sm:$0xff]
  %v100 = vld [vmem:[%s2 + $0x30] sm:$0xff]
  %v101 = vld [vmem:[%s2 + $0x38] sm:$0xff]
  %v118 = vunpack.c.l.b16 %v14
  %v119 = vunpack.c.h.b16 %v14
  %v120 = vunpack.c.l.b16 %v15
  %v121 = vunpack.c.h.b16 %v15
  %v122 = vunpack.c.l.b16 %v16
  %v123 = vunpack.c.h.b16 %v16
  %v124 = vunpack.c.l.b16 %v17
  %v125 = vunpack.c.h.b16 %v17
  %v126 = vunpack.c.l.b16 %v18
  %v127 = vunpack.c.h.b16 %v18
  %v128 = vunpack.c.l.b16 %v19
  %v129 = vunpack.c.h.b16 %v19
  %v130 = vunpack.c.l.b16 %v20
  %v131 = vunpack.c.h.b16 %v20
  %v132 = vunpack.c.l.b16 %v21
  %v133 = vunpack.c.h.b16 %v21
  %v134 = vunpack.c.l.b16 %v22
  %v135 = vunpack.c.h.b16 %v22
  %v136 = vunpack.c.l.b16 %v23
  %v137 = vunpack.c.h.b16 %v23
  %v138 = vunpack.c.l.b16 %v24
  %v139 = vunpack.c.h.b16 %v24
  %v140 = vunpack.c.l.b16 %v25
  %v141 = vunpack.c.h.b16 %v25
  %v142 = vunpack.c.l.b16 %v26
  %v143 = vunpack.c.h.b16 %v26
  %v144 = vunpack.c.l.b16 %v27
  %v145 = vunpack.c.h.b16 %v27
  %v146 = vunpack.c.l.b16 %v28
  %v147 = vunpack.c.h.b16 %v28
  %v148 = vunpack.c.l.b16 %v29
  %v149 = vunpack.c.h.b16 %v29
  %v150 = vpack.c.b16 %v122, %v118
  %v151 = vpack.c.b16 %v123, %v119
  %v152 = vpack.c.b16 %v124, %v120
  %v153 = vpack.c.b16 %v125, %v121
  %v154 = vpack.c.b16 %v130, %v126
  %v155 = vpack.c.b16 %v131, %v127
  %v156 = vpack.c.b16 %v132, %v128
  %v157 = vpack.c.b16 %v133, %v129
  %v158 = vpack.c.b16 %v138, %v134
  %v159 = vpack.c.b16 %v139, %v135
  %v160 = vpack.c.b16 %v140, %v136
  %v161 = vpack.c.b16 %v141, %v137
  %v162 = vpack.c.b16 %v146, %v142
  %v163 = vpack.c.b16 %v147, %v143
  %v164 = vpack.c.b16 %v148, %v144
  %v165 = vpack.c.b16 %v149, %v145
  %v246 = vunpack.c.l.b16 %v30
  %v247 = vunpack.c.l.b16 %v31
  %v248 = vunpack.c.l.b16 %v32
  %v249 = vunpack.c.l.b16 %v33
  %v250 = vunpack.c.l.b16 %v34
  %v251 = vunpack.c.l.b16 %v35
  %v252 = vunpack.c.l.b16 %v36
  %v253 = vunpack.c.l.b16 %v37
  %v254 = vunpack.c.l.b16 %v38
  %v255 = vunpack.c.l.b16 %v39
  %v256 = vunpack.c.l.b16 %v40
  %v257 = vunpack.c.l.b16 %v41
  %v258 = vunpack.c.l.b16 %v42
  %v259 = vunpack.c.l.b16 %v43
  %v260 = vunpack.c.l.b16 %v44
  %v261 = vunpack.c.l.b16 %v45
  %v262 = vunpack.c.l.b16 %v46
  %v263 = vunpack.c.l.b16 %v47
  %v264 = vunpack.c.l.b16 %v48
  %v265 = vunpack.c.l.b16 %v49
  %v266 = vunpack.c.l.b16 %v50
  %v267 = vunpack.c.l.b16 %v51
  %v268 = vunpack.c.l.b16 %v52
  %v269 = vunpack.c.l.b16 %v53
  %v270 = vunpack.c.l.b16 %v54
  %v271 = vunpack.c.l.b16 %v55
  %v272 = vunpack.c.l.b16 %v56
  %v273 = vunpack.c.l.b16 %v57
  %v274 = vunpack.c.l.b16 %v58
  %v275 = vunpack.c.l.b16 %v59
  %v276 = vunpack.c.l.b16 %v60
  %v277 = vunpack.c.l.b16 %v61
  %v278 = vunpack.c.l.b16 %v62
  %v279 = vunpack.c.l.b16 %v63
  %v280 = vunpack.c.l.b16 %v64
  %v281 = vunpack.c.l.b16 %v65
  %v282 = vunpack.c.l.b16 %v66
  %v283 = vunpack.c.l.b16 %v67
  %v284 = vunpack.c.l.b16 %v68
  %v285 = vunpack.c.l.b16 %v69
  %v286 = vunpack.c.l.b16 %v70
  %v287 = vunpack.c.l.b16 %v71
  %v288 = vunpack.c.l.b16 %v72
  %v289 = vunpack.c.l.b16 %v73
  %v290 = vunpack.c.l.b16 %v74
  %v291 = vunpack.c.l.b16 %v75
  %v292 = vunpack.c.l.b16 %v76
  %v293 = vunpack.c.l.b16 %v77
  %v294 = vunpack.c.l.b16 %v78
  %v295 = vunpack.c.l.b16 %v79
  %v296 = vunpack.c.l.b16 %v80
  %v297 = vunpack.c.l.b16 %v81
  %v298 = vunpack.c.l.b16 %v82
  %v299 = vunpack.c.l.b16 %v83
  %v300 = vunpack.c.l.b16 %v84
  %v301 = vunpack.c.l.b16 %v85
  %v302 = vunpack.c.l.b16 %v86
  %v303 = vunpack.c.l.b16 %v87
  %v304 = vunpack.c.l.b16 %v88
  %v305 = vunpack.c.l.b16 %v89
  %v306 = vunpack.c.l.b16 %v90
  %v307 = vunpack.c.l.b16 %v91
  %v308 = vunpack.c.l.b16 %v92
  %v309 = vunpack.c.l.b16 %v93
  %v310 = vpack.c.b16 %v247, %v246
  %v311 = vpack.c.b16 %v249, %v248
  %v312 = vpack.c.b16 %v251, %v250
  %v313 = vpack.c.b16 %v253, %v252
  %v314 = vpack.c.b16 %v255, %v254
  %v315 = vpack.c.b16 %v257, %v256
  %v316 = vpack.c.b16 %v259, %v258
  %v317 = vpack.c.b16 %v261, %v260
  %v318 = vpack.c.b16 %v263, %v262
  %v319 = vpack.c.b16 %v265, %v264
  %v320 = vpack.c.b16 %v267, %v266
  %v321 = vpack.c.b16 %v269, %v268
  %v322 = vpack.c.b16 %v271, %v270
  %v323 = vpack.c.b16 %v273, %v272
  %v324 = vpack.c.b16 %v275, %v274
  %v325 = vpack.c.b16 %v277, %v276
  %v326 = vpack.c.b16 %v279, %v278
  %v327 = vpack.c.b16 %v281, %v280
  %v328 = vpack.c.b16 %v283, %v282
  %v329 = vpack.c.b16 %v285, %v284
  %v330 = vpack.c.b16 %v287, %v286
  %v331 = vpack.c.b16 %v289, %v288
  %v332 = vpack.c.b16 %v291, %v290
  %v333 = vpack.c.b16 %v293, %v292
  %v334 = vpack.c.b16 %v295, %v294
  %v335 = vpack.c.b16 %v297, %v296
  %v336 = vpack.c.b16 %v299, %v298
  %v337 = vpack.c.b16 %v301, %v300
  %v338 = vpack.c.b16 %v303, %v302
  %v339 = vpack.c.b16 %v305, %v304
  %v340 = vpack.c.b16 %v307, %v306
  %v341 = vpack.c.b16 %v309, %v308
  %374 = vmatpush.bf16.msra.mxu0 %v317
  %375 = vmatpush.bf16.msra.mxu0 %v316
  %376 = vmatpush.bf16.msra.mxu0 %v315
  %377 = vmatpush.bf16.msra.mxu0 %v314
  %378 = vmatpush.bf16.msra.mxu0 %v313
  %379 = vmatpush.bf16.msra.mxu0 %v312
  %380 = vmatpush.bf16.msra.mxu0 %v311
  %381 = vmatpush.bf16.msra.mxu0 %v310
  %382 = vmatmul.bf16.gmra.mxu0 %v150
  %v383 = vpop.f32.mrf.mxu0
  %v384 = vadd.f32 %v94, %v383
  %v385 = vpop.f32.mrf.mxu0
  %v386 = vadd.f32 %v95, %v385
  %387 = vmatmul.bf16.gmra.mxu0 %v154
  %v388 = vpop.f32.mrf.mxu0
  %v389 = vadd.f32 %v96, %v388
  %v390 = vpop.f32.mrf.mxu0
  %v391 = vadd.f32 %v97, %v390
  %392 = vmatmul.bf16.gmra.mxu0 %v158
  %v393 = vpop.f32.mrf.mxu0
  %v394 = vadd.f32 %v98, %v393
  %v395 = vpop.f32.mrf.mxu0
  %v396 = vadd.f32 %v99, %v395
  %397 = vmatmul.bf16.gmra.mxu0 %v162
  %v398 = vpop.f32.mrf.mxu0
  %v399 = vadd.f32 %v100, %v398
  %v400 = vpop.f32.mrf.mxu0
  %v401 = vadd.f32 %v101, %v400
  %402 = vdwg.mxu0
  %403 = vmatpush.bf16.msra.mxu0 %v325
  %404 = vmatpush.bf16.msra.mxu0 %v324
  %405 = vmatpush.bf16.msra.mxu0 %v323
  %406 = vmatpush.bf16.msra.mxu0 %v322
  %407 = vmatpush.bf16.msra.mxu0 %v321
  %408 = vmatpush.bf16.msra.mxu0 %v320
  %409 = vmatpush.bf16.msra.mxu0 %v319
  %410 = vmatpush.bf16.msra.mxu0 %v318
  %411 = vmatmul.bf16.gmra.mxu0 %v151
  %v412 = vpop.f32.mrf.mxu0
  %v413 = vadd.f32 %v384, %v412
  %v414 = vpop.f32.mrf.mxu0
  %v415 = vadd.f32 %v386, %v414
  %416 = vmatmul.bf16.gmra.mxu0 %v155
  %v417 = vpop.f32.mrf.mxu0
  %v418 = vadd.f32 %v389, %v417
  %v419 = vpop.f32.mrf.mxu0
  %v420 = vadd.f32 %v391, %v419
  %421 = vmatmul.bf16.gmra.mxu0 %v159
  %v422 = vpop.f32.mrf.mxu0
  %v423 = vadd.f32 %v394, %v422
  %v424 = vpop.f32.mrf.mxu0
  %v425 = vadd.f32 %v396, %v424
  %426 = vmatmul.bf16.gmra.mxu0 %v163
  %v427 = vpop.f32.mrf.mxu0
  %v428 = vadd.f32 %v399, %v427
  %v429 = vpop.f32.mrf.mxu0
  %v430 = vadd.f32 %v401, %v429
  %431 = vdwg.mxu0
  %432 = vmatpush.bf16.msra.mxu0 %v333
  %433 = vmatpush.bf16.msra.mxu0 %v332
  %434 = vmatpush.bf16.msra.mxu0 %v331
  %435 = vmatpush.bf16.msra.mxu0 %v330
  %436 = vmatpush.bf16.msra.mxu0 %v329
  %437 = vmatpush.bf16.msra.mxu0 %v328
  %438 = vmatpush.bf16.msra.mxu0 %v327
  %439 = vmatpush.bf16.msra.mxu0 %v326
  %440 = vmatmul.bf16.gmra.mxu0 %v152
  %v441 = vpop.f32.mrf.mxu0
  %v442 = vadd.f32 %v413, %v441
  %v443 = vpop.f32.mrf.mxu0
  %v444 = vadd.f32 %v415, %v443
  %445 = vmatmul.bf16.gmra.mxu0 %v156
  %v446 = vpop.f32.mrf.mxu0
  %v447 = vadd.f32 %v418, %v446
  %v448 = vpop.f32.mrf.mxu0
  %v449 = vadd.f32 %v420, %v448
  %450 = vmatmul.bf16.gmra.mxu0 %v160
  %v451 = vpop.f32.mrf.mxu0
  %v452 = vadd.f32 %v423, %v451
  %v453 = vpop.f32.mrf.mxu0
  %v454 = vadd.f32 %v425, %v453
  %455 = vmatmul.bf16.gmra.mxu0 %v164
  %v456 = vpop.f32.mrf.mxu0
  %v457 = vadd.f32 %v428, %v456
  %v458 = vpop.f32.mrf.mxu0
  %v459 = vadd.f32 %v430, %v458
  %460 = vdwg.mxu0
  %461 = vmatpush.bf16.msra.mxu0 %v341
  %462 = vmatpush.bf16.msra.mxu0 %v340
  %463 = vmatpush.bf16.msra.mxu0 %v339
  %464 = vmatpush.bf16.msra.mxu0 %v338
  %465 = vmatpush.bf16.msra.mxu0 %v337
  %466 = vmatpush.bf16.msra.mxu0 %v336
  %467 = vmatpush.bf16.msra.mxu0 %v335
  %468 = vmatpush.bf16.msra.mxu0 %v334
  %469 = vmatmul.bf16.gmra.mxu0 %v153
  %v470 = vpop.f32.mrf.mxu0
  %v471 = vadd.f32 %v442, %v470
  %v472 = vpop.f32.mrf.mxu0
  %v473 = vadd.f32 %v444, %v472
  %474 = vmatmul.bf16.gmra.mxu0 %v157
  %v475 = vpop.f32.mrf.mxu0
  %v476 = vadd.f32 %v447, %v475
  %v477 = vpop.f32.mrf.mxu0
  %v478 = vadd.f32 %v449, %v477
  %479 = vmatmul.bf16.gmra.mxu0 %v161
  %v480 = vpop.f32.mrf.mxu0
  %v481 = vadd.f32 %v452, %v480
  %v482 = vpop.f32.mrf.mxu0
  %v483 = vadd.f32 %v454, %v482
  %484 = vmatmul.bf16.gmra.mxu0 %v165
  %v485 = vpop.f32.mrf.mxu0
  %v486 = vadd.f32 %v457, %v485
  %v487 = vpop.f32.mrf.mxu0
  %v488 = vadd.f32 %v459, %v487
  %489 = vdwg.mxu0
  %490 = vst [vmem:[%s3] sm:$0xff] %v471
  %491 = vst [vmem:[%s3 + $0x8] sm:$0xff] %v473
  %492 = vst [vmem:[%s3 + $0x10] sm:$0xff] %v476
  %493 = vst [vmem:[%s3 + $0x18] sm:$0xff] %v478
  %494 = vst [vmem:[%s3 + $0x20] sm:$0xff] %v481
  %495 = vst [vmem:[%s3 + $0x28] sm:$0xff] %v483
  %496 = vst [vmem:[%s3 + $0x30] sm:$0xff] %v486
  %497 = vst [vmem:[%s3 + $0x38] sm:$0xff] %v488
  // Predicated region
  $region14: #{brainx_forward.32} parent=0 // pred_check
    _
  $region15: #{brainx_forward.32} parent=0 // pred_check_branch
    %499 = sbr.rel (0) target = $region17
  $region16: #{brainx_forward.32} parent=0 // pred_region
    _
  $region17: #{brainx_forward.32} parent=0 // pred_fallthru
    _
  // Predicated region
  $region18: #{brainx_forward.32} parent=0 // pred_check
    _
  $region19: #{brainx_forward.32} parent=0 // pred_check_branch
    %501 = sbr.rel (0) target = $region21
  $region20: #{brainx_forward.32} parent=0 // pred_region
    _
  $region21: #{brainx_forward.32} parent=0 // pred_fallthru
    _

// kernel: brainx_forward.43
$region0: #{brainx_forward.43}
  #allocation0 [shape = 'u32[]', space=smem, size = 0x4, offset = 0x4, fixed_abs, tag = 'smem constant byte address 0x4 - core index']
  #allocation1 [shape = 'u32[72,128]{1,0:T(1,128)}', space=vmem, size = 0x9000, scoped, tag = 'internal scratch']
  %s0 = inlined_call_operand.vmem [shape: bf16[64,128], index: 0, kind: input, shape index: {}]
  %s1 = inlined_call_operand.vmem [shape: bf16[128,128], index: 1, kind: input, shape index: {}]
  %s2 = inlined_call_operand.vmem [shape: f32[1,128], index: 2, kind: input, shape index: {}]
  %s3 = inlined_call_operand.hbm [shape: f32[64,128], index: 3, kind: output, shape index: {}]
  %s4 = sld [smem:[#allocation0]]
  $region22: #{brainx_forward.43} parent=0
    _
  %s6 = ssub.s32 1, %s4
  %s7 = scalar_select 0, %s6, %s4
  $region1: #{brainx_forward.43} parent=0
    #allocation2 [shape = 'u8[32768]{0}', space=vmem, size = 0x8000, scoped, tag = 'output window, operand 0, single buffered']
    #allocation3 [shape = 's32[1]{0}', space=sflag, size = 0x4, scoped, tag = 'scoped memory for brainx_forward.43']
    %8 = vsyncpa [#allocation3], 0
    // Predicated region
    $region2: #{brainx_forward.43} parent=1 // pred_check
      _
    $region3: #{brainx_forward.43} parent=1 // pred_check_branch
      %10 = sbr.rel (0) target = $region5
    $region4: #{brainx_forward.43} parent=1 // pred_region
      _
    $region5: #{brainx_forward.43} parent=1 // pred_fallthru
      _
    // Predicated region
    $region6: #{brainx_forward.43} parent=1 // pred_check
      _
    $region7: #{brainx_forward.43} parent=1 // pred_check_branch
      %12 = sbr.rel (0) target = $region9
    $region8: #{brainx_forward.43} parent=1 // pred_region
      _
    $region9: #{brainx_forward.43} parent=1 // pred_fallthru
      _
    // Predicated region
    $region10: #{brainx_forward.43} parent=1 // pred_check
      _
    $region11: #{brainx_forward.43} parent=1 // pred_check_branch
      %14 = sbr.rel (0) target = $region13
    $region12: #{brainx_forward.43} parent=1 // pred_region
      _
    $region13: #{brainx_forward.43} parent=1 // pred_fallthru
      _
    %v15 = vld [vmem:[%s0] sm:$0xf]
    %v16 = vld [vmem:[%s0 + $0x4] sm:$0xf]
    %v17 = vld [vmem:[%s0 + $0x8] sm:$0xf]
    %v18 = vld [vmem:[%s0 + $0xc] sm:$0xf]
    %v19 = vld [vmem:[%s0 + $0x10] sm:$0xf]
    %v20 = vld [vmem:[%s0 + $0x14] sm:$0xf]
    %v21 = vld [vmem:[%s0 + $0x18] sm:$0xf]
    %v22 = vld [vmem:[%s0 + $0x1c] sm:$0xf]
    %v23 = vld [vmem:[%s1] sm:$0xf]
    %v24 = vld [vmem:[%s1 + $0x4] sm:$0xf]
    %v25 = vld [vmem:[%s1 + $0x8] sm:$0xf]
    %v26 = vld [vmem:[%s1 + $0xc] sm:$0xf]
    %v27 = vld [vmem:[%s1 + $0x10] sm:$0xf]
    %v28 = vld [vmem:[%s1 + $0x14] sm:$0xf]
    %v29 = vld [vmem:[%s1 + $0x18] sm:$0xf]
    %v30 = vld [vmem:[%s1 + $0x1c] sm:$0xf]
    %v31 = vld [vmem:[%s1 + $0x20] sm:$0xf]
    %v32 = vld [vmem:[%s1 + $0x24] sm:$0xf]
    %v33 = vld [vmem:[%s1 + $0x28] sm:$0xf]
    %v34 = vld [vmem:[%s1 + $0x2c] sm:$0xf]
    %v35 = vld [vmem:[%s1 + $0x30] sm:$0xf]
    %v36 = vld [vmem:[%s1 + $0x34] sm:$0xf]
    %v37 = vld [vmem:[%s1 + $0x38] sm:$0xf]
    %v38 = vld [vmem:[%s1 + $0x3c] sm:$0xf]
    %v39 = vld [vmem:[%s2] sm:$0x1]
    %v41 = vperm.slane %v39, 0
    %v51 = vunpack.c.l.b16 %v15
    %v52 = vunpack.c.l.b16 %v16
    %v53 = vunpack.c.l.b16 %v17
    %v54 = vunpack.c.l.b16 %v18
    %v55 = vunpack.c.l.b16 %v19
    %v56 = vunpack.c.l.b16 %v20
    %v57 = vunpack.c.l.b16 %v21
    %v58 = vunpack.c.l.b16 %v22
    %v59 = vpack.c.b16 %v52, %v51
    %v60 = vpack.c.b16 %v54, %v53
    %v61 = vpack.c.b16 %v56, %v55
    %v62 = vpack.c.b16 %v58, %v57
    %v83 = vunpack.c.l.b16 %v23
    %v84 = vunpack.c.l.b16 %v24
    %v85 = vunpack.c.l.b16 %v25
    %v86 = vunpack.c.l.b16 %v26
    %v87 = vunpack.c.l.b16 %v27
    %v88 = vunpack.c.l.b16 %v28
    %v89 = vunpack.c.l.b16 %v29
    %v90 = vunpack.c.l.b16 %v30
    %v91 = vunpack.c.l.b16 %v31
    %v92 = vunpack.c.l.b16 %v32
    %v93 = vunpack.c.l.b16 %v33
    %v94 = vunpack.c.l.b16 %v34
    %v95 = vunpack.c.l.b16 %v35
    %v96 = vunpack.c.l.b16 %v36
    %v97 = vunpack.c.l.b16 %v37
    %v98 = vunpack.c.l.b16 %v38
    %v99 = vpack.c.b16 %v84, %v83
    %v100 = vpack.c.b16 %v86, %v85
    %v101 = vpack.c.b16 %v88, %v87
    %v102 = vpack.c.b16 %v90, %v89
    %v103 = vpack.c.b16 %v92, %v91
    %v104 = vpack.c.b16 %v94, %v93
    %v105 = vpack.c.b16 %v96, %v95
    %v106 = vpack.c.b16 %v98, %v97
    %115 = vmatpush.bf16.msra.mxu0 %v106
    %116 = vmatpush.bf16.msra.mxu0 %v105
    %117 = vmatpush.bf16.msra.mxu0 %v104
    %118 = vmatpush.bf16.msra.mxu0 %v103
    %119 = vmatpush.bf16.msra.mxu0 %v102
    %120 = vmatpush.bf16.msra.mxu0 %v101
    %121 = vmatpush.bf16.msra.mxu0 %v100
    %122 = vmatpush.bf16.msra.mxu0 %v99
    %123 = vmatmul.bf16.gmra.mxu0 %v59
    %v124 = vpop.f32.mrf.mxu0
    %v125 = vadd.f32 %v41, %v124
    %v126 = vpop.f32.mrf.mxu0
    %v127 = vadd.f32 %v41, %v126
    %128 = vmatmul.bf16.gmra.mxu0 %v60
    %v129 = vpop.f32.mrf.mxu0
    %v130 = vadd.f32 %v41, %v129
    %v131 = vpop.f32.mrf.mxu0
    %v132 = vadd.f32 %v41, %v131
    %133 = vmatmul.bf16.gmra.mxu0 %v61
    %v134 = vpop.f32.mrf.mxu0
    %v135 = vadd.f32 %v41, %v134
    %v136 = vpop.f32.mrf.mxu0
    %v137 = vadd.f32 %v41, %v136
    %138 = vmatmul.bf16.gmra.mxu0 %v62
    %v139 = vpop.f32.mrf.mxu0
    %v140 = vadd.f32 %v41, %v139
    %v141 = vpop.f32.mrf.mxu0
    %v142 = vadd.f32 %v41, %v141
    %143 = vdwg.mxu0
    %144 = vst [vmem:[#allocation2] sm:$0xff] %v125
    %145 = vst [vmem:[#allocation2 + $0x8] sm:$0xff] %v127
    %146 = vst [vmem:[#allocation2 + $0x10] sm:$0xff] %v130
    %147 = vst [vmem:[#allocation2 + $0x18] sm:$0xff] %v132
    %148 = vst [vmem:[#allocation2 + $0x20] sm:$0xff] %v135
    %149 = vst [vmem:[#allocation2 + $0x28] sm:$0xff] %v137
    %150 = vst [vmem:[#allocation2 + $0x30] sm:$0xff] %v140
    %151 = vst [vmem:[#allocation2 + $0x38] sm:$0xff] %v142
    // Predicated region
    $region14: #{brainx_forward.43} parent=1 // pred_check
      _
    $region15: #{brainx_forward.43} parent=1 // pred_check_branch
      %153 = sbr.rel (0) target = $region17
    $region16: #{brainx_forward.43} parent=1 // pred_region
      %155 = vsyncadd [#allocation3], 0
      %s156 = sshll.u32 [#allocation2], 4
      %s157 = int_to_ptr.vmem [resolvable:$true] %s156
      %s158 = sshll.u32 %s3, 4
      %s159 = int_to_ptr.hbm [resolvable:$true] %s158
      %164 = dma.vmem_to_hbm [thread:$0]  %s157, 1024, %s159, [#allocation3], 128, 128, 8
    $region17: #{brainx_forward.43} parent=1 // pred_fallthru
      _
    // Predicated region
    $region18: #{brainx_forward.43} parent=1 // pred_check
      _
    $region19: #{brainx_forward.43} parent=1 // pred_check_branch
      %166 = sbr.rel (0) target = $region21
    $region20: #{brainx_forward.43} parent=1 // pred_region
      %168 = dma.done [#allocation3], 1024
    $region21: #{brainx_forward.43} parent=1 // pred_fallthru
      _
    %169 = vsyncpa [#allocation3], 1

</llo_original>
